<compile_context>
chip_gen: v7x
topology: tpu7x:2x2x1
jax: 0.10.0
libtpu: 0.0.40
codegen_flags: <defaults>
</compile_context>

<pallas_src>
import functools

import jax
import jax.numpy as jnp
from jax.experimental import pallas as pl
from jax.experimental.pallas import tpu as pltpu


# capsule geometry fixed by the module spec
N0, D0 = 32, 8      # PrimaryCaps capsule_size
N1, D1 = 32, 16     # out_capsules
MOB_CH = 96         # mobilenet stride-16 feature channels
CAPS_CH = 256       # channels fed into PrimaryCaps
EXP_CH = CAPS_CH - MOB_CH   # 160


# ----------------------------- math helpers ------------------------------- #

def _gelu_tanh(x):
    # PyTorch nn.GELU(approximate='tanh')
    c = jnp.float32(0.7978845608028654)  # sqrt(2/pi)
    return 0.5 * x * (1.0 + jnp.tanh(c * (x + 0.044715 * x * x * x)))


def _squash(x, eps=1e-20):
    # Efficient-CapsNet squash: (1 - 1/(exp(||x||)+eps)) * x / (||x|| + eps)
    norm = jnp.sqrt(jnp.sum(x * x, axis=-1, keepdims=True))
    return (1.0 - 1.0 / (jnp.exp(norm) + eps)) * (x / (norm + eps))


def _pool_mats_host(g, d, dtype=jnp.bfloat16):
    """Host-side 0/1 lane-group matrices (exact in bf16).
    pool:   (g*d, g) with pool[j, n]   = 1 iff j // d == n
    unpool: (g, g*d) with unpool[n, j] = 1 iff j // d == n
    """
    eye = jnp.eye(g, dtype=jnp.float32)
    unpool = jnp.repeat(eye, d, axis=1)        # (g, g*d)
    pool = unpool.T                            # (g*d, g)
    return pool.astype(dtype), unpool.astype(dtype)


def _squash_groups(v, pool, unpool, eps=1e-20):
    """Squash applied per lane-group.  v: (R, G*D) f32, pool/unpool: 0/1 bf16."""
    f32 = jnp.float32
    sq = (v * v).astype(jnp.bfloat16)
    norm = jnp.sqrt(jnp.dot(sq, pool, preferred_element_type=f32))      # (R, G)
    norm_c = jnp.minimum(norm, jnp.float32(60.0))                        # exp overflow guard
    coef = (1.0 - pl.reciprocal(jnp.exp(norm_c) + eps, approx=True)) * \
        pl.reciprocal(norm + eps, approx=True)                           # (R, G)
    return v * jnp.dot(coef.astype(jnp.bfloat16), unpool,
                       preferred_element_type=f32)                       # (R, G*D)


# ------------------------------ fused kernel -------------------------------- #

def fused_repr_kernel(patches_ref, stem_w_ref, stem_b_ref, exp_w_ref, exp_b_ref,
                      dwf_ref, dwe_ref, pool0_ref, unpool0_ref, pool1_ref,
                      unpool1_ref, route_w_ref, head_w_ref, head_b_ref,
                      out_ref, *, tb, s, n0, d0, n1, d1):
    """Per-batch-tile fused forward:
       stride-16 stem patch-conv (+folded BN) + GELU -> 1x1 expand (+folded BN) + GELU
       -> PrimaryCaps (full-extent depthwise conv + squash)
       -> RoutingCaps self-attention routing -> Linear(512->E, folded BN) + shift."""
    f32 = jnp.float32
    bf16 = jnp.bfloat16

    # ---- encoder (M = TB*S rows, bf16 MXU matmuls, f32 accumulation) ----
    p = patches_ref[...]                                                 # (TB*S, P) bf16
    f = jnp.dot(p, stem_w_ref[...], preferred_element_type=f32)         # (TB*S, 96)
    f = _gelu_tanh(f + stem_b_ref[...])
    e = jnp.dot(f.astype(bf16), exp_w_ref[...], preferred_element_type=f32)  # (TB*S, 160)
    e = _gelu_tanh(e + exp_b_ref[...])

    # ---- PrimaryCaps: depthwise conv over the whole spatial extent (per sample);
    #      reduce each half first so the concat only touches TB rows ----
    prim_f = jnp.sum(f.reshape(tb, s, MOB_CH) * dwf_ref[...], axis=1)   # (TB, 96)
    prim_e = jnp.sum(e.reshape(tb, s, EXP_CH) * dwe_ref[...], axis=1)   # (TB, 160)
    prim = jnp.concatenate([prim_f, prim_e], axis=-1)                   # (TB, 256)
    x2 = _squash_groups(prim, pool0_ref[...], unpool0_ref[...])         # (TB, 256)

    # ---- RoutingCaps (self-attention routing), lane-dense throughout ----
    # prediction vectors u[b, n0, n1*D1+d1] = sum_d0 x[b, n0, d0] * W[n0, d0, n1, d1]
    # realized as one MXU matmul with per-sample block-diagonal X (unpool0 is the mask)
    xblk = (x2.astype(bf16)[:, None, :] * unpool0_ref[...]).reshape(tb * n0, n0 * d0)
    u2 = jnp.dot(xblk, route_w_ref[...], preferred_element_type=f32)    # (TB*32, 512)
    u3 = u2.reshape(tb, n0, n1 * d1)
    usum = jnp.sum(u3, axis=1, keepdims=True)                           # (TB, 1, 512)
    uu = (u3 * usum).reshape(tb * n0, n1 * d1)                          # (TB*32, 512)
    logits = jnp.dot(uu.astype(bf16), pool1_ref[...],
                     preferred_element_type=f32)                        # (TB*32, 32) [row=(b,n0)]
    logits = logits * (1.0 / jnp.sqrt(f32(d1)))
    logits = logits - jnp.max(logits, axis=1, keepdims=True)            # softmax over N1
    ec = jnp.exp(logits)
    c = ec * pl.reciprocal(jnp.sum(ec, axis=1, keepdims=True), approx=True)
    c2 = jnp.dot(c.astype(bf16), unpool1_ref[...],
                 preferred_element_type=f32)                            # (TB*32, 512)
    sv = jnp.sum((u2 * c2).reshape(tb, n0, n1 * d1), axis=1)            # (TB, 512)
    sv = _squash_groups(sv, pool1_ref[...], unpool1_ref[...])           # (TB, 512)

    # ---- head: Linear(512 -> E, bias=False, BN scale folded) + shift ----
    out = jnp.dot(sv.astype(bf16), head_w_ref[...],
                  preferred_element_type=f32)                           # (TB, E)
    out_ref[...] = out + head_b_ref[...]


# ------------------------------- wrapper ----------------------------------- #

def representation_forward(x, params, tb=None):
    """x: (B, C, H, W) float32 NCHW -> (B, embedding_dim) float32."""
    B, C, H, W = x.shape
    s16 = 16
    Hp, Wp = H // s16, W // s16
    S, P = Hp * Wp, C * s16 * s16
    E = params["head_w"].shape[-1]
    f32, bf16 = jnp.float32, jnp.bfloat16

    # batch tile: M = tb*S rows for the encoder matmul (256 rows at tb=16, S=16)
    if tb is None:
        tb = min(B, 16)
    Bp = ((B + tb - 1) // tb) * tb

    # im2col glue: cast to bf16 BEFORE the 6-D transpose, then (B,C,H,W)->(Bp*S, P)
    xb = x.astype(bf16)
    patches = xb.reshape(B, C, Hp, s16, Wp, s16)
    patches = patches.transpose(0, 2, 4, 1, 3, 5).reshape(B, S, P)
    if Bp != B:
        patches = jnp.pad(patches, ((0, Bp - B), (0, 0), (0, 0)))
    patches = patches.reshape(Bp * S, P)

    # fold BatchNorm scales into matmul weights (inference mode); keep shifts only
    stem_w = (params["stem_w"].astype(f32) * params["stem_scale"]).astype(bf16)   # (P, 96)
    stem_b = params["stem_shift"]                                                 # (1, 96)
    exp_w = (params["expand_w"].astype(f32) * params["expand_scale"]).astype(bf16)
    exp_b = params["expand_shift"]                                                 # (1, 160)
    head_w = (params["head_w"].astype(f32) * params["head_scale"]).astype(bf16)   # (512, E)
    head_b = params["head_shift"]                                                  # (1, E)
    route_w = params["route_w"]                                                    # (256, 512) bf16
    dwf = params["dw_w"][:, :MOB_CH]                                               # (S, 96) f32
    dwe = params["dw_w"][:, MOB_CH:]                                               # (S, 160) f32

    # lane-group pool/unpool 0/1 matrices, built once on the host (exact in bf16)
    pool0, unpool0 = _pool_mats_host(N0, D0)    # (256,32), (32,256)
    pool1, unpool1 = _pool_mats_host(N1, D1)    # (512,32), (32,512)

    kernel = functools.partial(fused_repr_kernel, tb=tb, s=S,
                               n0=N0, d0=D0, n1=N1, d1=D1)
    const2 = lambda b: (0, 0)

    out = pl.pallas_call(
        kernel,
        out_shape=jax.ShapeDtypeStruct((Bp, E), jnp.float32),
        grid_spec=pltpu.PrefetchScalarGridSpec(
            num_scalar_prefetch=0,
            grid=(Bp // tb,),
            in_specs=[
                pl.BlockSpec((tb * S, P), lambda b: (b, 0)),
                pl.BlockSpec(stem_w.shape, const2),
                pl.BlockSpec(stem_b.shape, const2),
                pl.BlockSpec(exp_w.shape, const2),
                pl.BlockSpec(exp_b.shape, const2),
                pl.BlockSpec(dwf.shape, const2),
                pl.BlockSpec(dwe.shape, const2),
                pl.BlockSpec(pool0.shape, const2),
                pl.BlockSpec(unpool0.shape, const2),
                pl.BlockSpec(pool1.shape, const2),
                pl.BlockSpec(unpool1.shape, const2),
                pl.BlockSpec(route_w.shape, const2),
                pl.BlockSpec(head_w.shape, const2),
                pl.BlockSpec(head_b.shape, const2),
            ],
            out_specs=pl.BlockSpec((tb, E), lambda b: (b, 0)),
        ),
        compiler_params=pltpu.CompilerParams(dimension_semantics=("parallel",)),
    )(patches, stem_w, stem_b, exp_w, exp_b, dwf, dwe,
      pool0, unpool0, pool1, unpool1, route_w, head_w, head_b)

    return out[:B]


# ------------------------- pure-JAX reference ------------------------------ #

def reference_forward(x, params):
    B, C, H, W = x.shape
    patches = x.reshape(B, C, H // 16, 16, W // 16, 16)
    patches = patches.transpose(0, 2, 4, 1, 3, 5).reshape(B, -1, C * 256)
    stem_w = params["stem_w"].astype(jnp.float32)
    exp_w = params["expand_w"].astype(jnp.float32)
    f = _gelu_tanh((patches @ stem_w) * params["stem_scale"] + params["stem_shift"])
    e = _gelu_tanh((f @ exp_w) * params["expand_scale"] + params["expand_shift"])
    cat = jnp.concatenate([f, e], axis=-1)                           # (B, S, 256)
    prim = jnp.sum(cat * params["dw_w"][None], axis=1)               # (B, 256)
    w4 = params["route_w"].astype(jnp.float32).reshape(N0, D0, N1, D1)
    xc = _squash(prim.reshape(B, N0, D0))
    u = jnp.einsum("bnd,ndke->bnke", xc, w4)                         # (B, N0, N1, D1)
    usum = jnp.sum(u, axis=1)                                        # (B, N1, D1)
    c = jnp.einsum("bnke,bke->bnk", u, usum) / jnp.sqrt(jnp.float32(D1))
    c = jax.nn.softmax(c, axis=2)                                    # over N1
    s = _squash(jnp.einsum("bnke,bnk->bke", u, c))                   # (B, N1, D1)
    head_w = params["head_w"].astype(jnp.float32)                    # (N1*D1, E)
    out = s.reshape(B, -1) @ head_w
    return out * params["head_scale"] + params["head_shift"]


# ----------------------------- parameters ---------------------------------- #

def init_params(key, obs_shape=(3, 64, 64), embedding_dim=256):
    C, H, W = obs_shape
    P = C * 16 * 16
    S = (H // 16) * (W // 16)                                        # 16
    ks = jax.random.split(key, 8)

    def normal(k, shape, std):
        return std * jax.random.normal(k, shape, jnp.float32)

    def bn_fold(k, n, eps=1e-5):
        k1, k2, k3 = jax.random.split(k, 3)
        gamma = 1.0 + 0.1 * jax.random.normal(k1, (1, n), jnp.float32)
        beta = 0.1 * jax.random.normal(k2, (1, n), jnp.float32)
        running_mean = 0.1 * jax.random.normal(k3, (1, n), jnp.float32)
        running_var = jnp.ones((1, n), jnp.float32)
        scale = gamma / jnp.sqrt(running_var + eps)
        return scale, beta - running_mean * scale

    stem_w = normal(ks[0], (P, MOB_CH), 1.0 / jnp.sqrt(jnp.float32(P))).astype(jnp.bfloat16)
    stem_scale, stem_shift = bn_fold(ks[1], MOB_CH)
    expand_w = normal(ks[2], (MOB_CH, EXP_CH),
                      1.0 / jnp.sqrt(jnp.float32(MOB_CH))).astype(jnp.bfloat16)
    expand_scale, expand_shift = bn_fold(ks[3], EXP_CH)
    # PrimaryCaps depthwise conv weight, torch shape (256,1,4,4) -> (spatial, channel)
    dw_w = normal(ks[4], (S, CAPS_CH), 1.0 / jnp.sqrt(jnp.float32(S)))
    # RoutingCaps W, torch shape (N1, N0, D0, D1) -> lane-dense (N0*D0, N1*D1)
    route_w_t = normal(ks[5], (N1, N0, D0, D1), jnp.sqrt(2.0 / (N0 * D0 * D1)))
    route_w = jnp.transpose(route_w_t, (1, 2, 0, 3)).reshape(N0 * D0, N1 * D1)
    route_w = route_w.astype(jnp.bfloat16)
    # head Linear(512 -> E, bias=False): W^T as (N1*D1, E)
    head_w = normal(ks[6], (N1 * D1, embedding_dim),
                    1.0 / jnp.sqrt(jnp.float32(N1 * D1))).astype(jnp.bfloat16)
    head_scale, head_shift = bn_fold(ks[7], embedding_dim)

    return dict(stem_w=stem_w, stem_scale=stem_scale, stem_shift=stem_shift,
                expand_w=expand_w, expand_scale=expand_scale, expand_shift=expand_shift,
                dw_w=dw_w, route_w=route_w, head_w=head_w,
                head_scale=head_scale, head_shift=head_shift)


# --------------------------------- main ------------------------------------ #

if __name__ == "__main__":
    key = jax.random.PRNGKey(0)
    kx, kp = jax.random.split(key)
    obs_shape = (3, 64, 64)       # module only supports 64x64 obs (caps kernel = W//16)
    B = 2
    embedding_dim = 256

    x = jax.random.normal(kx, (B,) + obs_shape, jnp.float32)
    params = init_params(kp, obs_shape, embedding_dim)

    out = jax.jit(representation_forward)(x, params)
    out = jax.block_until_ready(out)
    assert out.shape == (B, embedding_dim), out.shape

    ref = reference_forward(x, params)
    rel_err = float(jnp.max(jnp.abs(out - ref)) / (jnp.max(jnp.abs(ref)) + 1e-6))
    assert rel_err < 2e-2, f"Pallas vs reference mismatch, rel err = {rel_err}"

    print("KERNEL_OK")
</pallas_src>

<mosaic_0001>
module attributes {stable_mosaic.version = 11 : i64} {
  func.func @fused_repr_kernel(%arg0: i32, %arg1: memref<32x768xbf16, #tpu.memory_space<vmem>>, %arg2: memref<768x96xbf16, #tpu.memory_space<vmem>>, %arg3: memref<1x96xf32, #tpu.memory_space<vmem>>, %arg4: memref<96x160xbf16, #tpu.memory_space<vmem>>, %arg5: memref<1x160xf32, #tpu.memory_space<vmem>>, %arg6: memref<16x96xf32, #tpu.memory_space<vmem>>, %arg7: memref<16x160xf32, #tpu.memory_space<vmem>>, %arg8: memref<256x32xbf16, #tpu.memory_space<vmem>>, %arg9: memref<32x256xbf16, #tpu.memory_space<vmem>>, %arg10: memref<512x32xbf16, #tpu.memory_space<vmem>>, %arg11: memref<32x512xbf16, #tpu.memory_space<vmem>>, %arg12: memref<256x512xbf16, #tpu.memory_space<vmem>>, %arg13: memref<512x256xbf16, #tpu.memory_space<vmem>>, %arg14: memref<1x256xf32, #tpu.memory_space<vmem>>, %arg15: memref<2x256xf32, #tpu.memory_space<vmem>>) attributes {dimension_semantics = [#tpu.dimension_semantics<parallel>], iteration_bounds = array<i64: 1>, scalar_prefetch = 0 : i64, scratch_operands = 0 : i64, tpu.core_type = #tpu.core_type<tc>, window_params = [{transform_indices = @transform_0, window_bounds = array<i64: 32, 768>}, {pipeline_mode = #tpu.pipeline_mode<synchronous>, transform_indices = @transform_1, window_bounds = array<i64: 768, 96>}, {pipeline_mode = #tpu.pipeline_mode<synchronous>, transform_indices = @transform_2, window_bounds = array<i64: 1, 96>}, {pipeline_mode = #tpu.pipeline_mode<synchronous>, transform_indices = @transform_3, window_bounds = array<i64: 96, 160>}, {pipeline_mode = #tpu.pipeline_mode<synchronous>, transform_indices = @transform_4, window_bounds = array<i64: 1, 160>}, {pipeline_mode = #tpu.pipeline_mode<synchronous>, transform_indices = @transform_5, window_bounds = array<i64: 16, 96>}, {pipeline_mode = #tpu.pipeline_mode<synchronous>, transform_indices = @transform_6, window_bounds = array<i64: 16, 160>}, {pipeline_mode = #tpu.pipeline_mode<synchronous>, transform_indices = @transform_7, window_bounds = array<i64: 256, 32>}, {pipeline_mode = #tpu.pipeline_mode<synchronous>, transform_indices = @transform_8, window_bounds = array<i64: 32, 256>}, {pipeline_mode = #tpu.pipeline_mode<synchronous>, transform_indices = @transform_9, window_bounds = array<i64: 512, 32>}, {pipeline_mode = #tpu.pipeline_mode<synchronous>, transform_indices = @transform_10, window_bounds = array<i64: 32, 512>}, {pipeline_mode = #tpu.pipeline_mode<synchronous>, transform_indices = @transform_11, window_bounds = array<i64: 256, 512>}, {pipeline_mode = #tpu.pipeline_mode<synchronous>, transform_indices = @transform_12, window_bounds = array<i64: 512, 256>}, {pipeline_mode = #tpu.pipeline_mode<synchronous>, transform_indices = @transform_13, window_bounds = array<i64: 1, 256>}, {transform_indices = @transform_14, window_bounds = array<i64: 2, 256>}]} {
    %c0 = arith.constant 0 : index
    %c0_0 = arith.constant 0 : index
    %0 = vector.load %arg1[%c0, %c0_0] : memref<32x768xbf16, #tpu.memory_space<vmem>>, vector<32x768xbf16>
    %c0_1 = arith.constant 0 : index
    %c0_2 = arith.constant 0 : index
    %1 = vector.load %arg2[%c0_1, %c0_2] : memref<768x96xbf16, #tpu.memory_space<vmem>>, vector<768x96xbf16>
    %cst = arith.constant dense<0.000000e+00> : vector<32x96xf32>
    %2 = tpu.matmul %0, %1, %cst {dimension_numbers = #tpu.dot_dimension_numbers<[1], [0], [0], [1], [0, 0, 1, 1], [], []>} : vector<32x768xbf16>, vector<768x96xbf16>, vector<32x96xf32> -> vector<32x96xf32>
    %c0_3 = arith.constant 0 : index
    %c0_4 = arith.constant 0 : index
    %3 = vector.load %arg3[%c0_3, %c0_4] : memref<1x96xf32, #tpu.memory_space<vmem>>, vector<1x96xf32>
    %4 = vector.broadcast %3 : vector<1x96xf32> to vector<32x96xf32>
    %5 = arith.addf %2, %4 : vector<32x96xf32>
    %cst_5 = arith.constant 5.000000e-01 : f32
    %6 = vector.broadcast %cst_5 : f32 to vector<32x96xf32>
    %7 = arith.mulf %6, %5 : vector<32x96xf32>
    %cst_6 = arith.constant 4.471500e-02 : f32
    %8 = vector.broadcast %cst_6 : f32 to vector<32x96xf32>
    %9 = arith.mulf %8, %5 : vector<32x96xf32>
    %10 = arith.mulf %9, %5 : vector<32x96xf32>
    %11 = arith.mulf %10, %5 : vector<32x96xf32>
    %12 = arith.addf %5, %11 : vector<32x96xf32>
    %cst_7 = arith.constant 0.797884583 : f32
    %13 = vector.broadcast %cst_7 : f32 to vector<32x96xf32>
    %14 = arith.mulf %13, %12 : vector<32x96xf32>
    %15 = math.tanh %14 : vector<32x96xf32>
    %cst_8 = arith.constant 1.000000e+00 : f32
    %16 = vector.broadcast %cst_8 : f32 to vector<32x96xf32>
    %17 = arith.addf %16, %15 : vector<32x96xf32>
    %18 = arith.mulf %7, %17 : vector<32x96xf32>
    %19 = arith.truncf %18 : vector<32x96xf32> to vector<32x96xbf16>
    %c0_9 = arith.constant 0 : index
    %c0_10 = arith.constant 0 : index
    %20 = vector.load %arg4[%c0_9, %c0_10] : memref<96x160xbf16, #tpu.memory_space<vmem>>, vector<96x160xbf16>
    %cst_11 = arith.constant dense<0.000000e+00> : vector<32x160xf32>
    %21 = tpu.matmul %19, %20, %cst_11 {dimension_numbers = #tpu.dot_dimension_numbers<[1], [0], [0], [1], [0, 0, 1, 1], [], []>} : vector<32x96xbf16>, vector<96x160xbf16>, vector<32x160xf32> -> vector<32x160xf32>
    %c0_12 = arith.constant 0 : index
    %c0_13 = arith.constant 0 : index
    %22 = vector.load %arg5[%c0_12, %c0_13] : memref<1x160xf32, #tpu.memory_space<vmem>>, vector<1x160xf32>
    %23 = vector.broadcast %22 : vector<1x160xf32> to vector<32x160xf32>
    %24 = arith.addf %21, %23 : vector<32x160xf32>
    %cst_14 = arith.constant 5.000000e-01 : f32
    %25 = vector.broadcast %cst_14 : f32 to vector<32x160xf32>
    %26 = arith.mulf %25, %24 : vector<32x160xf32>
    %cst_15 = arith.constant 4.471500e-02 : f32
    %27 = vector.broadcast %cst_15 : f32 to vector<32x160xf32>
    %28 = arith.mulf %27, %24 : vector<32x160xf32>
    %29 = arith.mulf %28, %24 : vector<32x160xf32>
    %30 = arith.mulf %29, %24 : vector<32x160xf32>
    %31 = arith.addf %24, %30 : vector<32x160xf32>
    %cst_16 = arith.constant 0.797884583 : f32
    %32 = vector.broadcast %cst_16 : f32 to vector<32x160xf32>
    %33 = arith.mulf %32, %31 : vector<32x160xf32>
    %34 = math.tanh %33 : vector<32x160xf32>
    %cst_17 = arith.constant 1.000000e+00 : f32
    %35 = vector.broadcast %cst_17 : f32 to vector<32x160xf32>
    %36 = arith.addf %35, %34 : vector<32x160xf32>
    %37 = arith.mulf %26, %36 : vector<32x160xf32>
    %38 = vector.shape_cast %18 : vector<32x96xf32> to vector<2x16x96xf32>
    %c0_18 = arith.constant 0 : index
    %c0_19 = arith.constant 0 : index
    %39 = vector.load %arg6[%c0_18, %c0_19] : memref<16x96xf32, #tpu.memory_space<vmem>>, vector<16x96xf32>
    %40 = vector.shape_cast %39 : vector<16x96xf32> to vector<1x16x96xf32>
    %41 = vector.broadcast %40 : vector<1x16x96xf32> to vector<2x16x96xf32>
    %42 = arith.mulf %38, %41 : vector<2x16x96xf32>
    %cst_20 = arith.constant dense<0.000000e+00> : vector<2x96xf32>
    %43 = vector.multi_reduction <add>, %42, %cst_20 [1] : vector<2x16x96xf32> to vector<2x96xf32>
    %44 = vector.shape_cast %37 : vector<32x160xf32> to vector<2x16x160xf32>
    %c0_21 = arith.constant 0 : index
    %c0_22 = arith.constant 0 : index
    %45 = vector.load %arg7[%c0_21, %c0_22] : memref<16x160xf32, #tpu.memory_space<vmem>>, vector<16x160xf32>
    %46 = vector.shape_cast %45 : vector<16x160xf32> to vector<1x16x160xf32>
    %47 = vector.broadcast %46 : vector<1x16x160xf32> to vector<2x16x160xf32>
    %48 = arith.mulf %44, %47 : vector<2x16x160xf32>
    %cst_23 = arith.constant dense<0.000000e+00> : vector<2x160xf32>
    %49 = vector.multi_reduction <add>, %48, %cst_23 [1] : vector<2x16x160xf32> to vector<2x160xf32>
    %50 = tpu.concatenate %43, %49 in 1 : vector<2x96xf32>, vector<2x160xf32> -> vector<2x256xf32>
    %c0_24 = arith.constant 0 : index
    %c0_25 = arith.constant 0 : index
    %51 = vector.load %arg8[%c0_24, %c0_25] : memref<256x32xbf16, #tpu.memory_space<vmem>>, vector<256x32xbf16>
    %c0_26 = arith.constant 0 : index
    %c0_27 = arith.constant 0 : index
    %52 = vector.load %arg9[%c0_26, %c0_27] : memref<32x256xbf16, #tpu.memory_space<vmem>>, vector<32x256xbf16>
    %53 = arith.mulf %50, %50 : vector<2x256xf32>
    %54 = arith.truncf %53 : vector<2x256xf32> to vector<2x256xbf16>
    %cst_28 = arith.constant dense<0.000000e+00> : vector<2x32xf32>
    %55 = tpu.matmul %54, %51, %cst_28 {dimension_numbers = #tpu.dot_dimension_numbers<[1], [0], [0], [1], [0, 0, 1, 1], [], []>} : vector<2x256xbf16>, vector<256x32xbf16>, vector<2x32xf32> -> vector<2x32xf32>
    %56 = math.sqrt %55 : vector<2x32xf32>
    %cst_29 = arith.constant 6.000000e+01 : f32
    %57 = vector.broadcast %cst_29 : f32 to vector<2x32xf32>
    %58 = arith.minimumf %56, %57 : vector<2x32xf32>
    %59 = math.exp %58 : vector<2x32xf32>
    %cst_30 = arith.constant 9.99999968E-21 : f32
    %60 = vector.broadcast %cst_30 : f32 to vector<2x32xf32>
    %61 = arith.addf %59, %60 : vector<2x32xf32>
    %62 = tpu.reciprocal %61 {approx = true} : vector<2x32xf32> -> vector<2x32xf32>
    %cst_31 = arith.constant 1.000000e+00 : f32
    %63 = vector.broadcast %cst_31 : f32 to vector<2x32xf32>
    %64 = arith.subf %63, %62 : vector<2x32xf32>
    %cst_32 = arith.constant 9.99999968E-21 : f32
    %65 = vector.broadcast %cst_32 : f32 to vector<2x32xf32>
    %66 = arith.addf %56, %65 : vector<2x32xf32>
    %67 = tpu.reciprocal %66 {approx = true} : vector<2x32xf32> -> vector<2x32xf32>
    %68 = arith.mulf %64, %67 : vector<2x32xf32>
    %69 = arith.truncf %68 : vector<2x32xf32> to vector<2x32xbf16>
    %cst_33 = arith.constant dense<0.000000e+00> : vector<2x256xf32>
    %70 = tpu.matmul %69, %52, %cst_33 {dimension_numbers = #tpu.dot_dimension_numbers<[1], [0], [0], [1], [0, 0, 1, 1], [], []>} : vector<2x32xbf16>, vector<32x256xbf16>, vector<2x256xf32> -> vector<2x256xf32>
    %71 = arith.mulf %50, %70 : vector<2x256xf32>
    %72 = arith.truncf %71 : vector<2x256xf32> to vector<2x256xbf16>
    %73 = vector.shape_cast %72 : vector<2x256xbf16> to vector<2x1x256xbf16>
    %c0_34 = arith.constant 0 : index
    %c0_35 = arith.constant 0 : index
    %74 = vector.load %arg9[%c0_34, %c0_35] : memref<32x256xbf16, #tpu.memory_space<vmem>>, vector<32x256xbf16>
    %75 = vector.shape_cast %74 : vector<32x256xbf16> to vector<1x32x256xbf16>
    %76 = vector.broadcast %73 : vector<2x1x256xbf16> to vector<2x32x256xbf16>
    %77 = vector.broadcast %75 : vector<1x32x256xbf16> to vector<2x32x256xbf16>
    %78 = arith.mulf %76, %77 : vector<2x32x256xbf16>
    %79 = vector.shape_cast %78 : vector<2x32x256xbf16> to vector<64x256xbf16>
    %c0_36 = arith.constant 0 : index
    %c0_37 = arith.constant 0 : index
    %80 = vector.load %arg12[%c0_36, %c0_37] : memref<256x512xbf16, #tpu.memory_space<vmem>>, vector<256x512xbf16>
    %cst_38 = arith.constant dense<0.000000e+00> : vector<64x512xf32>
    %81 = tpu.matmul %79, %80, %cst_38 {dimension_numbers = #tpu.dot_dimension_numbers<[1], [0], [0], [1], [0, 0, 1, 1], [], []>} : vector<64x256xbf16>, vector<256x512xbf16>, vector<64x512xf32> -> vector<64x512xf32>
    %82 = vector.shape_cast %81 : vector<64x512xf32> to vector<2x32x512xf32>
    %cst_39 = arith.constant dense<0.000000e+00> : vector<2x512xf32>
    %83 = vector.multi_reduction <add>, %82, %cst_39 [1] : vector<2x32x512xf32> to vector<2x512xf32>
    %84 = vector.shape_cast %83 : vector<2x512xf32> to vector<2x1x512xf32>
    %85 = vector.broadcast %84 : vector<2x1x512xf32> to vector<2x32x512xf32>
    %86 = arith.mulf %82, %85 : vector<2x32x512xf32>
    %87 = vector.shape_cast %86 : vector<2x32x512xf32> to vector<64x512xf32>
    %88 = arith.truncf %87 : vector<64x512xf32> to vector<64x512xbf16>
    %c0_40 = arith.constant 0 : index
    %c0_41 = arith.constant 0 : index
    %89 = vector.load %arg10[%c0_40, %c0_41] : memref<512x32xbf16, #tpu.memory_space<vmem>>, vector<512x32xbf16>
    %cst_42 = arith.constant dense<0.000000e+00> : vector<64x32xf32>
    %90 = tpu.matmul %88, %89, %cst_42 {dimension_numbers = #tpu.dot_dimension_numbers<[1], [0], [0], [1], [0, 0, 1, 1], [], []>} : vector<64x512xbf16>, vector<512x32xbf16>, vector<64x32xf32> -> vector<64x32xf32>
    %cst_43 = arith.constant 1.600000e+01 : f32
    %91 = math.sqrt %cst_43 : f32
    %cst_44 = arith.constant 1.000000e+00 : f32
    %92 = arith.divf %cst_44, %91 : f32
    %93 = vector.broadcast %92 : f32 to vector<64x32xf32>
    %94 = arith.mulf %90, %93 : vector<64x32xf32>
    %cst_45 = arith.constant dense<0xFF800000> : vector<64xf32>
    %95 = vector.multi_reduction <maximumf>, %94, %cst_45 [1] : vector<64x32xf32> to vector<64xf32>
    %96 = vector.shape_cast %95 : vector<64xf32> to vector<64x1xf32>
    %97 = vector.broadcast %96 : vector<64x1xf32> to vector<64x32xf32>
    %98 = arith.subf %94, %97 : vector<64x32xf32>
    %99 = math.exp %98 : vector<64x32xf32>
    %cst_46 = arith.constant dense<0.000000e+00> : vector<64xf32>
    %100 = vector.multi_reduction <add>, %99, %cst_46 [1] : vector<64x32xf32> to vector<64xf32>
    %101 = vector.shape_cast %100 : vector<64xf32> to vector<64x1xf32>
    %102 = tpu.reciprocal %101 {approx = true} : vector<64x1xf32> -> vector<64x1xf32>
    %103 = vector.broadcast %102 : vector<64x1xf32> to vector<64x32xf32>
    %104 = arith.mulf %99, %103 : vector<64x32xf32>
    %105 = arith.truncf %104 : vector<64x32xf32> to vector<64x32xbf16>
    %c0_47 = arith.constant 0 : index
    %c0_48 = arith.constant 0 : index
    %106 = vector.load %arg11[%c0_47, %c0_48] : memref<32x512xbf16, #tpu.memory_space<vmem>>, vector<32x512xbf16>
    %cst_49 = arith.constant dense<0.000000e+00> : vector<64x512xf32>
    %107 = tpu.matmul %105, %106, %cst_49 {dimension_numbers = #tpu.dot_dimension_numbers<[1], [0], [0], [1], [0, 0, 1, 1], [], []>} : vector<64x32xbf16>, vector<32x512xbf16>, vector<64x512xf32> -> vector<64x512xf32>
    %108 = arith.mulf %81, %107 : vector<64x512xf32>
    %109 = vector.shape_cast %108 : vector<64x512xf32> to vector<2x32x512xf32>
    %cst_50 = arith.constant dense<0.000000e+00> : vector<2x512xf32>
    %110 = vector.multi_reduction <add>, %109, %cst_50 [1] : vector<2x32x512xf32> to vector<2x512xf32>
    %c0_51 = arith.constant 0 : index
    %c0_52 = arith.constant 0 : index
    %111 = vector.load %arg10[%c0_51, %c0_52] : memref<512x32xbf16, #tpu.memory_space<vmem>>, vector<512x32xbf16>
    %c0_53 = arith.constant 0 : index
    %c0_54 = arith.constant 0 : index
    %112 = vector.load %arg11[%c0_53, %c0_54] : memref<32x512xbf16, #tpu.memory_space<vmem>>, vector<32x512xbf16>
    %113 = arith.mulf %110, %110 : vector<2x512xf32>
    %114 = arith.truncf %113 : vector<2x512xf32> to vector<2x512xbf16>
    %cst_55 = arith.constant dense<0.000000e+00> : vector<2x32xf32>
    %115 = tpu.matmul %114, %111, %cst_55 {dimension_numbers = #tpu.dot_dimension_numbers<[1], [0], [0], [1], [0, 0, 1, 1], [], []>} : vector<2x512xbf16>, vector<512x32xbf16>, vector<2x32xf32> -> vector<2x32xf32>
    %116 = math.sqrt %115 : vector<2x32xf32>
    %cst_56 = arith.constant 6.000000e+01 : f32
    %117 = vector.broadcast %cst_56 : f32 to vector<2x32xf32>
    %118 = arith.minimumf %116, %117 : vector<2x32xf32>
    %119 = math.exp %118 : vector<2x32xf32>
    %cst_57 = arith.constant 9.99999968E-21 : f32
    %120 = vector.broadcast %cst_57 : f32 to vector<2x32xf32>
    %121 = arith.addf %119, %120 : vector<2x32xf32>
    %122 = tpu.reciprocal %121 {approx = true} : vector<2x32xf32> -> vector<2x32xf32>
    %cst_58 = arith.constant 1.000000e+00 : f32
    %123 = vector.broadcast %cst_58 : f32 to vector<2x32xf32>
    %124 = arith.subf %123, %122 : vector<2x32xf32>
    %cst_59 = arith.constant 9.99999968E-21 : f32
    %125 = vector.broadcast %cst_59 : f32 to vector<2x32xf32>
    %126 = arith.addf %116, %125 : vector<2x32xf32>
    %127 = tpu.reciprocal %126 {approx = true} : vector<2x32xf32> -> vector<2x32xf32>
    %128 = arith.mulf %124, %127 : vector<2x32xf32>
    %129 = arith.truncf %128 : vector<2x32xf32> to vector<2x32xbf16>
    %cst_60 = arith.constant dense<0.000000e+00> : vector<2x512xf32>
    %130 = tpu.matmul %129, %112, %cst_60 {dimension_numbers = #tpu.dot_dimension_numbers<[1], [0], [0], [1], [0, 0, 1, 1], [], []>} : vector<2x32xbf16>, vector<32x512xbf16>, vector<2x512xf32> -> vector<2x512xf32>
    %131 = arith.mulf %110, %130 : vector<2x512xf32>
    %132 = arith.truncf %131 : vector<2x512xf32> to vector<2x512xbf16>
    %c0_61 = arith.constant 0 : index
    %c0_62 = arith.constant 0 : index
    %133 = vector.load %arg13[%c0_61, %c0_62] : memref<512x256xbf16, #tpu.memory_space<vmem>>, vector<512x256xbf16>
    %cst_63 = arith.constant dense<0.000000e+00> : vector<2x256xf32>
    %134 = tpu.matmul %132, %133, %cst_63 {dimension_numbers = #tpu.dot_dimension_numbers<[1], [0], [0], [1], [0, 0, 1, 1], [], []>} : vector<2x512xbf16>, vector<512x256xbf16>, vector<2x256xf32> -> vector<2x256xf32>
    %c0_64 = arith.constant 0 : index
    %c0_65 = arith.constant 0 : index
    %135 = vector.load %arg14[%c0_64, %c0_65] : memref<1x256xf32, #tpu.memory_space<vmem>>, vector<1x256xf32>
    %136 = vector.broadcast %135 : vector<1x256xf32> to vector<2x256xf32>
    %137 = arith.addf %134, %136 : vector<2x256xf32>
    %c0_66 = arith.constant 0 : index
    %c0_67 = arith.constant 0 : index
    %138 = vector.load %arg15[%c0_66, %c0_67] : memref<2x256xf32, #tpu.memory_space<vmem>>, vector<2x256xf32>
    tpu.vector_store %arg15[%c0_66, %c0_67], %137 {strides = array<i32>} : memref<2x256xf32, #tpu.memory_space<vmem>>, vector<2x256xf32>,
    return
  }
  func.func @transform_0(%arg0: i32) -> (i32, i32) {
    %c0_i32 = arith.constant 0 : i32
    %c0_i32_0 = arith.constant 0 : i32
    return %arg0, %c0_i32 : i32, i32
  }
  func.func @transform_1(%arg0: i32) -> (i32, i32) {
    %c0_i32 = arith.constant 0 : i32
    %c0_i32_0 = arith.constant 0 : i32
    %c0_i32_1 = arith.constant 0 : i32
    return %c0_i32, %c0_i32_0 : i32, i32
  }
  func.func @transform_2(%arg0: i32) -> (i32, i32) {
    %c0_i32 = arith.constant 0 : i32
    %c0_i32_0 = arith.constant 0 : i32
    %c0_i32_1 = arith.constant 0 : i32
    return %c0_i32, %c0_i32_0 : i32, i32
  }
  func.func @transform_3(%arg0: i32) -> (i32, i32) {
    %c0_i32 = arith.constant 0 : i32
    %c0_i32_0 = arith.constant 0 : i32
    %c0_i32_1 = arith.constant 0 : i32
    return %c0_i32, %c0_i32_0 : i32, i32
  }
  func.func @transform_4(%arg0: i32) -> (i32, i32) {
    %c0_i32 = arith.constant 0 : i32
    %c0_i32_0 = arith.constant 0 : i32
    %c0_i32_1 = arith.constant 0 : i32
    return %c0_i32, %c0_i32_0 : i32, i32
  }
  func.func @transform_5(%arg0: i32) -> (i32, i32) {
    %c0_i32 = arith.constant 0 : i32
    %c0_i32_0 = arith.constant 0 : i32
    %c0_i32_1 = arith.constant 0 : i32
    return %c0_i32, %c0_i32_0 : i32, i32
  }
  func.func @transform_6(%arg0: i32) -> (i32, i32) {
    %c0_i32 = arith.constant 0 : i32
    %c0_i32_0 = arith.constant 0 : i32
    %c0_i32_1 = arith.constant 0 : i32
    return %c0_i32, %c0_i32_0 : i32, i32
  }
  func.func @transform_7(%arg0: i32) -> (i32, i32) {
    %c0_i32 = arith.constant 0 : i32
    %c0_i32_0 = arith.constant 0 : i32
    %c0_i32_1 = arith.constant 0 : i32
    return %c0_i32, %c0_i32_0 : i32, i32
  }
  func.func @transform_8(%arg0: i32) -> (i32, i32) {
    %c0_i32 = arith.constant 0 : i32
    %c0_i32_0 = arith.constant 0 : i32
    %c0_i32_1 = arith.constant 0 : i32
    return %c0_i32, %c0_i32_0 : i32, i32
  }
  func.func @transform_9(%arg0: i32) -> (i32, i32) {
    %c0_i32 = arith.constant 0 : i32
    %c0_i32_0 = arith.constant 0 : i32
    %c0_i32_1 = arith.constant 0 : i32
    return %c0_i32, %c0_i32_0 : i32, i32
  }
  func.func @transform_10(%arg0: i32) -> (i32, i32) {
    %c0_i32 = arith.constant 0 : i32
    %c0_i32_0 = arith.constant 0 : i32
    %c0_i32_1 = arith.constant 0 : i32
    return %c0_i32, %c0_i32_0 : i32, i32
  }
  func.func @transform_11(%arg0: i32) -> (i32, i32) {
    %c0_i32 = arith.constant 0 : i32
    %c0_i32_0 = arith.constant 0 : i32
    %c0_i32_1 = arith.constant 0 : i32
    return %c0_i32, %c0_i32_0 : i32, i32
  }
  func.func @transform_12(%arg0: i32) -> (i32, i32) {
    %c0_i32 = arith.constant 0 : i32
    %c0_i32_0 = arith.constant 0 : i32
    %c0_i32_1 = arith.constant 0 : i32
    return %c0_i32, %c0_i32_0 : i32, i32
  }
  func.func @transform_13(%arg0: i32) -> (i32, i32) {
    %c0_i32 = arith.constant 0 : i32
    %c0_i32_0 = arith.constant 0 : i32
    %c0_i32_1 = arith.constant 0 : i32
    return %c0_i32, %c0_i32_0 : i32, i32
  }
  func.func @transform_14(%arg0: i32) -> (i32, i32) {
    %c0_i32 = arith.constant 0 : i32
    %c0_i32_0 = arith.constant 0 : i32
    return %arg0, %c0_i32 : i32, i32
  }
}

</mosaic_0001>

<llo_original>
// kernel: representation_forward.1
$region0: #{representation_forward.1}
  #allocation0 [shape = 'u32[]', space=smem, size = 0x4, offset = 0x4, fixed_abs, tag = 'smem constant byte address 0x4 - core index']
  #allocation1 [shape = 'u32[144,128]{1,0:T(1,128)}', space=vmem, size = 0x12000, scoped, tag = 'internal scratch']
  %s0 = inlined_call_operand.vmem [shape: bf16[32,768], index: 0, kind: input, shape index: {}]
  %s1 = inlined_call_operand.vmem [shape: bf16[768,96], index: 1, kind: input, shape index: {}]
  %s2 = inlined_call_operand.vmem [shape: f32[1,96], index: 2, kind: input, shape index: {}]
  %s3 = inlined_call_operand.vmem [shape: bf16[96,160], index: 3, kind: input, shape index: {}]
  %s4 = inlined_call_operand.vmem [shape: f32[1,160], index: 4, kind: input, shape index: {}]
  %s5 = inlined_call_operand.vmem [shape: f32[16,96], index: 5, kind: input, shape index: {}]
  %s6 = inlined_call_operand.vmem [shape: f32[16,160], index: 6, kind: input, shape index: {}]
  %s7 = inlined_call_operand.vmem [shape: bf16[256,32], index: 7, kind: input, shape index: {}]
  %s8 = inlined_call_operand.vmem [shape: bf16[32,256], index: 8, kind: input, shape index: {}]
  %s9 = inlined_call_operand.vmem [shape: bf16[512,32], index: 9, kind: input, shape index: {}]
  %s10 = inlined_call_operand.vmem [shape: bf16[32,512], index: 10, kind: input, shape index: {}]
  %s11 = inlined_call_operand.vmem [shape: bf16[256,512], index: 11, kind: input, shape index: {}]
  %s12 = inlined_call_operand.vmem [shape: bf16[512,256], index: 12, kind: input, shape index: {}]
  %s13 = inlined_call_operand.vmem [shape: f32[1,256], index: 13, kind: input, shape index: {}]
  %s14 = inlined_call_operand.hbm [shape: f32[2,256], index: 14, kind: output, shape index: {}]
  %s15 = sld [smem:[#allocation0]]
  $region66: #{representation_forward.1} parent=0
    _
  %s17 = ssub.s32 1, %s15
  %s18 = scalar_select 0, %s17, %s15
  $region1: #{representation_forward.1} parent=0
    #allocation2 [shape = 'u8[2048]{0}', space=vmem, size = 0x800, scoped, tag = 'output window, operand 0, single buffered']
    #allocation3 [shape = 's32[1]{0}', space=sflag, size = 0x4, scoped, tag = 'scoped memory for representation_forward.1']
    %19 = vsyncpa [#allocation3], 0
    // Predicated region
    $region2: #{representation_forward.1} parent=1 // pred_check
      _
    $region3: #{representation_forward.1} parent=1 // pred_check_branch
      %21 = sbr.rel (0) target = $region5
    $region4: #{representation_forward.1} parent=1 // pred_region
      _
    $region5: #{representation_forward.1} parent=1 // pred_fallthru
      _
    // Predicated region
    $region6: #{representation_forward.1} parent=1 // pred_check
      _
    $region7: #{representation_forward.1} parent=1 // pred_check_branch
      %23 = sbr.rel (0) target = $region9
    $region8: #{representation_forward.1} parent=1 // pred_region
      _
    $region9: #{representation_forward.1} parent=1 // pred_fallthru
      _
    // Predicated region
    $region10: #{representation_forward.1} parent=1 // pred_check
      _
    $region11: #{representation_forward.1} parent=1 // pred_check_branch
      %25 = sbr.rel (0) target = $region13
    $region12: #{representation_forward.1} parent=1 // pred_region
      _
    $region13: #{representation_forward.1} parent=1 // pred_fallthru
      _
    // Predicated region
    $region14: #{representation_forward.1} parent=1 // pred_check
      _
    $region15: #{representation_forward.1} parent=1 // pred_check_branch
      %27 = sbr.rel (0) target = $region17
    $region16: #{representation_forward.1} parent=1 // pred_region
      _
    $region17: #{representation_forward.1} parent=1 // pred_fallthru
      _
    // Predicated region
    $region18: #{representation_forward.1} parent=1 // pred_check
      _
    $region19: #{representation_forward.1} parent=1 // pred_check_branch
      %29 = sbr.rel (0) target = $region21
    $region20: #{representation_forward.1} parent=1 // pred_region
      _
    $region21: #{representation_forward.1} parent=1 // pred_fallthru
      _
    // Predicated region
    $region22: #{representation_forward.1} parent=1 // pred_check
      _
    $region23: #{representation_forward.1} parent=1 // pred_check_branch
      %31 = sbr.rel (0) target = $region25
    $region24: #{representation_forward.1} parent=1 // pred_region
      _
    $region25: #{representation_forward.1} parent=1 // pred_fallthru
      _
    // Predicated region
    $region26: #{representation_forward.1} parent=1 // pred_check
      _
    $region27: #{representation_forward.1} parent=1 // pred_check_branch
      %33 = sbr.rel (0) target = $region29
    $region28: #{representation_forward.1} parent=1 // pred_region
      _
    $region29: #{representation_forward.1} parent=1 // pred_fallthru
      _
    // Predicated region
    $region30: #{representation_forward.1} parent=1 // pred_check
      _
    $region31: #{representation_forward.1} parent=1 // pred_check_branch
      %35 = sbr.rel (0) target = $region33
    $region32: #{representation_forward.1} parent=1 // pred_region
      _
    $region33: #{representation_forward.1} parent=1 // pred_fallthru
      _
    // Predicated region
    $region34: #{representation_forward.1} parent=1 // pred_check
      _
    $region35: #{representation_forward.1} parent=1 // pred_check_branch
      %37 = sbr.rel (0) target = $region37
    $region36: #{representation_forward.1} parent=1 // pred_region
      _
    $region37: #{representation_forward.1} parent=1 // pred_fallthru
      _
    // Predicated region
    $region38: #{representation_forward.1} parent=1 // pred_check
      _
    $region39: #{representation_forward.1} parent=1 // pred_check_branch
      %39 = sbr.rel (0) target = $region41
    $region40: #{representation_forward.1} parent=1 // pred_region
      _
    $region41: #{representation_forward.1} parent=1 // pred_fallthru
      _
    // Predicated region
    $region42: #{representation_forward.1} parent=1 // pred_check
      _
    $region43: #{representation_forward.1} parent=1 // pred_check_branch
      %41 = sbr.rel (0) target = $region45
    $region44: #{representation_forward.1} parent=1 // pred_region
      _
    $region45: #{representation_forward.1} parent=1 // pred_fallthru
      _
    // Predicated region
    $region46: #{representation_forward.1} parent=1 // pred_check
      _
    $region47: #{representation_forward.1} parent=1 // pred_check_branch
      %43 = sbr.rel (0) target = $region49
    $region48: #{representation_forward.1} parent=1 // pred_region
      _
    $region49: #{representation_forward.1} parent=1 // pred_fallthru
      _
    // Predicated region
    $region50: #{representation_forward.1} parent=1 // pred_check
      _
    $region51: #{representation_forward.1} parent=1 // pred_check_branch
      %45 = sbr.rel (0) target = $region53
    $region52: #{representation_forward.1} parent=1 // pred_region
      _
    $region53: #{representation_forward.1} parent=1 // pred_fallthru
      _
    // Predicated region
    $region54: #{representation_forward.1} parent=1 // pred_check
      _
    $region55: #{representation_forward.1} parent=1 // pred_check_branch
      %47 = sbr.rel (0) target = $region57
    $region56: #{representation_forward.1} parent=1 // pred_region
      _
    $region57: #{representation_forward.1} parent=1 // pred_fallthru
      _
    %v49 = vld [vmem:[%s0] sm:$0xff]
    %v50 = vld [vmem:[%s0 + $0x8] sm:$0xff]
    %v51 = vld [vmem:[%s0 + $0x10] sm:$0xff]
    %v52 = vld [vmem:[%s0 + $0x18] sm:$0xff]
    %v53 = vld [vmem:[%s0 + $0x20] sm:$0xff]
    %v54 = vld [vmem:[%s0 + $0x28] sm:$0xff]
    %v55 = vld [vmem:[%s0 + $0x30] sm:$0xff]
    %v56 = vld [vmem:[%s0 + $0x38] sm:$0xff]
    %v57 = vld [vmem:[%s0 + $0x40] sm:$0xff]
    %v58 = vld [vmem:[%s0 + $0x48] sm:$0xff]
    %v59 = vld [vmem:[%s0 + $0x50] sm:$0xff]
    %v60 = vld [vmem:[%s0 + $0x58] sm:$0xff]
    %v61 = vld [vmem:[%s1] sm:$0xf]
    %v62 = vld [vmem:[%s1 + $0x4] sm:$0xf]
    %v63 = vld [vmem:[%s1 + $0x8] sm:$0xf]
    %v64 = vld [vmem:[%s1 + $0xc] sm:$0xf]
    %v65 = vld [vmem:[%s1 + $0x10] sm:$0xf]
    %v66 = vld [vmem:[%s1 + $0x14] sm:$0xf]
    %v67 = vld [vmem:[%s1 + $0x18] sm:$0xf]
    %v68 = vld [vmem:[%s1 + $0x1c] sm:$0xf]
    %v69 = vld [vmem:[%s1 + $0x20] sm:$0xf]
    %v70 = vld [vmem:[%s1 + $0x24] sm:$0xf]
    %v71 = vld [vmem:[%s1 + $0x28] sm:$0xf]
    %v72 = vld [vmem:[%s1 + $0x2c] sm:$0xf]
    %v73 = vld [vmem:[%s1 + $0x30] sm:$0xf]
    %v74 = vld [vmem:[%s1 + $0x34] sm:$0xf]
    %v75 = vld [vmem:[%s1 + $0x38] sm:$0xf]
    %v76 = vld [vmem:[%s1 + $0x3c] sm:$0xf]
    %v77 = vld [vmem:[%s1 + $0x40] sm:$0xf]
    %v78 = vld [vmem:[%s1 + $0x44] sm:$0xf]
    %v79 = vld [vmem:[%s1 + $0x48] sm:$0xf]
    %v80 = vld [vmem:[%s1 + $0x4c] sm:$0xf]
    %v81 = vld [vmem:[%s1 + $0x50] sm:$0xf]
    %v82 = vld [vmem:[%s1 + $0x54] sm:$0xf]
    %v83 = vld [vmem:[%s1 + $0x58] sm:$0xf]
    %v84 = vld [vmem:[%s1 + $0x5c] sm:$0xf]
    %v85 = vld [vmem:[%s1 + $0x60] sm:$0xf]
    %v86 = vld [vmem:[%s1 + $0x64] sm:$0xf]
    %v87 = vld [vmem:[%s1 + $0x68] sm:$0xf]
    %v88 = vld [vmem:[%s1 + $0x6c] sm:$0xf]
    %v89 = vld [vmem:[%s1 + $0x70] sm:$0xf]
    %v90 = vld [vmem:[%s1 + $0x74] sm:$0xf]
    %v91 = vld [vmem:[%s1 + $0x78] sm:$0xf]
    %v92 = vld [vmem:[%s1 + $0x7c] sm:$0xf]
    %v93 = vld [vmem:[%s1 + $0x80] sm:$0xf]
    %v94 = vld [vmem:[%s1 + $0x84] sm:$0xf]
    %v95 = vld [vmem:[%s1 + $0x88] sm:$0xf]
    %v96 = vld [vmem:[%s1 + $0x8c] sm:$0xf]
    %v97 = vld [vmem:[%s1 + $0x90] sm:$0xf]
    %v98 = vld [vmem:[%s1 + $0x94] sm:$0xf]
    %v99 = vld [vmem:[%s1 + $0x98] sm:$0xf]
    %v100 = vld [vmem:[%s1 + $0x9c] sm:$0xf]
    %v101 = vld [vmem:[%s1 + $0xa0] sm:$0xf]
    %v102 = vld [vmem:[%s1 + $0xa4] sm:$0xf]
    %v103 = vld [vmem:[%s1 + $0xa8] sm:$0xf]
    %v104 = vld [vmem:[%s1 + $0xac] sm:$0xf]
    %v105 = vld [vmem:[%s1 + $0xb0] sm:$0xf]
    %v106 = vld [vmem:[%s1 + $0xb4] sm:$0xf]
    %v107 = vld [vmem:[%s1 + $0xb8] sm:$0xf]
    %v108 = vld [vmem:[%s1 + $0xbc] sm:$0xf]
    %v109 = vld [vmem:[%s1 + $0xc0] sm:$0xf]
    %v110 = vld [vmem:[%s1 + $0xc4] sm:$0xf]
    %v111 = vld [vmem:[%s1 + $0xc8] sm:$0xf]
    %v112 = vld [vmem:[%s1 + $0xcc] sm:$0xf]
    %v113 = vld [vmem:[%s1 + $0xd0] sm:$0xf]
    %v114 = vld [vmem:[%s1 + $0xd4] sm:$0xf]
    %v115 = vld [vmem:[%s1 + $0xd8] sm:$0xf]
    %v116 = vld [vmem:[%s1 + $0xdc] sm:$0xf]
    %v117 = vld [vmem:[%s1 + $0xe0] sm:$0xf]
    %v118 = vld [vmem:[%s1 + $0xe4] sm:$0xf]
    %v119 = vld [vmem:[%s1 + $0xe8] sm:$0xf]
    %v120 = vld [vmem:[%s1 + $0xec] sm:$0xf]
    %v121 = vld [vmem:[%s1 + $0xf0] sm:$0xf]
    %v122 = vld [vmem:[%s1 + $0xf4] sm:$0xf]
    %v123 = vld [vmem:[%s1 + $0xf8] sm:$0xf]
    %v124 = vld [vmem:[%s1 + $0xfc] sm:$0xf]
    %v125 = vld [vmem:[%s1 + $0x100] sm:$0xf]
    %v126 = vld [vmem:[%s1 + $0x104] sm:$0xf]
    %v127 = vld [vmem:[%s1 + $0x108] sm:$0xf]
    %v128 = vld [vmem:[%s1 + $0x10c] sm:$0xf]
    %v129 = vld [vmem:[%s1 + $0x110] sm:$0xf]
    %v130 = vld [vmem:[%s1 + $0x114] sm:$0xf]
    %v131 = vld [vmem:[%s1 + $0x118] sm:$0xf]
    %v132 = vld [vmem:[%s1 + $0x11c] sm:$0xf]
    %v133 = vld [vmem:[%s1 + $0x120] sm:$0xf]
    %v134 = vld [vmem:[%s1 + $0x124] sm:$0xf]
    %v135 = vld [vmem:[%s1 + $0x128] sm:$0xf]
    %v136 = vld [vmem:[%s1 + $0x12c] sm:$0xf]
    %v137 = vld [vmem:[%s1 + $0x130] sm:$0xf]
    %v138 = vld [vmem:[%s1 + $0x134] sm:$0xf]
    %v139 = vld [vmem:[%s1 + $0x138] sm:$0xf]
    %v140 = vld [vmem:[%s1 + $0x13c] sm:$0xf]
    %v141 = vld [vmem:[%s1 + $0x140] sm:$0xf]
    %v142 = vld [vmem:[%s1 + $0x144] sm:$0xf]
    %v143 = vld [vmem:[%s1 + $0x148] sm:$0xf]
    %v144 = vld [vmem:[%s1 + $0x14c] sm:$0xf]
    %v145 = vld [vmem:[%s1 + $0x150] sm:$0xf]
    %v146 = vld [vmem:[%s1 + $0x154] sm:$0xf]
    %v147 = vld [vmem:[%s1 + $0x158] sm:$0xf]
    %v148 = vld [vmem:[%s1 + $0x15c] sm:$0xf]
    %v149 = vld [vmem:[%s1 + $0x160] sm:$0xf]
    %v150 = vld [vmem:[%s1 + $0x164] sm:$0xf]
    %v151 = vld [vmem:[%s1 + $0x168] sm:$0xf]
    %v152 = vld [vmem:[%s1 + $0x16c] sm:$0xf]
    %v153 = vld [vmem:[%s1 + $0x170] sm:$0xf]
    %v154 = vld [vmem:[%s1 + $0x174] sm:$0xf]
    %v155 = vld [vmem:[%s1 + $0x178] sm:$0xf]
    %v156 = vld [vmem:[%s1 + $0x17c] sm:$0xf]
    %v157 = vld [vmem:[%s2] sm:$0x1]
    %v159 = vlaneseq
    %v160 = vshrl.u32 %v159, 7
    %v161 = vsub.s32 0, %v160
    %v162 = vrot.slane %v157, %v161
    %v176 = vunpack.c.l.b16 %v49
    %v177 = vunpack.c.h.b16 %v49
    %v178 = vunpack.c.l.b16 %v50
    %v179 = vunpack.c.h.b16 %v50
    %v180 = vunpack.c.l.b16 %v51
    %v181 = vunpack.c.h.b16 %v51
    %v182 = vunpack.c.l.b16 %v52
    %v183 = vunpack.c.h.b16 %v52
    %v184 = vunpack.c.l.b16 %v53
    %v185 = vunpack.c.h.b16 %v53
    %v186 = vunpack.c.l.b16 %v54
    %v187 = vunpack.c.h.b16 %v54
    %v188 = vunpack.c.l.b16 %v55
    %v189 = vunpack.c.h.b16 %v55
    %v190 = vunpack.c.l.b16 %v56
    %v191 = vunpack.c.h.b16 %v56
    %v192 = vunpack.c.l.b16 %v57
    %v193 = vunpack.c.h.b16 %v57
    %v194 = vunpack.c.l.b16 %v58
    %v195 = vunpack.c.h.b16 %v58
    %v196 = vunpack.c.l.b16 %v59
    %v197 = vunpack.c.h.b16 %v59
    %v198 = vunpack.c.l.b16 %v60
    %v199 = vunpack.c.h.b16 %v60
    %v200 = vpack.c.b16 %v182, %v176
    %v201 = vpack.c.b16 %v183, %v177
    %v202 = vpack.c.b16 %v184, %v178
    %v203 = vpack.c.b16 %v185, %v179
    %v204 = vpack.c.b16 %v186, %v180
    %v205 = vpack.c.b16 %v187, %v181
    %v206 = vpack.c.b16 %v194, %v188
    %v207 = vpack.c.b16 %v195, %v189
    %v208 = vpack.c.b16 %v196, %v190
    %v209 = vpack.c.b16 %v197, %v191
    %v210 = vpack.c.b16 %v198, %v192
    %v211 = vpack.c.b16 %v199, %v193
    %v320 = vunpack.c.l.b16 %v61
    %v321 = vunpack.c.l.b16 %v62
    %v322 = vunpack.c.l.b16 %v63
    %v323 = vunpack.c.l.b16 %v64
    %v324 = vunpack.c.l.b16 %v65
    %v325 = vunpack.c.l.b16 %v66
    %v326 = vunpack.c.l.b16 %v67
    %v327 = vunpack.c.l.b16 %v68
    %v328 = vunpack.c.l.b16 %v69
    %v329 = vunpack.c.l.b16 %v70
    %v330 = vunpack.c.l.b16 %v71
    %v331 = vunpack.c.l.b16 %v72
    %v332 = vunpack.c.l.b16 %v73
    %v333 = vunpack.c.l.b16 %v74
    %v334 = vunpack.c.l.b16 %v75
    %v335 = vunpack.c.l.b16 %v76
    %v336 = vunpack.c.l.b16 %v77
    %v337 = vunpack.c.l.b16 %v78
    %v338 = vunpack.c.l.b16 %v79
    %v339 = vunpack.c.l.b16 %v80
    %v340 = vunpack.c.l.b16 %v81
    %v341 = vunpack.c.l.b16 %v82
    %v342 = vunpack.c.l.b16 %v83
    %v343 = vunpack.c.l.b16 %v84
    %v344 = vunpack.c.l.b16 %v85
    %v345 = vunpack.c.l.b16 %v86
    %v346 = vunpack.c.l.b16 %v87
    %v347 = vunpack.c.l.b16 %v88
    %v348 = vunpack.c.l.b16 %v89
    %v349 = vunpack.c.l.b16 %v90
    %v350 = vunpack.c.l.b16 %v91
    %v351 = vunpack.c.l.b16 %v92
    %v352 = vunpack.c.l.b16 %v93
    %v353 = vunpack.c.l.b16 %v94
    %v354 = vunpack.c.l.b16 %v95
    %v355 = vunpack.c.l.b16 %v96
    %v356 = vunpack.c.l.b16 %v97
    %v357 = vunpack.c.l.b16 %v98
    %v358 = vunpack.c.l.b16 %v99
    %v359 = vunpack.c.l.b16 %v100
    %v360 = vunpack.c.l.b16 %v101
    %v361 = vunpack.c.l.b16 %v102
    %v362 = vunpack.c.l.b16 %v103
    %v363 = vunpack.c.l.b16 %v104
    %v364 = vunpack.c.l.b16 %v105
    %v365 = vunpack.c.l.b16 %v106
    %v366 = vunpack.c.l.b16 %v107
    %v367 = vunpack.c.l.b16 %v108
    %v368 = vunpack.c.l.b16 %v109
    %v369 = vunpack.c.l.b16 %v110
    %v370 = vunpack.c.l.b16 %v111
    %v371 = vunpack.c.l.b16 %v112
    %v372 = vunpack.c.l.b16 %v113
    %v373 = vunpack.c.l.b16 %v114
    %v374 = vunpack.c.l.b16 %v115
    %v375 = vunpack.c.l.b16 %v116
    %v376 = vunpack.c.l.b16 %v117
    %v377 = vunpack.c.l.b16 %v118
    %v378 = vunpack.c.l.b16 %v119
    %v379 = vunpack.c.l.b16 %v120
    %v380 = vunpack.c.l.b16 %v121
    %v381 = vunpack.c.l.b16 %v122
    %v382 = vunpack.c.l.b16 %v123
    %v383 = vunpack.c.l.b16 %v124
    %v384 = vunpack.c.l.b16 %v125
    %v385 = vunpack.c.l.b16 %v126
    %v386 = vunpack.c.l.b16 %v127
    %v387 = vunpack.c.l.b16 %v128
    %v388 = vunpack.c.l.b16 %v129
    %v389 = vunpack.c.l.b16 %v130
    %v390 = vunpack.c.l.b16 %v131
    %v391 = vunpack.c.l.b16 %v132
    %v392 = vunpack.c.l.b16 %v133
    %v393 = vunpack.c.l.b16 %v134
    %v394 = vunpack.c.l.b16 %v135
    %v395 = vunpack.c.l.b16 %v136
    %v396 = vunpack.c.l.b16 %v137
    %v397 = vunpack.c.l.b16 %v138
    %v398 = vunpack.c.l.b16 %v139
    %v399 = vunpack.c.l.b16 %v140
    %v400 = vunpack.c.l.b16 %v141
    %v401 = vunpack.c.l.b16 %v142
    %v402 = vunpack.c.l.b16 %v143
    %v403 = vunpack.c.l.b16 %v144
    %v404 = vunpack.c.l.b16 %v145
    %v405 = vunpack.c.l.b16 %v146
    %v406 = vunpack.c.l.b16 %v147
    %v407 = vunpack.c.l.b16 %v148
    %v408 = vunpack.c.l.b16 %v149
    %v409 = vunpack.c.l.b16 %v150
    %v410 = vunpack.c.l.b16 %v151
    %v411 = vunpack.c.l.b16 %v152
    %v412 = vunpack.c.l.b16 %v153
    %v413 = vunpack.c.l.b16 %v154
    %v414 = vunpack.c.l.b16 %v155
    %v415 = vunpack.c.l.b16 %v156
    %v416 = vpack.c.b16 %v321, %v320
    %v417 = vpack.c.b16 %v323, %v322
    %v418 = vpack.c.b16 %v325, %v324
    %v419 = vpack.c.b16 %v327, %v326
    %v420 = vpack.c.b16 %v329, %v328
    %v421 = vpack.c.b16 %v331, %v330
    %v422 = vpack.c.b16 %v333, %v332
    %v423 = vpack.c.b16 %v335, %v334
    %v424 = vpack.c.b16 %v337, %v336
    %v425 = vpack.c.b16 %v339, %v338
    %v426 = vpack.c.b16 %v341, %v340
    %v427 = vpack.c.b16 %v343, %v342
    %v428 = vpack.c.b16 %v345, %v344
    %v429 = vpack.c.b16 %v347, %v346
    %v430 = vpack.c.b16 %v349, %v348
    %v431 = vpack.c.b16 %v351, %v350
    %v432 = vpack.c.b16 %v353, %v352
    %v433 = vpack.c.b16 %v355, %v354
    %v434 = vpack.c.b16 %v357, %v356
    %v435 = vpack.c.b16 %v359, %v358
    %v436 = vpack.c.b16 %v361, %v360
    %v437 = vpack.c.b16 %v363, %v362
    %v438 = vpack.c.b16 %v365, %v364
    %v439 = vpack.c.b16 %v367, %v366
    %v440 = vpack.c.b16 %v369, %v368
    %v441 = vpack.c.b16 %v371, %v370
    %v442 = vpack.c.b16 %v373, %v372
    %v443 = vpack.c.b16 %v375, %v374
    %v444 = vpack.c.b16 %v377, %v376
    %v445 = vpack.c.b16 %v379, %v378
    %v446 = vpack.c.b16 %v381, %v380
    %v447 = vpack.c.b16 %v383, %v382
    %v448 = vpack.c.b16 %v385, %v384
    %v449 = vpack.c.b16 %v387, %v386
    %v450 = vpack.c.b16 %v389, %v388
    %v451 = vpack.c.b16 %v391, %v390
    %v452 = vpack.c.b16 %v393, %v392
    %v453 = vpack.c.b16 %v395, %v394
    %v454 = vpack.c.b16 %v397, %v396
    %v455 = vpack.c.b16 %v399, %v398
    %v456 = vpack.c.b16 %v401, %v400
    %v457 = vpack.c.b16 %v403, %v402
    %v458 = vpack.c.b16 %v405, %v404
    %v459 = vpack.c.b16 %v407, %v406
    %v460 = vpack.c.b16 %v409, %v408
    %v461 = vpack.c.b16 %v411, %v410
    %v462 = vpack.c.b16 %v413, %v412
    %v463 = vpack.c.b16 %v415, %v414
    %512 = vmatprep.subr.bf16.mxu0 0
    %513 = vmatpush1.bf16.msra.mxu0 %v416
    %514 = vmatprep.subr.bf16.mxu0 0
    %515 = vmatpush1.bf16.msra.mxu0 %v417
    %516 = vmatprep.subr.bf16.mxu0 0
    %517 = vmatpush1.bf16.msra.mxu0 %v418
    %518 = vmatprep.subr.bf16.mxu0 0
    %519 = vmatpush1.bf16.msra.mxu0 %v419
    %520 = vmatprep.subr.bf16.mxu0 0
    %521 = vmatpush1.bf16.msra.mxu0 %v420
    %522 = vmatprep.subr.bf16.mxu0 0
    %523 = vmatpush1.bf16.msra.mxu0 %v421
    %524 = vmatprep.subr.bf16.mxu0 0
    %525 = vmatpush1.bf16.msra.mxu0 %v422
    %526 = vmatprep.subr.bf16.mxu0 0
    %527 = vmatpush1.bf16.msra.mxu0 %v423
    %528 = vmatprep.subr.bf16.mxu0 0
    %529 = vmatpush1.bf16.msra.mxu0 %v424
    %530 = vmatprep.subr.bf16.mxu0 0
    %531 = vmatpush1.bf16.msra.mxu0 %v425
    %532 = vmatprep.subr.bf16.mxu0 0
    %533 = vmatpush1.bf16.msra.mxu0 %v426
    %534 = vmatprep.subr.bf16.mxu0 0
    %535 = vmatpush1.bf16.msra.mxu0 %v427
    %536 = vmatprep.subr.bf16.mxu0 0
    %537 = vmatpush1.bf16.msra.mxu0 %v428
    %538 = vmatprep.subr.bf16.mxu0 0
    %539 = vmatpush1.bf16.msra.mxu0 %v429
    %540 = vmatprep.subr.bf16.mxu0 0
    %541 = vmatpush1.bf16.msra.mxu0 %v430
    %542 = vmatprep.subr.bf16.mxu0 0
    %543 = vmatpush1.bf16.msra.mxu0 %v431
    %544 = vmatprep.mubr.bf16.mxu0 %v201
    %545 = vmatmul.mubr.bf16.gmra.mrb[0].mxu0 %v200
    %v546 = vpop.f32.mrb[0].mxu0
    %v547 = vadd.f32 %v162, %v546
    %v548 = vpop.f32.mrb[0].mxu0
    %v549 = vpop.f32.mrb[0].mxu0
    %v550 = vadd.f32 %v162, %v549
    %v551 = vpop.f32.mrb[0].mxu0
    %552 = vmatprep.mubr.bf16.mxu0 %v207
    %553 = vmatmul.mubr.bf16.gmra.mrb[0].mxu0 %v206
    %v554 = vpop.f32.mrb[0].mxu0
    %v555 = vadd.f32 %v162, %v554
    %v556 = vpop.f32.mrb[0].mxu0
    %v557 = vpop.f32.mrb[0].mxu0
    %v558 = vadd.f32 %v162, %v557
    %v559 = vpop.f32.mrb[0].mxu0
    %560 = vdwg.mxu0
    %561 = vmatprep.subr.bf16.mxu0 0
    %562 = vmatpush1.bf16.msra.mxu0 %v432
    %563 = vmatprep.subr.bf16.mxu0 0
    %564 = vmatpush1.bf16.msra.mxu0 %v433
    %565 = vmatprep.subr.bf16.mxu0 0
    %566 = vmatpush1.bf16.msra.mxu0 %v434
    %567 = vmatprep.subr.bf16.mxu0 0
    %568 = vmatpush1.bf16.msra.mxu0 %v435
    %569 = vmatprep.subr.bf16.mxu0 0
    %570 = vmatpush1.bf16.msra.mxu0 %v436
    %571 = vmatprep.subr.bf16.mxu0 0
    %572 = vmatpush1.bf16.msra.mxu0 %v437
    %573 = vmatprep.subr.bf16.mxu0 0
    %574 = vmatpush1.bf16.msra.mxu0 %v438
    %575 = vmatprep.subr.bf16.mxu0 0
    %576 = vmatpush1.bf16.msra.mxu0 %v439
    %577 = vmatprep.subr.bf16.mxu0 0
    %578 = vmatpush1.bf16.msra.mxu0 %v440
    %579 = vmatprep.subr.bf16.mxu0 0
    %580 = vmatpush1.bf16.msra.mxu0 %v441
    %581 = vmatprep.subr.bf16.mxu0 0
    %582 = vmatpush1.bf16.msra.mxu0 %v442
    %583 = vmatprep.subr.bf16.mxu0 0
    %584 = vmatpush1.bf16.msra.mxu0 %v443
    %585 = vmatprep.subr.bf16.mxu0 0
    %586 = vmatpush1.bf16.msra.mxu0 %v444
    %587 = vmatprep.subr.bf16.mxu0 0
    %588 = vmatpush1.bf16.msra.mxu0 %v445
    %589 = vmatprep.subr.bf16.mxu0 0
    %590 = vmatpush1.bf16.msra.mxu0 %v446
    %591 = vmatprep.subr.bf16.mxu0 0
    %592 = vmatpush1.bf16.msra.mxu0 %v447
    %593 = vmatprep.mubr.bf16.mxu0 %v203
    %594 = vmatmul.mubr.bf16.gmra.mrb[0].mxu0 %v202
    %v595 = vpop.f32.mrb[0].mxu0
    %v596 = vadd.f32 %v547, %v595
    %v597 = vpop.f32.mrb[0].mxu0
    %v598 = vpop.f32.mrb[0].mxu0
    %v599 = vadd.f32 %v550, %v598
    %v600 = vpop.f32.mrb[0].mxu0
    %601 = vmatprep.mubr.bf16.mxu0 %v209
    %602 = vmatmul.mubr.bf16.gmra.mrb[0].mxu0 %v208
    %v603 = vpop.f32.mrb[0].mxu0
    %v604 = vadd.f32 %v555, %v603
    %v605 = vpop.f32.mrb[0].mxu0
    %v606 = vpop.f32.mrb[0].mxu0
    %v607 = vadd.f32 %v558, %v606
    %v608 = vpop.f32.mrb[0].mxu0
    %609 = vdwg.mxu0
    %610 = vmatprep.subr.bf16.mxu0 0
    %611 = vmatpush1.bf16.msra.mxu0 %v448
    %612 = vmatprep.subr.bf16.mxu0 0
    %613 = vmatpush1.bf16.msra.mxu0 %v449
    %614 = vmatprep.subr.bf16.mxu0 0
    %615 = vmatpush1.bf16.msra.mxu0 %v450
    %616 = vmatprep.subr.bf16.mxu0 0
    %617 = vmatpush1.bf16.msra.mxu0 %v451
    %618 = vmatprep.subr.bf16.mxu0 0
    %619 = vmatpush1.bf16.msra.mxu0 %v452
    %620 = vmatprep.subr.bf16.mxu0 0
    %621 = vmatpush1.bf16.msra.mxu0 %v453
    %622 = vmatprep.subr.bf16.mxu0 0
    %623 = vmatpush1.bf16.msra.mxu0 %v454
    %624 = vmatprep.subr.bf16.mxu0 0
    %625 = vmatpush1.bf16.msra.mxu0 %v455
    %626 = vmatprep.subr.bf16.mxu0 0
    %627 = vmatpush1.bf16.msra.mxu0 %v456
    %628 = vmatprep.subr.bf16.mxu0 0
    %629 = vmatpush1.bf16.msra.mxu0 %v457
    %630 = vmatprep.subr.bf16.mxu0 0
    %631 = vmatpush1.bf16.msra.mxu0 %v458
    %632 = vmatprep.subr.bf16.mxu0 0
    %633 = vmatpush1.bf16.msra.mxu0 %v459
    %634 = vmatprep.subr.bf16.mxu0 0
    %635 = vmatpush1.bf16.msra.mxu0 %v460
    %636 = vmatprep.subr.bf16.mxu0 0
    %637 = vmatpush1.bf16.msra.mxu0 %v461
    %638 = vmatprep.subr.bf16.mxu0 0
    %639 = vmatpush1.bf16.msra.mxu0 %v462
    %640 = vmatprep.subr.bf16.mxu0 0
    %641 = vmatpush1.bf16.msra.mxu0 %v463
    %642 = vmatprep.mubr.bf16.mxu0 %v205
    %643 = vmatmul.mubr.bf16.gmra.mrb[0].mxu0 %v204
    %v644 = vpop.f32.mrb[0].mxu0
    %v645 = vadd.f32 %v596, %v644
    %v646 = vpop.f32.mrb[0].mxu0
    %v647 = vpop.f32.mrb[0].mxu0
    %v648 = vadd.f32 %v599, %v647
    %v649 = vpop.f32.mrb[0].mxu0
    %650 = vmatprep.mubr.bf16.mxu0 %v211
    %651 = vmatmul.mubr.bf16.gmra.mrb[0].mxu0 %v210
    %v652 = vpop.f32.mrb[0].mxu0
    %v653 = vadd.f32 %v604, %v652
    %v654 = vpop.f32.mrb[0].mxu0
    %v655 = vpop.f32.mrb[0].mxu0
    %v656 = vadd.f32 %v607, %v655
    %v657 = vpop.f32.mrb[0].mxu0
    %658 = vdwg.mxu0
    %v659 = vmul.f32 %v645, 0.5
    %v660 = vmul.f32 %v648, 0.5
    %v661 = vmul.f32 %v653, 0.5
    %v662 = vmul.f32 %v656, 0.5
    %v663 = vmul.f32 %v645, 0.044715
    %v664 = vmul.f32 %v648, 0.044715
    %v665 = vmul.f32 %v653, 0.044715
    %v666 = vmul.f32 %v656, 0.044715
    %v667 = vmul.f32 %v663, %v645
    %v668 = vmul.f32 %v664, %v648
    %v669 = vmul.f32 %v665, %v653
    %v670 = vmul.f32 %v666, %v656
    %v671 = vmul.f32 %v667, %v645
    %v672 = vmul.f32 %v668, %v648
    %v673 = vmul.f32 %v669, %v653
    %v674 = vmul.f32 %v670, %v656
    %v675 = vadd.f32 %v645, %v671
    %v676 = vadd.f32 %v648, %v672
    %v677 = vadd.f32 %v653, %v673
    %v678 = vadd.f32 %v656, %v674
    %v679 = vmul.f32 %v675, 0.7978846
    %v680 = vmul.f32 %v676, 0.7978846
    %v681 = vmul.f32 %v677, 0.7978846
    %v682 = vmul.f32 %v678, 0.7978846
    %v683 = vtanh.pop %v679
    %v684 = vtanh.pop %v680
    %v685 = vtanh.pop %v681
    %v686 = vtanh.pop %v682
    %v687 = vadd.f32 %v683, 1.0
    %v688 = vadd.f32 %v684, 1.0
    %v689 = vadd.f32 %v685, 1.0
    %v690 = vadd.f32 %v686, 1.0
    %v691 = vmul.f32 %v659, %v687
    %v692 = vmul.f32 %v660, %v688
    %v693 = vmul.f32 %v661, %v689
    %v694 = vmul.f32 %v662, %v690
    %v695 = vpack.c.bf16 %v692, %v691
    %v696 = vpack.c.bf16 %v694, %v693
    %v697 = vld [vmem:[%s3] sm:$0xff]
    %v698 = vld [vmem:[%s3 + $0x8] sm:$0xff]
    %v699 = vld [vmem:[%s3 + $0x10] sm:$0xff]
    %v700 = vld [vmem:[%s3 + $0x18] sm:$0xff]
    %v701 = vld [vmem:[%s3 + $0x20] sm:$0xff]
    %v702 = vld [vmem:[%s3 + $0x28] sm:$0xff]
    %v703 = vld [vmem:[%s3 + $0x30] sm:$0xff]
    %v704 = vld [vmem:[%s3 + $0x38] sm:$0xff]
    %v705 = vld [vmem:[%s3 + $0x40] sm:$0xff]
    %v706 = vld [vmem:[%s3 + $0x48] sm:$0xff]
    %v707 = vld [vmem:[%s3 + $0x50] sm:$0xff]
    %v708 = vld [vmem:[%s3 + $0x58] sm:$0xff]
    %v709 = vld [vmem:[%s4] sm:$0x3]
    %v711 = vlaneseq
    %v712 = vshrl.u32 %v711, 7
    %v713 = vsub.s32 0, %v712
    %v714 = vrot.slane %v709, %v713
    %v715 = vlaneseq
    %v716 = vshrl.u32 %v715, 7
    %v717 = vsub.s32 1, %v716
    %v718 = vrot.slane %v709, %v717
    %v733 = vunpack.c.l.b16 %v697
    %v734 = vunpack.c.h.b16 %v697
    %v735 = vunpack.c.l.b16 %v698
    %v736 = vunpack.c.h.b16 %v698
    %v737 = vunpack.c.l.b16 %v699
    %v738 = vunpack.c.h.b16 %v699
    %v739 = vunpack.c.l.b16 %v700
    %v740 = vunpack.c.h.b16 %v700
    %v741 = vunpack.c.l.b16 %v701
    %v742 = vunpack.c.h.b16 %v701
    %v743 = vunpack.c.l.b16 %v702
    %v744 = vunpack.c.h.b16 %v702
    %v745 = vunpack.c.l.b16 %v703
    %v746 = vunpack.c.h.b16 %v703
    %v747 = vunpack.c.l.b16 %v704
    %v748 = vunpack.c.h.b16 %v704
    %v749 = vunpack.c.l.b16 %v705
    %v750 = vunpack.c.h.b16 %v705
    %v751 = vunpack.c.l.b16 %v706
    %v752 = vunpack.c.h.b16 %v706
    %v753 = vunpack.c.l.b16 %v707
    %v754 = vunpack.c.h.b16 %v707
    %v755 = vunpack.c.l.b16 %v708
    %v756 = vunpack.c.h.b16 %v708
    %v757 = vpack.c.b16 %v735, %v733
    %v758 = vpack.c.b16 %v736, %v734
    %v759 = vpack.c.b16 %v739, %v737
    %v760 = vpack.c.b16 %v740, %v738
    %v761 = vpack.c.b16 %v743, %v741
    %v762 = vpack.c.b16 %v744, %v742
    %v763 = vpack.c.b16 %v747, %v745
    %v764 = vpack.c.b16 %v748, %v746
    %v765 = vpack.c.b16 %v751, %v749
    %v766 = vpack.c.b16 %v752, %v750
    %v767 = vpack.c.b16 %v755, %v753
    %v768 = vpack.c.b16 %v756, %v754
    %vm781 = vcmask 785408
    %v783 = vsel %vm781, %v695, 0
    %v786 = vsel %vm781, %v696, 0
    %788 = vmatprep.subr.bf16.mxu0 %v758
    %789 = vmatpush1.bf16.msra.mxu0 %v757
    %790 = vmatprep.subr.bf16.mxu0 %v760
    %791 = vmatpush1.bf16.msra.mxu0 %v759
    %792 = vmatprep.subr.bf16.mxu0 %v762
    %793 = vmatpush1.bf16.msra.mxu0 %v761
    %794 = vmatprep.subr.bf16.mxu0 %v764
    %795 = vmatpush1.bf16.msra.mxu0 %v763
    %796 = vmatprep.subr.bf16.mxu0 %v766
    %797 = vmatpush1.bf16.msra.mxu0 %v765
    %798 = vmatprep.subr.bf16.mxu0 %v768
    %799 = vmatpush1.bf16.msra.mxu0 %v767
    %800 = vmatprep.subr.bf16.mxu0 0
    %801 = vmatpush1.bf16.msra.mxu0 0
    %802 = vmatprep.subr.bf16.mxu0 0
    %803 = vmatpush1.bf16.msra.mxu0 0
    %804 = vmatprep.subr.bf16.mxu0 0
    %805 = vmatpush1.bf16.msra.mxu0 0
    %806 = vmatprep.subr.bf16.mxu0 0
    %807 = vmatpush1.bf16.msra.mxu0 0
    %808 = vmatprep.subr.bf16.mxu0 0
    %809 = vmatpush1.bf16.msra.mxu0 0
    %810 = vmatprep.subr.bf16.mxu0 0
    %811 = vmatpush1.bf16.msra.mxu0 0
    %812 = vmatprep.subr.bf16.mxu0 0
    %813 = vmatpush1.bf16.msra.mxu0 0
    %814 = vmatprep.subr.bf16.mxu0 0
    %815 = vmatpush1.bf16.msra.mxu0 0
    %816 = vmatprep.subr.bf16.mxu0 0
    %817 = vmatpush1.bf16.msra.mxu0 0
    %818 = vmatprep.subr.bf16.mxu0 0
    %819 = vmatpush1.bf16.msra.mxu0 0
    %820 = vmatprep.mubr.bf16.mxu0 0
    %821 = vmatmul.mubr.bf16.gmra.mrb[0].mxu0 %v783
    %v822 = vpop.f32.mrb[0].mxu0
    %v823 = vadd.f32 %v714, %v822
    %v824 = vpop.f32.mrb[0].mxu0
    %v825 = vadd.f32 %v718, %v824
    %v826 = vpop.f32.mrb[0].mxu0
    %v827 = vadd.f32 %v714, %v826
    %v828 = vpop.f32.mrb[0].mxu0
    %v829 = vadd.f32 %v718, %v828
    %830 = vmatprep.mubr.bf16.mxu0 0
    %831 = vmatmul.mubr.bf16.gmra.mrb[0].mxu0 %v786
    %v832 = vpop.f32.mrb[0].mxu0
    %v833 = vadd.f32 %v714, %v832
    %v834 = vpop.f32.mrb[0].mxu0
    %v835 = vadd.f32 %v718, %v834
    %v836 = vpop.f32.mrb[0].mxu0
    %v837 = vadd.f32 %v714, %v836
    %v838 = vpop.f32.mrb[0].mxu0
    %v839 = vadd.f32 %v718, %v838
    %840 = vdwg.mxu0
    %v841 = vmul.f32 %v823, 0.5
    %v842 = vmul.f32 %v825, 0.5
    %v843 = vmul.f32 %v827, 0.5
    %v844 = vmul.f32 %v829, 0.5
    %v845 = vmul.f32 %v833, 0.5
    %v846 = vmul.f32 %v835, 0.5
    %v847 = vmul.f32 %v837, 0.5
    %v848 = vmul.f32 %v839, 0.5
    %v849 = vmul.f32 %v823, 0.044715
    %v850 = vmul.f32 %v825, 0.044715
    %v851 = vmul.f32 %v827, 0.044715
    %v852 = vmul.f32 %v829, 0.044715
    %v853 = vmul.f32 %v833, 0.044715
    %v854 = vmul.f32 %v835, 0.044715
    %v855 = vmul.f32 %v837, 0.044715
    %v856 = vmul.f32 %v839, 0.044715
    %v857 = vmul.f32 %v849, %v823
    %v858 = vmul.f32 %v850, %v825
    %v859 = vmul.f32 %v851, %v827
    %v860 = vmul.f32 %v852, %v829
    %v861 = vmul.f32 %v853, %v833
    %v862 = vmul.f32 %v854, %v835
    %v863 = vmul.f32 %v855, %v837
    %v864 = vmul.f32 %v856, %v839
    %v865 = vmul.f32 %v857, %v823
    %v866 = vmul.f32 %v858, %v825
    %v867 = vmul.f32 %v859, %v827
    %v868 = vmul.f32 %v860, %v829
    %v869 = vmul.f32 %v861, %v833
    %v870 = vmul.f32 %v862, %v835
    %v871 = vmul.f32 %v863, %v837
    %v872 = vmul.f32 %v864, %v839
    %v873 = vadd.f32 %v823, %v865
    %v874 = vadd.f32 %v825, %v866
    %v875 = vadd.f32 %v827, %v867
    %v876 = vadd.f32 %v829, %v868
    %v877 = vadd.f32 %v833, %v869
    %v878 = vadd.f32 %v835, %v870
    %v879 = vadd.f32 %v837, %v871
    %v880 = vadd.f32 %v839, %v872
    %v881 = vmul.f32 %v873, 0.7978846
    %v882 = vmul.f32 %v874, 0.7978846
    %v883 = vmul.f32 %v875, 0.7978846
    %v884 = vmul.f32 %v876, 0.7978846
    %v885 = vmul.f32 %v877, 0.7978846
    %v886 = vmul.f32 %v878, 0.7978846
    %v887 = vmul.f32 %v879, 0.7978846
    %v888 = vmul.f32 %v880, 0.7978846
    %v889 = vtanh.pop %v881
    %v890 = vtanh.pop %v882
    %v891 = vtanh.pop %v883
    %v892 = vtanh.pop %v884
    %v893 = vtanh.pop %v885
    %v894 = vtanh.pop %v886
    %v895 = vtanh.pop %v887
    %v896 = vtanh.pop %v888
    %v897 = vadd.f32 %v889, 1.0
    %v898 = vadd.f32 %v890, 1.0
    %v899 = vadd.f32 %v891, 1.0
    %v900 = vadd.f32 %v892, 1.0
    %v901 = vadd.f32 %v893, 1.0
    %v902 = vadd.f32 %v894, 1.0
    %v903 = vadd.f32 %v895, 1.0
    %v904 = vadd.f32 %v896, 1.0
    %v905 = vmul.f32 %v841, %v897
    %v906 = vmul.f32 %v842, %v898
    %v907 = vmul.f32 %v843, %v899
    %v908 = vmul.f32 %v844, %v900
    %v909 = vmul.f32 %v845, %v901
    %v910 = vmul.f32 %v846, %v902
    %v911 = vmul.f32 %v847, %v903
    %v912 = vmul.f32 %v848, %v904
    %v913 = vld [vmem:[%s5] sm:$0xff]
    %v914 = vld [vmem:[%s5 + $0x8] sm:$0xff]
    %v915 = vmul.f32 %v691, %v913
    %v916 = vmul.f32 %v692, %v914
    %v917 = vmul.f32 %v693, %v913
    %v918 = vmul.f32 %v694, %v914
    %v919 = vsel %vm781, %v915, 0.0
    %v920 = vsel %vm781, %v916, 0.0
    %v921 = vadd.f32 %v919, %v920
    %v922 = vrot.slane %v921, 4
    %v923 = vadd.f32 %v921, %v922
    %v924 = vrot.slane %v923, 2
    %v925 = vadd.f32 %v923, %v924
    %v926 = vrot.slane %v925, 1
    %v927 = vadd.f32 %v925, %v926
    %v928 = vsel %vm781, %v917, 0.0
    %v929 = vsel %vm781, %v918, 0.0
    %v930 = vadd.f32 %v928, %v929
    %v931 = vrot.slane %v930, 4
    %v932 = vadd.f32 %v930, %v931
    %v933 = vrot.slane %v932, 2
    %v934 = vadd.f32 %v932, %v933
    %v935 = vrot.slane %v934, 1
    %v936 = vadd.f32 %v934, %v935
    %v937 = vld [vmem:[%s6] sm:$0xff]
    %v938 = vld [vmem:[%s6 + $0x8] sm:$0xff]
    %v939 = vld [vmem:[%s6 + $0x10] sm:$0xff]
    %v940 = vld [vmem:[%s6 + $0x18] sm:$0xff]
    %v941 = vmul.f32 %v905, %v937
    %v942 = vmul.f32 %v906, %v938
    %v943 = vmul.f32 %v907, %v939
    %v944 = vmul.f32 %v908, %v940
    %v945 = vmul.f32 %v909, %v937
    %v946 = vmul.f32 %v910, %v938
    %v947 = vmul.f32 %v911, %v939
    %v948 = vmul.f32 %v912, %v940
    %v949 = vadd.f32 %v941, %v943
    %v950 = vrot.slane %v949, 4
    %v951 = vadd.f32 %v949, %v950
    %v952 = vrot.slane %v951, 2
    %v953 = vadd.f32 %v951, %v952
    %v954 = vrot.slane %v953, 1
    %v955 = vadd.f32 %v953, %v954
    %vm956 = vcmask 261120
    %v957 = vsel %vm956, %v942, 0.0
    %v958 = vsel %vm956, %v944, 0.0
    %v959 = vadd.f32 %v957, %v958
    %v960 = vrot.slane %v959, 4
    %v961 = vadd.f32 %v959, %v960
    %v962 = vrot.slane %v961, 2
    %v963 = vadd.f32 %v961, %v962
    %v964 = vrot.slane %v963, 1
    %v965 = vadd.f32 %v963, %v964
    %v966 = vadd.f32 %v945, %v947
    %v967 = vrot.slane %v966, 4
    %v968 = vadd.f32 %v966, %v967
    %v969 = vrot.slane %v968, 2
    %v970 = vadd.f32 %v968, %v969
    %v971 = vrot.slane %v970, 1
    %v972 = vadd.f32 %v970, %v971
    %v973 = vsel %vm956, %v946, 0.0
    %v974 = vsel %vm956, %v948, 0.0
    %v975 = vadd.f32 %v973, %v974
    %v976 = vrot.slane %v975, 4
    %v977 = vadd.f32 %v975, %v976
    %v978 = vrot.slane %v977, 2
    %v979 = vadd.f32 %v977, %v978
    %v980 = vrot.slane %v979, 1
    %v981 = vadd.f32 %v979, %v980
    %vm984 = vcmask 1041409
    %v985 = vsel %vm984, %v936, %v927
    %v991 = vsel %vm984, %v972, %v955
    %v992 = vsel %vm984, %v981, %v965
    %993 = vrot.lane.b32.xlu0 %v991, 96
    %v994 = vpop.permute.xlu0 %993
    %995 = vrot.lane.b32.xlu0 %v992, 96
    %v996 = vpop.permute.xlu0 %995
    %v997 = vsel %vm781, %v994, %v996
    %v1000 = vsel %vm781, %v985, %v994
    %v1001 = vld [vmem:[%s7] sm:$0xf]
    %v1002 = vld [vmem:[%s7 + $0x4] sm:$0xf]
    %v1003 = vld [vmem:[%s7 + $0x8] sm:$0xf]
    %v1004 = vld [vmem:[%s7 + $0xc] sm:$0xf]
    %v1005 = vld [vmem:[%s7 + $0x10] sm:$0xf]
    %v1006 = vld [vmem:[%s7 + $0x14] sm:$0xf]
    %v1007 = vld [vmem:[%s7 + $0x18] sm:$0xf]
    %v1008 = vld [vmem:[%s7 + $0x1c] sm:$0xf]
    %v1009 = vld [vmem:[%s7 + $0x20] sm:$0xf]
    %v1010 = vld [vmem:[%s7 + $0x24] sm:$0xf]
    %v1011 = vld [vmem:[%s7 + $0x28] sm:$0xf]
    %v1012 = vld [vmem:[%s7 + $0x2c] sm:$0xf]
    %v1013 = vld [vmem:[%s7 + $0x30] sm:$0xf]
    %v1014 = vld [vmem:[%s7 + $0x34] sm:$0xf]
    %v1015 = vld [vmem:[%s7 + $0x38] sm:$0xf]
    %v1016 = vld [vmem:[%s7 + $0x3c] sm:$0xf]
    %v1017 = vld [vmem:[%s7 + $0x40] sm:$0xf]
    %v1018 = vld [vmem:[%s7 + $0x44] sm:$0xf]
    %v1019 = vld [vmem:[%s7 + $0x48] sm:$0xf]
    %v1020 = vld [vmem:[%s7 + $0x4c] sm:$0xf]
    %v1021 = vld [vmem:[%s7 + $0x50] sm:$0xf]
    %v1022 = vld [vmem:[%s7 + $0x54] sm:$0xf]
    %v1023 = vld [vmem:[%s7 + $0x58] sm:$0xf]
    %v1024 = vld [vmem:[%s7 + $0x5c] sm:$0xf]
    %v1025 = vld [vmem:[%s7 + $0x60] sm:$0xf]
    %v1026 = vld [vmem:[%s7 + $0x64] sm:$0xf]
    %v1027 = vld [vmem:[%s7 + $0x68] sm:$0xf]
    %v1028 = vld [vmem:[%s7 + $0x6c] sm:$0xf]
    %v1029 = vld [vmem:[%s7 + $0x70] sm:$0xf]
    %v1030 = vld [vmem:[%s7 + $0x74] sm:$0xf]
    %v1031 = vld [vmem:[%s7 + $0x78] sm:$0xf]
    %v1032 = vld [vmem:[%s7 + $0x7c] sm:$0xf]
    %v1033 = vld [vmem:[%s8] sm:$0xff]
    %v1034 = vld [vmem:[%s8 + $0x8] sm:$0xff]
    %v1035 = vld [vmem:[%s8 + $0x10] sm:$0xff]
    %v1036 = vld [vmem:[%s8 + $0x18] sm:$0xff]
    %v1037 = vmul.f32 %v1000, %v1000
    %v1038 = vmul.f32 %v997, %v997
    %v1039 = vpack.c.bf16 %v1037, %v1037
    %v1040 = vpack.c.bf16 %v1038, %v1038
    %v1073 = vunpack.c.l.b16 %v1001
    %v1074 = vunpack.c.l.b16 %v1002
    %v1075 = vunpack.c.l.b16 %v1003
    %v1076 = vunpack.c.l.b16 %v1004
    %v1077 = vunpack.c.l.b16 %v1005
    %v1078 = vunpack.c.l.b16 %v1006
    %v1079 = vunpack.c.l.b16 %v1007
    %v1080 = vunpack.c.l.b16 %v1008
    %v1081 = vunpack.c.l.b16 %v1009
    %v1082 = vunpack.c.l.b16 %v1010
    %v1083 = vunpack.c.l.b16 %v1011
    %v1084 = vunpack.c.l.b16 %v1012
    %v1085 = vunpack.c.l.b16 %v1013
    %v1086 = vunpack.c.l.b16 %v1014
    %v1087 = vunpack.c.l.b16 %v1015
    %v1088 = vunpack.c.l.b16 %v1016
    %v1089 = vunpack.c.l.b16 %v1017
    %v1090 = vunpack.c.l.b16 %v1018
    %v1091 = vunpack.c.l.b16 %v1019
    %v1092 = vunpack.c.l.b16 %v1020
    %v1093 = vunpack.c.l.b16 %v1021
    %v1094 = vunpack.c.l.b16 %v1022
    %v1095 = vunpack.c.l.b16 %v1023
    %v1096 = vunpack.c.l.b16 %v1024
    %v1097 = vunpack.c.l.b16 %v1025
    %v1098 = vunpack.c.l.b16 %v1026
    %v1099 = vunpack.c.l.b16 %v1027
    %v1100 = vunpack.c.l.b16 %v1028
    %v1101 = vunpack.c.l.b16 %v1029
    %v1102 = vunpack.c.l.b16 %v1030
    %v1103 = vunpack.c.l.b16 %v1031
    %v1104 = vunpack.c.l.b16 %v1032
    %v1105 = vpack.c.b16 %v1074, %v1073
    %v1106 = vpack.c.b16 %v1076, %v1075
    %v1107 = vpack.c.b16 %v1078, %v1077
    %v1108 = vpack.c.b16 %v1080, %v1079
    %v1109 = vpack.c.b16 %v1082, %v1081
    %v1110 = vpack.c.b16 %v1084, %v1083
    %v1111 = vpack.c.b16 %v1086, %v1085
    %v1112 = vpack.c.b16 %v1088, %v1087
    %v1113 = vpack.c.b16 %v1090, %v1089
    %v1114 = vpack.c.b16 %v1092, %v1091
    %v1115 = vpack.c.b16 %v1094, %v1093
    %v1116 = vpack.c.b16 %v1096, %v1095
    %v1117 = vpack.c.b16 %v1098, %v1097
    %v1118 = vpack.c.b16 %v1100, %v1099
    %v1119 = vpack.c.b16 %v1102, %v1101
    %v1120 = vpack.c.b16 %v1104, %v1103
    %1137 = vmatprep.subr.bf16.mxu0 0
    %1138 = vmatpush1.bf16.msra.mxu0 %v1105
    %1139 = vmatprep.subr.bf16.mxu0 0
    %1140 = vmatpush1.bf16.msra.mxu0 %v1106
    %1141 = vmatprep.subr.bf16.mxu0 0
    %1142 = vmatpush1.bf16.msra.mxu0 %v1107
    %1143 = vmatprep.subr.bf16.mxu0 0
    %1144 = vmatpush1.bf16.msra.mxu0 %v1108
    %1145 = vmatprep.subr.bf16.mxu0 0
    %1146 = vmatpush1.bf16.msra.mxu0 %v1109
    %1147 = vmatprep.subr.bf16.mxu0 0
    %1148 = vmatpush1.bf16.msra.mxu0 %v1110
    %1149 = vmatprep.subr.bf16.mxu0 0
    %1150 = vmatpush1.bf16.msra.mxu0 %v1111
    %1151 = vmatprep.subr.bf16.mxu0 0
    %1152 = vmatpush1.bf16.msra.mxu0 %v1112
    %1153 = vmatprep.subr.bf16.mxu0 0
    %1154 = vmatpush1.bf16.msra.mxu0 %v1113
    %1155 = vmatprep.subr.bf16.mxu0 0
    %1156 = vmatpush1.bf16.msra.mxu0 %v1114
    %1157 = vmatprep.subr.bf16.mxu0 0
    %1158 = vmatpush1.bf16.msra.mxu0 %v1115
    %1159 = vmatprep.subr.bf16.mxu0 0
    %1160 = vmatpush1.bf16.msra.mxu0 %v1116
    %1161 = vmatprep.subr.bf16.mxu0 0
    %1162 = vmatpush1.bf16.msra.mxu0 %v1117
    %1163 = vmatprep.subr.bf16.mxu0 0
    %1164 = vmatpush1.bf16.msra.mxu0 %v1118
    %1165 = vmatprep.subr.bf16.mxu0 0
    %1166 = vmatpush1.bf16.msra.mxu0 %v1119
    %1167 = vmatprep.subr.bf16.mxu0 0
    %1168 = vmatpush1.bf16.msra.mxu0 %v1120
    %1169 = vmatprep.mubr.bf16.mxu0 %v1040
    %1170 = vmatmul.mubr.bf16.gmra.mrb[0].mxu0 %v1039
    %v1171 = vpop.f32.mrb[0].mxu0
    %v1172 = vadd.f32 0.0, %v1171
    %v1173 = vpop.f32.mrb[0].mxu0
    %v1174 = vpop.f32.mrb[0].mxu0
    %v1175 = vpop.f32.mrb[0].mxu0
    %1176 = vdwg.mxu0
    %v1177 = vrsqrt.pop %v1172
    %v1178 = vmul.f32 %v1172, %v1177
    %vm1179 = vcmp.eq.f32.partialorder %v1172, inf
    %v1180 = vsel %vm1179, %v1172, %v1178
    %vm1181 = vcmp.eq.f32.partialorder %v1172, 0.0
    %v1182 = vand.u32 %v1172, 2147483648
    %v1183 = vsel %vm1181, %v1182, %v1180
    %v1184 = vmin.f32 %v1183, 60.0
    %v1185 = vmul.f32 %v1184, 1.442695
    %v1186 = vpow.pop %v1185
    %v1187 = vadd.f32 %v1186, 1e-20
    %v1188 = vrcp.pop %v1187
    %v1189 = vsub.f32 1.0, %v1188
    %v1190 = vadd.f32 %v1183, 1e-20
    %v1191 = vrcp.pop %v1190
    %v1192 = vmul.f32 %v1189, %v1191
    %v1193 = vpack.c.bf16 %v1192, %v1192
    %v1198 = vunpack.c.l.b16 %v1033
    %v1199 = vunpack.c.h.b16 %v1033
    %v1200 = vunpack.c.l.b16 %v1034
    %v1201 = vunpack.c.h.b16 %v1034
    %v1202 = vunpack.c.l.b16 %v1035
    %v1203 = vunpack.c.h.b16 %v1035
    %v1204 = vunpack.c.l.b16 %v1036
    %v1205 = vunpack.c.h.b16 %v1036
    %v1206 = vpack.c.b16 %v1200, %v1198
    %v1207 = vpack.c.b16 %v1201, %v1199
    %v1208 = vpack.c.b16 %v1204, %v1202
    %v1209 = vpack.c.b16 %v1205, %v1203
    %v1215 = vsel %vm956, %v1193, 0
    %1217 = vmatprep.subr.bf16.mxu0 %v1207
    %1218 = vmatpush1.bf16.msra.mxu0 %v1206
    %1219 = vmatprep.subr.bf16.mxu0 %v1209
    %1220 = vmatpush1.bf16.msra.mxu0 %v1208
    %1221 = vmatprep.subr.bf16.mxu0 0
    %1222 = vmatpush1.bf16.msra.mxu0 0
    %1223 = vmatprep.subr.bf16.mxu0 0
    %1224 = vmatpush1.bf16.msra.mxu0 0
    %1225 = vmatprep.subr.bf16.mxu0 0
    %1226 = vmatpush1.bf16.msra.mxu0 0
    %1227 = vmatprep.subr.bf16.mxu0 0
    %1228 = vmatpush1.bf16.msra.mxu0 0
    %1229 = vmatprep.subr.bf16.mxu0 0
    %1230 = vmatpush1.bf16.msra.mxu0 0
    %1231 = vmatprep.subr.bf16.mxu0 0
    %1232 = vmatpush1.bf16.msra.mxu0 0
    %1233 = vmatprep.subr.bf16.mxu0 0
    %1234 = vmatpush1.bf16.msra.mxu0 0
    %1235 = vmatprep.subr.bf16.mxu0 0
    %1236 = vmatpush1.bf16.msra.mxu0 0
    %1237 = vmatprep.subr.bf16.mxu0 0
    %1238 = vmatpush1.bf16.msra.mxu0 0
    %1239 = vmatprep.subr.bf16.mxu0 0
    %1240 = vmatpush1.bf16.msra.mxu0 0
    %1241 = vmatprep.subr.bf16.mxu0 0
    %1242 = vmatpush1.bf16.msra.mxu0 0
    %1243 = vmatprep.subr.bf16.mxu0 0
    %1244 = vmatpush1.bf16.msra.mxu0 0
    %1245 = vmatprep.subr.bf16.mxu0 0
    %1246 = vmatpush1.bf16.msra.mxu0 0
    %1247 = vmatprep.subr.bf16.mxu0 0
    %1248 = vmatpush1.bf16.msra.mxu0 0
    %1249 = vmatprep.mubr.bf16.mxu0 0
    %1250 = vmatmul.mubr.bf16.gmra.mrb[0].mxu0 %v1215
    %v1251 = vpop.f32.mrb[0].mxu0
    %v1252 = vadd.f32 0.0, %v1251
    %v1253 = vpop.f32.mrb[0].mxu0
    %v1254 = vadd.f32 0.0, %v1253
    %v1255 = vpop.f32.mrb[0].mxu0
    %v1256 = vpop.f32.mrb[0].mxu0
    %1257 = vdwg.mxu0
    %v1258 = vmul.f32 %v1000, %v1252
    %v1259 = vmul.f32 %v997, %v1254
    %v1260 = vpack.c.bf16 %v1258, %v1258
    %v1261 = vpack.c.bf16 %v1259, %v1259
    %v1264 = vcombine.low %v1260, %v1261
    %v1266 = vunpack.c.l.s4 1966171168
    %v1267 = vunpack.c.0.s8 %v1266
    %v1268 = vlaneseq
    %v1269 = vshrl.u32 %v1268, 7
    %v1270 = vsub.s32 %v1267, %v1269
    %v1271 = vrot.slane %v1264, %v1270
    %v1273 = vunpack.c.l.s4 1966171168
    %v1274 = vunpack.c.0.s8 %v1273
    %v1275 = vlaneseq
    %v1276 = vshrl.u32 %v1275, 7
    %v1277 = vsub.s32 %v1274, %v1276
    %v1278 = vrot.slane %v1271, %v1277
    %v1279 = vunpack.i.l.s16 %v1278
    %v1280 = vunpack.i.h.s16 %v1278
    %v1281 = vpack.i.b16 %v1279, %v1279
    %v1282 = vpack.i.b16 %v1280, %v1280
    %v1283 = vlaneseq
    %v1284 = vshrl.u32 %v1283, 7
    %v1285 = vsub.s32 0, %v1284
    %v1286 = vrot.slane %v1281, %v1285
    %v1287 = vlaneseq
    %v1288 = vshrl.u32 %v1287, 7
    %v1289 = vsub.s32 1, %v1288
    %v1290 = vrot.slane %v1281, %v1289
    %v1291 = vlaneseq
    %v1292 = vshrl.u32 %v1291, 7
    %v1293 = vsub.s32 0, %v1292
    %v1294 = vrot.slane %v1282, %v1293
    %v1295 = vlaneseq
    %v1296 = vshrl.u32 %v1295, 7
    %v1297 = vsub.s32 1, %v1296
    %v1298 = vrot.slane %v1282, %v1297
    %v1300 = vpack.i.b16 %v1286, %v1286
    %v1302 = vlaneseq
    %v1303 = vshrl.u32 %v1302, 7
    %v1304 = vsub.s32 0, %v1303
    %v1305 = vrot.slane %v1300, %v1304
    %v1307 = vpack.i.b16 %v1290, %v1290
    %v1309 = vlaneseq
    %v1310 = vshrl.u32 %v1309, 7
    %v1311 = vsub.s32 0, %v1310
    %v1312 = vrot.slane %v1307, %v1311
    %v1314 = vpack.i.b16 %v1294, %v1294
    %v1316 = vlaneseq
    %v1317 = vshrl.u32 %v1316, 7
    %v1318 = vsub.s32 0, %v1317
    %v1319 = vrot.slane %v1314, %v1318
    %v1321 = vpack.i.b16 %v1298, %v1298
    %v1323 = vlaneseq
    %v1324 = vshrl.u32 %v1323, 7
    %v1325 = vsub.s32 0, %v1324
    %v1326 = vrot.slane %v1321, %v1325
    %v1327 = vmul.bf16 %v1305, %v1206
    %v1328 = vmul.bf16 %v1312, %v1207
    %v1329 = vmul.bf16 %v1305, %v1208
    %v1330 = vmul.bf16 %v1312, %v1209
    %v1331 = vmul.bf16 %v1319, %v1206
    %v1332 = vmul.bf16 %v1326, %v1207
    %v1333 = vmul.bf16 %v1319, %v1208
    %v1334 = vmul.bf16 %v1326, %v1209
    %v1335 = vld [vmem:[%s11] sm:$0xff]
    %v1336 = vld [vmem:[%s11 + $0x8] sm:$0xff]
    %v1337 = vld [vmem:[%s11 + $0x10] sm:$0xff]
    %v1338 = vld [vmem:[%s11 + $0x18] sm:$0xff]
    %v1339 = vld [vmem:[%s11 + $0x20] sm:$0xff]
    %v1340 = vld [vmem:[%s11 + $0x28] sm:$0xff]
    %v1341 = vld [vmem:[%s11 + $0x30] sm:$0xff]
    %v1342 = vld [vmem:[%s11 + $0x38] sm:$0xff]
    %v1343 = vld [vmem:[%s11 + $0x40] sm:$0xff]
    %v1344 = vld [vmem:[%s11 + $0x48] sm:$0xff]
    %v1345 = vld [vmem:[%s11 + $0x50] sm:$0xff]
    %v1346 = vld [vmem:[%s11 + $0x58] sm:$0xff]
    %v1347 = vld [vmem:[%s11 + $0x60] sm:$0xff]
    %v1348 = vld [vmem:[%s11 + $0x68] sm:$0xff]
    %v1349 = vld [vmem:[%s11 + $0x70] sm:$0xff]
    %v1350 = vld [vmem:[%s11 + $0x78] sm:$0xff]
    %v1351 = vld [vmem:[%s11 + $0x80] sm:$0xff]
    %v1352 = vld [vmem:[%s11 + $0x88] sm:$0xff]
    %v1353 = vld [vmem:[%s11 + $0x90] sm:$0xff]
    %v1354 = vld [vmem:[%s11 + $0x98] sm:$0xff]
    %v1355 = vld [vmem:[%s11 + $0xa0] sm:$0xff]
    %v1356 = vld [vmem:[%s11 + $0xa8] sm:$0xff]
    %v1357 = vld [vmem:[%s11 + $0xb0] sm:$0xff]
    %v1358 = vld [vmem:[%s11 + $0xb8] sm:$0xff]
    %v1359 = vld [vmem:[%s11 + $0xc0] sm:$0xff]
    %v1360 = vld [vmem:[%s11 + $0xc8] sm:$0xff]
    %v1361 = vld [vmem:[%s11 + $0xd0] sm:$0xff]
    %v1362 = vld [vmem:[%s11 + $0xd8] sm:$0xff]
    %v1363 = vld [vmem:[%s11 + $0xe0] sm:$0xff]
    %v1364 = vld [vmem:[%s11 + $0xe8] sm:$0xff]
    %v1365 = vld [vmem:[%s11 + $0xf0] sm:$0xff]
    %v1366 = vld [vmem:[%s11 + $0xf8] sm:$0xff]
    %v1367 = vld [vmem:[%s11 + $0x100] sm:$0xff]
    %v1368 = vld [vmem:[%s11 + $0x108] sm:$0xff]
    %v1369 = vld [vmem:[%s11 + $0x110] sm:$0xff]
    %v1370 = vld [vmem:[%s11 + $0x118] sm:$0xff]
    %v1371 = vld [vmem:[%s11 + $0x120] sm:$0xff]
    %v1372 = vld [vmem:[%s11 + $0x128] sm:$0xff]
    %v1373 = vld [vmem:[%s11 + $0x130] sm:$0xff]
    %v1374 = vld [vmem:[%s11 + $0x138] sm:$0xff]
    %v1375 = vld [vmem:[%s11 + $0x140] sm:$0xff]
    %v1376 = vld [vmem:[%s11 + $0x148] sm:$0xff]
    %v1377 = vld [vmem:[%s11 + $0x150] sm:$0xff]
    %v1378 = vld [vmem:[%s11 + $0x158] sm:$0xff]
    %v1379 = vld [vmem:[%s11 + $0x160] sm:$0xff]
    %v1380 = vld [vmem:[%s11 + $0x168] sm:$0xff]
    %v1381 = vld [vmem:[%s11 + $0x170] sm:$0xff]
    %v1382 = vld [vmem:[%s11 + $0x178] sm:$0xff]
    %v1383 = vld [vmem:[%s11 + $0x180] sm:$0xff]
    %v1384 = vld [vmem:[%s11 + $0x188] sm:$0xff]
    %v1385 = vld [vmem:[%s11 + $0x190] sm:$0xff]
    %v1386 = vld [vmem:[%s11 + $0x198] sm:$0xff]
    %v1387 = vld [vmem:[%s11 + $0x1a0] sm:$0xff]
    %v1388 = vld [vmem:[%s11 + $0x1a8] sm:$0xff]
    %v1389 = vld [vmem:[%s11 + $0x1b0] sm:$0xff]
    %v1390 = vld [vmem:[%s11 + $0x1b8] sm:$0xff]
    %v1391 = vld [vmem:[%s11 + $0x1c0] sm:$0xff]
    %v1392 = vld [vmem:[%s11 + $0x1c8] sm:$0xff]
    %v1393 = vld [vmem:[%s11 + $0x1d0] sm:$0xff]
    %v1394 = vld [vmem:[%s11 + $0x1d8] sm:$0xff]
    %v1395 = vld [vmem:[%s11 + $0x1e0] sm:$0xff]
    %v1396 = vld [vmem:[%s11 + $0x1e8] sm:$0xff]
    %v1397 = vld [vmem:[%s11 + $0x1f0] sm:$0xff]
    %v1398 = vld [vmem:[%s11 + $0x1f8] sm:$0xff]
    %v1463 = vunpack.c.l.b16 %v1335
    %v1464 = vunpack.c.h.b16 %v1335
    %v1465 = vunpack.c.l.b16 %v1336
    %v1466 = vunpack.c.h.b16 %v1336
    %v1467 = vunpack.c.l.b16 %v1337
    %v1468 = vunpack.c.h.b16 %v1337
    %v1469 = vunpack.c.l.b16 %v1338
    %v1470 = vunpack.c.h.b16 %v1338
    %v1471 = vunpack.c.l.b16 %v1339
    %v1472 = vunpack.c.h.b16 %v1339
    %v1473 = vunpack.c.l.b16 %v1340
    %v1474 = vunpack.c.h.b16 %v1340
    %v1475 = vunpack.c.l.b16 %v1341
    %v1476 = vunpack.c.h.b16 %v1341
    %v1477 = vunpack.c.l.b16 %v1342
    %v1478 = vunpack.c.h.b16 %v1342
    %v1479 = vunpack.c.l.b16 %v1343
    %v1480 = vunpack.c.h.b16 %v1343
    %v1481 = vunpack.c.l.b16 %v1344
    %v1482 = vunpack.c.h.b16 %v1344
    %v1483 = vunpack.c.l.b16 %v1345
    %v1484 = vunpack.c.h.b16 %v1345
    %v1485 = vunpack.c.l.b16 %v1346
    %v1486 = vunpack.c.h.b16 %v1346
    %v1487 = vunpack.c.l.b16 %v1347
    %v1488 = vunpack.c.h.b16 %v1347
    %v1489 = vunpack.c.l.b16 %v1348
    %v1490 = vunpack.c.h.b16 %v1348
    %v1491 = vunpack.c.l.b16 %v1349
    %v1492 = vunpack.c.h.b16 %v1349
    %v1493 = vunpack.c.l.b16 %v1350
    %v1494 = vunpack.c.h.b16 %v1350
    %v1495 = vunpack.c.l.b16 %v1351
    %v1496 = vunpack.c.h.b16 %v1351
    %v1497 = vunpack.c.l.b16 %v1352
    %v1498 = vunpack.c.h.b16 %v1352
    %v1499 = vunpack.c.l.b16 %v1353
    %v1500 = vunpack.c.h.b16 %v1353
    %v1501 = vunpack.c.l.b16 %v1354
    %v1502 = vunpack.c.h.b16 %v1354
    %v1503 = vunpack.c.l.b16 %v1355
    %v1504 = vunpack.c.h.b16 %v1355
    %v1505 = vunpack.c.l.b16 %v1356
    %v1506 = vunpack.c.h.b16 %v1356
    %v1507 = vunpack.c.l.b16 %v1357
    %v1508 = vunpack.c.h.b16 %v1357
    %v1509 = vunpack.c.l.b16 %v1358
    %v1510 = vunpack.c.h.b16 %v1358
    %v1511 = vunpack.c.l.b16 %v1359
    %v1512 = vunpack.c.h.b16 %v1359
    %v1513 = vunpack.c.l.b16 %v1360
    %v1514 = vunpack.c.h.b16 %v1360
    %v1515 = vunpack.c.l.b16 %v1361
    %v1516 = vunpack.c.h.b16 %v1361
    %v1517 = vunpack.c.l.b16 %v1362
    %v1518 = vunpack.c.h.b16 %v1362
    %v1519 = vunpack.c.l.b16 %v1363
    %v1520 = vunpack.c.h.b16 %v1363
    %v1521 = vunpack.c.l.b16 %v1364
    %v1522 = vunpack.c.h.b16 %v1364
    %v1523 = vunpack.c.l.b16 %v1365
    %v1524 = vunpack.c.h.b16 %v1365
    %v1525 = vunpack.c.l.b16 %v1366
    %v1526 = vunpack.c.h.b16 %v1366
    %v1527 = vunpack.c.l.b16 %v1367
    %v1528 = vunpack.c.h.b16 %v1367
    %v1529 = vunpack.c.l.b16 %v1368
    %v1530 = vunpack.c.h.b16 %v1368
    %v1531 = vunpack.c.l.b16 %v1369
    %v1532 = vunpack.c.h.b16 %v1369
    %v1533 = vunpack.c.l.b16 %v1370
    %v1534 = vunpack.c.h.b16 %v1370
    %v1535 = vunpack.c.l.b16 %v1371
    %v1536 = vunpack.c.h.b16 %v1371
    %v1537 = vunpack.c.l.b16 %v1372
    %v1538 = vunpack.c.h.b16 %v1372
    %v1539 = vunpack.c.l.b16 %v1373
    %v1540 = vunpack.c.h.b16 %v1373
    %v1541 = vunpack.c.l.b16 %v1374
    %v1542 = vunpack.c.h.b16 %v1374
    %v1543 = vunpack.c.l.b16 %v1375
    %v1544 = vunpack.c.h.b16 %v1375
    %v1545 = vunpack.c.l.b16 %v1376
    %v1546 = vunpack.c.h.b16 %v1376
    %v1547 = vunpack.c.l.b16 %v1377
    %v1548 = vunpack.c.h.b16 %v1377
    %v1549 = vunpack.c.l.b16 %v1378
    %v1550 = vunpack.c.h.b16 %v1378
    %v1551 = vunpack.c.l.b16 %v1379
    %v1552 = vunpack.c.h.b16 %v1379
    %v1553 = vunpack.c.l.b16 %v1380
    %v1554 = vunpack.c.h.b16 %v1380
    %v1555 = vunpack.c.l.b16 %v1381
    %v1556 = vunpack.c.h.b16 %v1381
    %v1557 = vunpack.c.l.b16 %v1382
    %v1558 = vunpack.c.h.b16 %v1382
    %v1559 = vunpack.c.l.b16 %v1383
    %v1560 = vunpack.c.h.b16 %v1383
    %v1561 = vunpack.c.l.b16 %v1384
    %v1562 = vunpack.c.h.b16 %v1384
    %v1563 = vunpack.c.l.b16 %v1385
    %v1564 = vunpack.c.h.b16 %v1385
    %v1565 = vunpack.c.l.b16 %v1386
    %v1566 = vunpack.c.h.b16 %v1386
    %v1567 = vunpack.c.l.b16 %v1387
    %v1568 = vunpack.c.h.b16 %v1387
    %v1569 = vunpack.c.l.b16 %v1388
    %v1570 = vunpack.c.h.b16 %v1388
    %v1571 = vunpack.c.l.b16 %v1389
    %v1572 = vunpack.c.h.b16 %v1389
    %v1573 = vunpack.c.l.b16 %v1390
    %v1574 = vunpack.c.h.b16 %v1390
    %v1575 = vunpack.c.l.b16 %v1391
    %v1576 = vunpack.c.h.b16 %v1391
    %v1577 = vunpack.c.l.b16 %v1392
    %v1578 = vunpack.c.h.b16 %v1392
    %v1579 = vunpack.c.l.b16 %v1393
    %v1580 = vunpack.c.h.b16 %v1393
    %v1581 = vunpack.c.l.b16 %v1394
    %v1582 = vunpack.c.h.b16 %v1394
    %v1583 = vunpack.c.l.b16 %v1395
    %v1584 = vunpack.c.h.b16 %v1395
    %v1585 = vunpack.c.l.b16 %v1396
    %v1586 = vunpack.c.h.b16 %v1396
    %v1587 = vunpack.c.l.b16 %v1397
    %v1588 = vunpack.c.h.b16 %v1397
    %v1589 = vunpack.c.l.b16 %v1398
    %v1590 = vunpack.c.h.b16 %v1398
    %v1591 = vpack.c.b16 %v1467, %v1463
    %v1592 = vpack.c.b16 %v1468, %v1464
    %v1593 = vpack.c.b16 %v1469, %v1465
    %v1594 = vpack.c.b16 %v1470, %v1466
    %v1595 = vpack.c.b16 %v1475, %v1471
    %v1596 = vpack.c.b16 %v1476, %v1472
    %v1597 = vpack.c.b16 %v1477, %v1473
    %v1598 = vpack.c.b16 %v1478, %v1474
    %v1599 = vpack.c.b16 %v1483, %v1479
    %v1600 = vpack.c.b16 %v1484, %v1480
    %v1601 = vpack.c.b16 %v1485, %v1481
    %v1602 = vpack.c.b16 %v1486, %v1482
    %v1603 = vpack.c.b16 %v1491, %v1487
    %v1604 = vpack.c.b16 %v1492, %v1488
    %v1605 = vpack.c.b16 %v1493, %v1489
    %v1606 = vpack.c.b16 %v1494, %v1490
    %v1607 = vpack.c.b16 %v1499, %v1495
    %v1608 = vpack.c.b16 %v1500, %v1496
    %v1609 = vpack.c.b16 %v1501, %v1497
    %v1610 = vpack.c.b16 %v1502, %v1498
    %v1611 = vpack.c.b16 %v1507, %v1503
    %v1612 = vpack.c.b16 %v1508, %v1504
    %v1613 = vpack.c.b16 %v1509, %v1505
    %v1614 = vpack.c.b16 %v1510, %v1506
    %v1615 = vpack.c.b16 %v1515, %v1511
    %v1616 = vpack.c.b16 %v1516, %v1512
    %v1617 = vpack.c.b16 %v1517, %v1513
    %v1618 = vpack.c.b16 %v1518, %v1514
    %v1619 = vpack.c.b16 %v1523, %v1519
    %v1620 = vpack.c.b16 %v1524, %v1520
    %v1621 = vpack.c.b16 %v1525, %v1521
    %v1622 = vpack.c.b16 %v1526, %v1522
    %v1623 = vpack.c.b16 %v1531, %v1527
    %v1624 = vpack.c.b16 %v1532, %v1528
    %v1625 = vpack.c.b16 %v1533, %v1529
    %v1626 = vpack.c.b16 %v1534, %v1530
    %v1627 = vpack.c.b16 %v1539, %v1535
    %v1628 = vpack.c.b16 %v1540, %v1536
    %v1629 = vpack.c.b16 %v1541, %v1537
    %v1630 = vpack.c.b16 %v1542, %v1538
    %v1631 = vpack.c.b16 %v1547, %v1543
    %v1632 = vpack.c.b16 %v1548, %v1544
    %v1633 = vpack.c.b16 %v1549, %v1545
    %v1634 = vpack.c.b16 %v1550, %v1546
    %v1635 = vpack.c.b16 %v1555, %v1551
    %v1636 = vpack.c.b16 %v1556, %v1552
    %v1637 = vpack.c.b16 %v1557, %v1553
    %v1638 = vpack.c.b16 %v1558, %v1554
    %v1639 = vpack.c.b16 %v1563, %v1559
    %v1640 = vpack.c.b16 %v1564, %v1560
    %v1641 = vpack.c.b16 %v1565, %v1561
    %v1642 = vpack.c.b16 %v1566, %v1562
    %v1643 = vpack.c.b16 %v1571, %v1567
    %v1644 = vpack.c.b16 %v1572, %v1568
    %v1645 = vpack.c.b16 %v1573, %v1569
    %v1646 = vpack.c.b16 %v1574, %v1570
    %v1647 = vpack.c.b16 %v1579, %v1575
    %v1648 = vpack.c.b16 %v1580, %v1576
    %v1649 = vpack.c.b16 %v1581, %v1577
    %v1650 = vpack.c.b16 %v1582, %v1578
    %v1651 = vpack.c.b16 %v1587, %v1583
    %v1652 = vpack.c.b16 %v1588, %v1584
    %v1653 = vpack.c.b16 %v1589, %v1585
    %v1654 = vpack.c.b16 %v1590, %v1586
    %1719 = vmatprep.subr.bf16.mxu0 %v1592
    %1720 = vmatpush1.bf16.msra.mxu0 %v1591
    %1721 = vmatprep.subr.bf16.mxu0 %v1596
    %1722 = vmatpush1.bf16.msra.mxu0 %v1595
    %1723 = vmatprep.subr.bf16.mxu0 %v1600
    %1724 = vmatpush1.bf16.msra.mxu0 %v1599
    %1725 = vmatprep.subr.bf16.mxu0 %v1604
    %1726 = vmatpush1.bf16.msra.mxu0 %v1603
    %1727 = vmatprep.subr.bf16.mxu0 %v1608
    %1728 = vmatpush1.bf16.msra.mxu0 %v1607
    %1729 = vmatprep.subr.bf16.mxu0 %v1612
    %1730 = vmatpush1.bf16.msra.mxu0 %v1611
    %1731 = vmatprep.subr.bf16.mxu0 %v1616
    %1732 = vmatpush1.bf16.msra.mxu0 %v1615
    %1733 = vmatprep.subr.bf16.mxu0 %v1620
    %1734 = vmatpush1.bf16.msra.mxu0 %v1619
    %1735 = vmatprep.subr.bf16.mxu0 %v1624
    %1736 = vmatpush1.bf16.msra.mxu0 %v1623
    %1737 = vmatprep.subr.bf16.mxu0 %v1628
    %1738 = vmatpush1.bf16.msra.mxu0 %v1627
    %1739 = vmatprep.subr.bf16.mxu0 %v1632
    %1740 = vmatpush1.bf16.msra.mxu0 %v1631
    %1741 = vmatprep.subr.bf16.mxu0 %v1636
    %1742 = vmatpush1.bf16.msra.mxu0 %v1635
    %1743 = vmatprep.subr.bf16.mxu0 %v1640
    %1744 = vmatpush1.bf16.msra.mxu0 %v1639
    %1745 = vmatprep.subr.bf16.mxu0 %v1644
    %1746 = vmatpush1.bf16.msra.mxu0 %v1643
    %1747 = vmatprep.subr.bf16.mxu0 %v1648
    %1748 = vmatpush1.bf16.msra.mxu0 %v1647
    %1749 = vmatprep.subr.bf16.mxu0 %v1652
    %1750 = vmatpush1.bf16.msra.mxu0 %v1651
    %1751 = vmatprep.mubr.bf16.mxu0 %v1328
    %1752 = vmatmul.mubr.bf16.gmra.mrb[0].mxu0 %v1327
    %v1753 = vpop.f32.mrb[0].mxu0
    %v1754 = vadd.f32 0.0, %v1753
    %v1755 = vpop.f32.mrb[0].mxu0
    %v1756 = vadd.f32 0.0, %v1755
    %v1757 = vpop.f32.mrb[0].mxu0
    %v1758 = vadd.f32 0.0, %v1757
    %v1759 = vpop.f32.mrb[0].mxu0
    %v1760 = vadd.f32 0.0, %v1759
    %1761 = vmatprep.mubr.bf16.mxu0 %v1330
    %1762 = vmatmul.mubr.bf16.gmra.mrb[0].mxu0 %v1329
    %v1763 = vpop.f32.mrb[0].mxu0
    %v1764 = vadd.f32 0.0, %v1763
    %v1765 = vpop.f32.mrb[0].mxu0
    %v1766 = vadd.f32 0.0, %v1765
    %v1767 = vpop.f32.mrb[0].mxu0
    %v1768 = vadd.f32 0.0, %v1767
    %v1769 = vpop.f32.mrb[0].mxu0
    %v1770 = vadd.f32 0.0, %v1769
    %1771 = vmatprep.mubr.bf16.mxu0 %v1332
    %1772 = vmatmul.mubr.bf16.gmra.mrb[0].mxu0 %v1331
    %v1773 = vpop.f32.mrb[0].mxu0
    %v1774 = vadd.f32 0.0, %v1773
    %v1775 = vpop.f32.mrb[0].mxu0
    %v1776 = vadd.f32 0.0, %v1775
    %v1777 = vpop.f32.mrb[0].mxu0
    %v1778 = vadd.f32 0.0, %v1777
    %v1779 = vpop.f32.mrb[0].mxu0
    %v1780 = vadd.f32 0.0, %v1779
    %1781 = vmatprep.mubr.bf16.mxu0 %v1334
    %1782 = vmatmul.mubr.bf16.gmra.mrb[0].mxu0 %v1333
    %v1783 = vpop.f32.mrb[0].mxu0
    %v1784 = vadd.f32 0.0, %v1783
    %v1785 = vpop.f32.mrb[0].mxu0
    %v1786 = vadd.f32 0.0, %v1785
    %v1787 = vpop.f32.mrb[0].mxu0
    %v1788 = vadd.f32 0.0, %v1787
    %v1789 = vpop.f32.mrb[0].mxu0
    %v1790 = vadd.f32 0.0, %v1789
    %1791 = vdwg.mxu0
    %1792 = vmatprep.subr.bf16.mxu0 %v1594
    %1793 = vmatpush1.bf16.msra.mxu0 %v1593
    %1794 = vmatprep.subr.bf16.mxu0 %v1598
    %1795 = vmatpush1.bf16.msra.mxu0 %v1597
    %1796 = vmatprep.subr.bf16.mxu0 %v1602
    %1797 = vmatpush1.bf16.msra.mxu0 %v1601
    %1798 = vmatprep.subr.bf16.mxu0 %v1606
    %1799 = vmatpush1.bf16.msra.mxu0 %v1605
    %1800 = vmatprep.subr.bf16.mxu0 %v1610
    %1801 = vmatpush1.bf16.msra.mxu0 %v1609
    %1802 = vmatprep.subr.bf16.mxu0 %v1614
    %1803 = vmatpush1.bf16.msra.mxu0 %v1613
    %1804 = vmatprep.subr.bf16.mxu0 %v1618
    %1805 = vmatpush1.bf16.msra.mxu0 %v1617
    %1806 = vmatprep.subr.bf16.mxu0 %v1622
    %1807 = vmatpush1.bf16.msra.mxu0 %v1621
    %1808 = vmatprep.subr.bf16.mxu0 %v1626
    %1809 = vmatpush1.bf16.msra.mxu0 %v1625
    %1810 = vmatprep.subr.bf16.mxu0 %v1630
    %1811 = vmatpush1.bf16.msra.mxu0 %v1629
    %1812 = vmatprep.subr.bf16.mxu0 %v1634
    %1813 = vmatpush1.bf16.msra.mxu0 %v1633
    %1814 = vmatprep.subr.bf16.mxu0 %v1638
    %1815 = vmatpush1.bf16.msra.mxu0 %v1637
    %1816 = vmatprep.subr.bf16.mxu0 %v1642
    %1817 = vmatpush1.bf16.msra.mxu0 %v1641
    %1818 = vmatprep.subr.bf16.mxu0 %v1646
    %1819 = vmatpush1.bf16.msra.mxu0 %v1645
    %1820 = vmatprep.subr.bf16.mxu0 %v1650
    %1821 = vmatpush1.bf16.msra.mxu0 %v1649
    %1822 = vmatprep.subr.bf16.mxu0 %v1654
    %1823 = vmatpush1.bf16.msra.mxu0 %v1653
    %1824 = vmatprep.mubr.bf16.mxu0 %v1328
    %1825 = vmatmul.mubr.bf16.gmra.mrb[0].mxu0 %v1327
    %v1826 = vpop.f32.mrb[0].mxu0
    %v1827 = vadd.f32 0.0, %v1826
    %v1828 = vpop.f32.mrb[0].mxu0
    %v1829 = vadd.f32 0.0, %v1828
    %v1830 = vpop.f32.mrb[0].mxu0
    %v1831 = vadd.f32 0.0, %v1830
    %v1832 = vpop.f32.mrb[0].mxu0
    %v1833 = vadd.f32 0.0, %v1832
    %1834 = vmatprep.mubr.bf16.mxu0 %v1330
    %1835 = vmatmul.mubr.bf16.gmra.mrb[0].mxu0 %v1329
    %v1836 = vpop.f32.mrb[0].mxu0
    %v1837 = vadd.f32 0.0, %v1836
    %v1838 = vpop.f32.mrb[0].mxu0
    %v1839 = vadd.f32 0.0, %v1838
    %v1840 = vpop.f32.mrb[0].mxu0
    %v1841 = vadd.f32 0.0, %v1840
    %v1842 = vpop.f32.mrb[0].mxu0
    %v1843 = vadd.f32 0.0, %v1842
    %1844 = vmatprep.mubr.bf16.mxu0 %v1332
    %1845 = vmatmul.mubr.bf16.gmra.mrb[0].mxu0 %v1331
    %v1846 = vpop.f32.mrb[0].mxu0
    %v1847 = vadd.f32 0.0, %v1846
    %v1848 = vpop.f32.mrb[0].mxu0
    %v1849 = vadd.f32 0.0, %v1848
    %v1850 = vpop.f32.mrb[0].mxu0
    %v1851 = vadd.f32 0.0, %v1850
    %v1852 = vpop.f32.mrb[0].mxu0
    %v1853 = vadd.f32 0.0, %v1852
    %1854 = vmatprep.mubr.bf16.mxu0 %v1334
    %1855 = vmatmul.mubr.bf16.gmra.mrb[0].mxu0 %v1333
    %v1856 = vpop.f32.mrb[0].mxu0
    %v1857 = vadd.f32 0.0, %v1856
    %v1858 = vpop.f32.mrb[0].mxu0
    %v1859 = vadd.f32 0.0, %v1858
    %v1860 = vpop.f32.mrb[0].mxu0
    %v1861 = vadd.f32 0.0, %v1860
    %v1862 = vpop.f32.mrb[0].mxu0
    %v1863 = vadd.f32 0.0, %v1862
    %1864 = vdwg.mxu0
    %v1865 = vadd.f32 %v1754, %v1758
    %v1866 = vadd.f32 %v1865, %v1764
    %v1867 = vadd.f32 %v1866, %v1768
    %v1868 = vrot.slane %v1867, 4
    %v1869 = vadd.f32 %v1867, %v1868
    %v1870 = vrot.slane %v1869, 2
    %v1871 = vadd.f32 %v1869, %v1870
    %v1872 = vrot.slane %v1871, 1
    %v1873 = vadd.f32 %v1871, %v1872
    %v1874 = vadd.f32 %v1756, %v1760
    %v1875 = vadd.f32 %v1874, %v1766
    %v1876 = vadd.f32 %v1875, %v1770
    %v1877 = vrot.slane %v1876, 4
    %v1878 = vadd.f32 %v1876, %v1877
    %v1879 = vrot.slane %v1878, 2
    %v1880 = vadd.f32 %v1878, %v1879
    %v1881 = vrot.slane %v1880, 1
    %v1882 = vadd.f32 %v1880, %v1881
    %v1883 = vadd.f32 %v1827, %v1831
    %v1884 = vadd.f32 %v1883, %v1837
    %v1885 = vadd.f32 %v1884, %v1841
    %v1886 = vrot.slane %v1885, 4
    %v1887 = vadd.f32 %v1885, %v1886
    %v1888 = vrot.slane %v1887, 2
    %v1889 = vadd.f32 %v1887, %v1888
    %v1890 = vrot.slane %v1889, 1
    %v1891 = vadd.f32 %v1889, %v1890
    %v1892 = vadd.f32 %v1829, %v1833
    %v1893 = vadd.f32 %v1892, %v1839
    %v1894 = vadd.f32 %v1893, %v1843
    %v1895 = vrot.slane %v1894, 4
    %v1896 = vadd.f32 %v1894, %v1895
    %v1897 = vrot.slane %v1896, 2
    %v1898 = vadd.f32 %v1896, %v1897
    %v1899 = vrot.slane %v1898, 1
    %v1900 = vadd.f32 %v1898, %v1899
    %v1901 = vadd.f32 %v1774, %v1778
    %v1902 = vadd.f32 %v1901, %v1784
    %v1903 = vadd.f32 %v1902, %v1788
    %v1904 = vrot.slane %v1903, 4
    %v1905 = vadd.f32 %v1903, %v1904
    %v1906 = vrot.slane %v1905, 2
    %v1907 = vadd.f32 %v1905, %v1906
    %v1908 = vrot.slane %v1907, 1
    %v1909 = vadd.f32 %v1907, %v1908
    %v1910 = vadd.f32 %v1776, %v1780
    %v1911 = vadd.f32 %v1910, %v1786
    %v1912 = vadd.f32 %v1911, %v1790
    %v1913 = vrot.slane %v1912, 4
    %v1914 = vadd.f32 %v1912, %v1913
    %v1915 = vrot.slane %v1914, 2
    %v1916 = vadd.f32 %v1914, %v1915
    %v1917 = vrot.slane %v1916, 1
    %v1918 = vadd.f32 %v1916, %v1917
    %v1919 = vadd.f32 %v1847, %v1851
    %v1920 = vadd.f32 %v1919, %v1857
    %v1921 = vadd.f32 %v1920, %v1861
    %v1922 = vrot.slane %v1921, 4
    %v1923 = vadd.f32 %v1921, %v1922
    %v1924 = vrot.slane %v1923, 2
    %v1925 = vadd.f32 %v1923, %v1924
    %v1926 = vrot.slane %v1925, 1
    %v1927 = vadd.f32 %v1925, %v1926
    %v1928 = vadd.f32 %v1849, %v1853
    %v1929 = vadd.f32 %v1928, %v1859
    %v1930 = vadd.f32 %v1929, %v1863
    %v1931 = vrot.slane %v1930, 4
    %v1932 = vadd.f32 %v1930, %v1931
    %v1933 = vrot.slane %v1932, 2
    %v1934 = vadd.f32 %v1932, %v1933
    %v1935 = vrot.slane %v1934, 1
    %v1936 = vadd.f32 %v1934, %v1935
    %v1937 = vmul.f32 %v1754, %v1873
    %v1938 = vmul.f32 %v1756, %v1882
    %v1939 = vmul.f32 %v1827, %v1891
    %v1940 = vmul.f32 %v1829, %v1900
    %v1941 = vmul.f32 %v1758, %v1873
    %v1942 = vmul.f32 %v1760, %v1882
    %v1943 = vmul.f32 %v1831, %v1891
    %v1944 = vmul.f32 %v1833, %v1900
    %v1945 = vmul.f32 %v1764, %v1873
    %v1946 = vmul.f32 %v1766, %v1882
    %v1947 = vmul.f32 %v1837, %v1891
    %v1948 = vmul.f32 %v1839, %v1900
    %v1949 = vmul.f32 %v1768, %v1873
    %v1950 = vmul.f32 %v1770, %v1882
    %v1951 = vmul.f32 %v1841, %v1891
    %v1952 = vmul.f32 %v1843, %v1900
    %v1953 = vmul.f32 %v1774, %v1909
    %v1954 = vmul.f32 %v1776, %v1918
    %v1955 = vmul.f32 %v1847, %v1927
    %v1956 = vmul.f32 %v1849, %v1936
    %v1957 = vmul.f32 %v1778, %v1909
    %v1958 = vmul.f32 %v1780, %v1918
    %v1959 = vmul.f32 %v1851, %v1927
    %v1960 = vmul.f32 %v1853, %v1936
    %v1961 = vmul.f32 %v1784, %v1909
    %v1962 = vmul.f32 %v1786, %v1918
    %v1963 = vmul.f32 %v1857, %v1927
    %v1964 = vmul.f32 %v1859, %v1936
    %v1965 = vmul.f32 %v1788, %v1909
    %v1966 = vmul.f32 %v1790, %v1918
    %v1967 = vmul.f32 %v1861, %v1927
    %v1968 = vmul.f32 %v1863, %v1936
    %v1969 = vpack.c.bf16 %v1941, %v1937
    %v1970 = vpack.c.bf16 %v1942, %v1938
    %v1971 = vpack.c.bf16 %v1943, %v1939
    %v1972 = vpack.c.bf16 %v1944, %v1940
    %v1973 = vpack.c.bf16 %v1949, %v1945
    %v1974 = vpack.c.bf16 %v1950, %v1946
    %v1975 = vpack.c.bf16 %v1951, %v1947
    %v1976 = vpack.c.bf16 %v1952, %v1948
    %v1977 = vpack.c.bf16 %v1957, %v1953
    %v1978 = vpack.c.bf16 %v1958, %v1954
    %v1979 = vpack.c.bf16 %v1959, %v1955
    %v1980 = vpack.c.bf16 %v1960, %v1956
    %v1981 = vpack.c.bf16 %v1965, %v1961
    %v1982 = vpack.c.bf16 %v1966, %v1962
    %v1983 = vpack.c.bf16 %v1967, %v1963
    %v1984 = vpack.c.bf16 %v1968, %v1964
    %v1985 = vld [vmem:[%s9] sm:$0xf]
    %v1986 = vld [vmem:[%s9 + $0x4] sm:$0xf]
    %v1987 = vld [vmem:[%s9 + $0x8] sm:$0xf]
    %v1988 = vld [vmem:[%s9 + $0xc] sm:$0xf]
    %v1989 = vld [vmem:[%s9 + $0x10] sm:$0xf]
    %v1990 = vld [vmem:[%s9 + $0x14] sm:$0xf]
    %v1991 = vld [vmem:[%s9 + $0x18] sm:$0xf]
    %v1992 = vld [vmem:[%s9 + $0x1c] sm:$0xf]
    %v1993 = vld [vmem:[%s9 + $0x20] sm:$0xf]
    %v1994 = vld [vmem:[%s9 + $0x24] sm:$0xf]
    %v1995 = vld [vmem:[%s9 + $0x28] sm:$0xf]
    %v1996 = vld [vmem:[%s9 + $0x2c] sm:$0xf]
    %v1997 = vld [vmem:[%s9 + $0x30] sm:$0xf]
    %v1998 = vld [vmem:[%s9 + $0x34] sm:$0xf]
    %v1999 = vld [vmem:[%s9 + $0x38] sm:$0xf]
    %v2000 = vld [vmem:[%s9 + $0x3c] sm:$0xf]
    %v2001 = vld [vmem:[%s9 + $0x40] sm:$0xf]
    %v2002 = vld [vmem:[%s9 + $0x44] sm:$0xf]
    %v2003 = vld [vmem:[%s9 + $0x48] sm:$0xf]
    %v2004 = vld [vmem:[%s9 + $0x4c] sm:$0xf]
    %v2005 = vld [vmem:[%s9 + $0x50] sm:$0xf]
    %v2006 = vld [vmem:[%s9 + $0x54] sm:$0xf]
    %v2007 = vld [vmem:[%s9 + $0x58] sm:$0xf]
    %v2008 = vld [vmem:[%s9 + $0x5c] sm:$0xf]
    %v2009 = vld [vmem:[%s9 + $0x60] sm:$0xf]
    %v2010 = vld [vmem:[%s9 + $0x64] sm:$0xf]
    %v2011 = vld [vmem:[%s9 + $0x68] sm:$0xf]
    %v2012 = vld [vmem:[%s9 + $0x6c] sm:$0xf]
    %v2013 = vld [vmem:[%s9 + $0x70] sm:$0xf]
    %v2014 = vld [vmem:[%s9 + $0x74] sm:$0xf]
    %v2015 = vld [vmem:[%s9 + $0x78] sm:$0xf]
    %v2016 = vld [vmem:[%s9 + $0x7c] sm:$0xf]
    %v2017 = vld [vmem:[%s9 + $0x80] sm:$0xf]
    %v2018 = vld [vmem:[%s9 + $0x84] sm:$0xf]
    %v2019 = vld [vmem:[%s9 + $0x88] sm:$0xf]
    %v2020 = vld [vmem:[%s9 + $0x8c] sm:$0xf]
    %v2021 = vld [vmem:[%s9 + $0x90] sm:$0xf]
    %v2022 = vld [vmem:[%s9 + $0x94] sm:$0xf]
    %v2023 = vld [vmem:[%s9 + $0x98] sm:$0xf]
    %v2024 = vld [vmem:[%s9 + $0x9c] sm:$0xf]
    %v2025 = vld [vmem:[%s9 + $0xa0] sm:$0xf]
    %v2026 = vld [vmem:[%s9 + $0xa4] sm:$0xf]
    %v2027 = vld [vmem:[%s9 + $0xa8] sm:$0xf]
    %v2028 = vld [vmem:[%s9 + $0xac] sm:$0xf]
    %v2029 = vld [vmem:[%s9 + $0xb0] sm:$0xf]
    %v2030 = vld [vmem:[%s9 + $0xb4] sm:$0xf]
    %v2031 = vld [vmem:[%s9 + $0xb8] sm:$0xf]
    %v2032 = vld [vmem:[%s9 + $0xbc] sm:$0xf]
    %v2033 = vld [vmem:[%s9 + $0xc0] sm:$0xf]
    %v2034 = vld [vmem:[%s9 + $0xc4] sm:$0xf]
    %v2035 = vld [vmem:[%s9 + $0xc8] sm:$0xf]
    %v2036 = vld [vmem:[%s9 + $0xcc] sm:$0xf]
    %v2037 = vld [vmem:[%s9 + $0xd0] sm:$0xf]
    %v2038 = vld [vmem:[%s9 + $0xd4] sm:$0xf]
    %v2039 = vld [vmem:[%s9 + $0xd8] sm:$0xf]
    %v2040 = vld [vmem:[%s9 + $0xdc] sm:$0xf]
    %v2041 = vld [vmem:[%s9 + $0xe0] sm:$0xf]
    %v2042 = vld [vmem:[%s9 + $0xe4] sm:$0xf]
    %v2043 = vld [vmem:[%s9 + $0xe8] sm:$0xf]
    %v2044 = vld [vmem:[%s9 + $0xec] sm:$0xf]
    %v2045 = vld [vmem:[%s9 + $0xf0] sm:$0xf]
    %v2046 = vld [vmem:[%s9 + $0xf4] sm:$0xf]
    %v2047 = vld [vmem:[%s9 + $0xf8] sm:$0xf]
    %v2048 = vld [vmem:[%s9 + $0xfc] sm:$0xf]
    %v2113 = vunpack.c.l.b16 %v1985
    %v2114 = vunpack.c.l.b16 %v1986
    %v2115 = vunpack.c.l.b16 %v1987
    %v2116 = vunpack.c.l.b16 %v1988
    %v2117 = vunpack.c.l.b16 %v1989
    %v2118 = vunpack.c.l.b16 %v1990
    %v2119 = vunpack.c.l.b16 %v1991
    %v2120 = vunpack.c.l.b16 %v1992
    %v2121 = vunpack.c.l.b16 %v1993
    %v2122 = vunpack.c.l.b16 %v1994
    %v2123 = vunpack.c.l.b16 %v1995
    %v2124 = vunpack.c.l.b16 %v1996
    %v2125 = vunpack.c.l.b16 %v1997
    %v2126 = vunpack.c.l.b16 %v1998
    %v2127 = vunpack.c.l.b16 %v1999
    %v2128 = vunpack.c.l.b16 %v2000
    %v2129 = vunpack.c.l.b16 %v2001
    %v2130 = vunpack.c.l.b16 %v2002
    %v2131 = vunpack.c.l.b16 %v2003
    %v2132 = vunpack.c.l.b16 %v2004
    %v2133 = vunpack.c.l.b16 %v2005
    %v2134 = vunpack.c.l.b16 %v2006
    %v2135 = vunpack.c.l.b16 %v2007
    %v2136 = vunpack.c.l.b16 %v2008
    %v2137 = vunpack.c.l.b16 %v2009
    %v2138 = vunpack.c.l.b16 %v2010
    %v2139 = vunpack.c.l.b16 %v2011
    %v2140 = vunpack.c.l.b16 %v2012
    %v2141 = vunpack.c.l.b16 %v2013
    %v2142 = vunpack.c.l.b16 %v2014
    %v2143 = vunpack.c.l.b16 %v2015
    %v2144 = vunpack.c.l.b16 %v2016
    %v2145 = vunpack.c.l.b16 %v2017
    %v2146 = vunpack.c.l.b16 %v2018
    %v2147 = vunpack.c.l.b16 %v2019
    %v2148 = vunpack.c.l.b16 %v2020
    %v2149 = vunpack.c.l.b16 %v2021
    %v2150 = vunpack.c.l.b16 %v2022
    %v2151 = vunpack.c.l.b16 %v2023
    %v2152 = vunpack.c.l.b16 %v2024
    %v2153 = vunpack.c.l.b16 %v2025
    %v2154 = vunpack.c.l.b16 %v2026
    %v2155 = vunpack.c.l.b16 %v2027
    %v2156 = vunpack.c.l.b16 %v2028
    %v2157 = vunpack.c.l.b16 %v2029
    %v2158 = vunpack.c.l.b16 %v2030
    %v2159 = vunpack.c.l.b16 %v2031
    %v2160 = vunpack.c.l.b16 %v2032
    %v2161 = vunpack.c.l.b16 %v2033
    %v2162 = vunpack.c.l.b16 %v2034
    %v2163 = vunpack.c.l.b16 %v2035
    %v2164 = vunpack.c.l.b16 %v2036
    %v2165 = vunpack.c.l.b16 %v2037
    %v2166 = vunpack.c.l.b16 %v2038
    %v2167 = vunpack.c.l.b16 %v2039
    %v2168 = vunpack.c.l.b16 %v2040
    %v2169 = vunpack.c.l.b16 %v2041
    %v2170 = vunpack.c.l.b16 %v2042
    %v2171 = vunpack.c.l.b16 %v2043
    %v2172 = vunpack.c.l.b16 %v2044
    %v2173 = vunpack.c.l.b16 %v2045
    %v2174 = vunpack.c.l.b16 %v2046
    %v2175 = vunpack.c.l.b16 %v2047
    %v2176 = vunpack.c.l.b16 %v2048
    %v2177 = vpack.c.b16 %v2114, %v2113
    %v2178 = vpack.c.b16 %v2116, %v2115
    %v2179 = vpack.c.b16 %v2118, %v2117
    %v2180 = vpack.c.b16 %v2120, %v2119
    %v2181 = vpack.c.b16 %v2122, %v2121
    %v2182 = vpack.c.b16 %v2124, %v2123
    %v2183 = vpack.c.b16 %v2126, %v2125
    %v2184 = vpack.c.b16 %v2128, %v2127
    %v2185 = vpack.c.b16 %v2130, %v2129
    %v2186 = vpack.c.b16 %v2132, %v2131
    %v2187 = vpack.c.b16 %v2134, %v2133
    %v2188 = vpack.c.b16 %v2136, %v2135
    %v2189 = vpack.c.b16 %v2138, %v2137
    %v2190 = vpack.c.b16 %v2140, %v2139
    %v2191 = vpack.c.b16 %v2142, %v2141
    %v2192 = vpack.c.b16 %v2144, %v2143
    %v2193 = vpack.c.b16 %v2146, %v2145
    %v2194 = vpack.c.b16 %v2148, %v2147
    %v2195 = vpack.c.b16 %v2150, %v2149
    %v2196 = vpack.c.b16 %v2152, %v2151
    %v2197 = vpack.c.b16 %v2154, %v2153
    %v2198 = vpack.c.b16 %v2156, %v2155
    %v2199 = vpack.c.b16 %v2158, %v2157
    %v2200 = vpack.c.b16 %v2160, %v2159
    %v2201 = vpack.c.b16 %v2162, %v2161
    %v2202 = vpack.c.b16 %v2164, %v2163
    %v2203 = vpack.c.b16 %v2166, %v2165
    %v2204 = vpack.c.b16 %v2168, %v2167
    %v2205 = vpack.c.b16 %v2170, %v2169
    %v2206 = vpack.c.b16 %v2172, %v2171
    %v2207 = vpack.c.b16 %v2174, %v2173
    %v2208 = vpack.c.b16 %v2176, %v2175
    %2241 = vmatprep.subr.bf16.mxu0 0
    %2242 = vmatpush1.bf16.msra.mxu0 %v2177
    %2243 = vmatprep.subr.bf16.mxu0 0
    %2244 = vmatpush1.bf16.msra.mxu0 %v2178
    %2245 = vmatprep.subr.bf16.mxu0 0
    %2246 = vmatpush1.bf16.msra.mxu0 %v2179
    %2247 = vmatprep.subr.bf16.mxu0 0
    %2248 = vmatpush1.bf16.msra.mxu0 %v2180
    %2249 = vmatprep.subr.bf16.mxu0 0
    %2250 = vmatpush1.bf16.msra.mxu0 %v2181
    %2251 = vmatprep.subr.bf16.mxu0 0
    %2252 = vmatpush1.bf16.msra.mxu0 %v2182
    %2253 = vmatprep.subr.bf16.mxu0 0
    %2254 = vmatpush1.bf16.msra.mxu0 %v2183
    %2255 = vmatprep.subr.bf16.mxu0 0
    %2256 = vmatpush1.bf16.msra.mxu0 %v2184
    %2257 = vmatprep.subr.bf16.mxu0 0
    %2258 = vmatpush1.bf16.msra.mxu0 %v2185
    %2259 = vmatprep.subr.bf16.mxu0 0
    %2260 = vmatpush1.bf16.msra.mxu0 %v2186
    %2261 = vmatprep.subr.bf16.mxu0 0
    %2262 = vmatpush1.bf16.msra.mxu0 %v2187
    %2263 = vmatprep.subr.bf16.mxu0 0
    %2264 = vmatpush1.bf16.msra.mxu0 %v2188
    %2265 = vmatprep.subr.bf16.mxu0 0
    %2266 = vmatpush1.bf16.msra.mxu0 %v2189
    %2267 = vmatprep.subr.bf16.mxu0 0
    %2268 = vmatpush1.bf16.msra.mxu0 %v2190
    %2269 = vmatprep.subr.bf16.mxu0 0
    %2270 = vmatpush1.bf16.msra.mxu0 %v2191
    %2271 = vmatprep.subr.bf16.mxu0 0
    %2272 = vmatpush1.bf16.msra.mxu0 %v2192
    %2273 = vmatprep.mubr.bf16.mxu0 %v1970
    %2274 = vmatmul.mubr.bf16.gmra.mrb[0].mxu0 %v1969
    %v2275 = vpop.f32.mrb[0].mxu0
    %v2276 = vadd.f32 0.0, %v2275
    %v2277 = vpop.f32.mrb[0].mxu0
    %v2278 = vpop.f32.mrb[0].mxu0
    %v2279 = vadd.f32 0.0, %v2278
    %v2280 = vpop.f32.mrb[0].mxu0
    %2281 = vmatprep.mubr.bf16.mxu0 %v1974
    %2282 = vmatmul.mubr.bf16.gmra.mrb[0].mxu0 %v1973
    %v2283 = vpop.f32.mrb[0].mxu0
    %v2284 = vadd.f32 0.0, %v2283
    %v2285 = vpop.f32.mrb[0].mxu0
    %v2286 = vpop.f32.mrb[0].mxu0
    %v2287 = vadd.f32 0.0, %v2286
    %v2288 = vpop.f32.mrb[0].mxu0
    %2289 = vmatprep.mubr.bf16.mxu0 %v1978
    %2290 = vmatmul.mubr.bf16.gmra.mrb[0].mxu0 %v1977
    %v2291 = vpop.f32.mrb[0].mxu0
    %v2292 = vadd.f32 0.0, %v2291
    %v2293 = vpop.f32.mrb[0].mxu0
    %v2294 = vpop.f32.mrb[0].mxu0
    %v2295 = vadd.f32 0.0, %v2294
    %v2296 = vpop.f32.mrb[0].mxu0
    %2297 = vmatprep.mubr.bf16.mxu0 %v1982
    %2298 = vmatmul.mubr.bf16.gmra.mrb[0].mxu0 %v1981
    %v2299 = vpop.f32.mrb[0].mxu0
    %v2300 = vadd.f32 0.0, %v2299
    %v2301 = vpop.f32.mrb[0].mxu0
    %v2302 = vpop.f32.mrb[0].mxu0
    %v2303 = vadd.f32 0.0, %v2302
    %v2304 = vpop.f32.mrb[0].mxu0
    %2305 = vdwg.mxu0
    %2306 = vmatprep.subr.bf16.mxu0 0
    %2307 = vmatpush1.bf16.msra.mxu0 %v2193
    %2308 = vmatprep.subr.bf16.mxu0 0
    %2309 = vmatpush1.bf16.msra.mxu0 %v2194
    %2310 = vmatprep.subr.bf16.mxu0 0
    %2311 = vmatpush1.bf16.msra.mxu0 %v2195
    %2312 = vmatprep.subr.bf16.mxu0 0
    %2313 = vmatpush1.bf16.msra.mxu0 %v2196
    %2314 = vmatprep.subr.bf16.mxu0 0
    %2315 = vmatpush1.bf16.msra.mxu0 %v2197
    %2316 = vmatprep.subr.bf16.mxu0 0
    %2317 = vmatpush1.bf16.msra.mxu0 %v2198
    %2318 = vmatprep.subr.bf16.mxu0 0
    %2319 = vmatpush1.bf16.msra.mxu0 %v2199
    %2320 = vmatprep.subr.bf16.mxu0 0
    %2321 = vmatpush1.bf16.msra.mxu0 %v2200
    %2322 = vmatprep.subr.bf16.mxu0 0
    %2323 = vmatpush1.bf16.msra.mxu0 %v2201
    %2324 = vmatprep.subr.bf16.mxu0 0
    %2325 = vmatpush1.bf16.msra.mxu0 %v2202
    %2326 = vmatprep.subr.bf16.mxu0 0
    %2327 = vmatpush1.bf16.msra.mxu0 %v2203
    %2328 = vmatprep.subr.bf16.mxu0 0
    %2329 = vmatpush1.bf16.msra.mxu0 %v2204
    %2330 = vmatprep.subr.bf16.mxu0 0
    %2331 = vmatpush1.bf16.msra.mxu0 %v2205
    %2332 = vmatprep.subr.bf16.mxu0 0
    %2333 = vmatpush1.bf16.msra.mxu0 %v2206
    %2334 = vmatprep.subr.bf16.mxu0 0
    %2335 = vmatpush1.bf16.msra.mxu0 %v2207
    %2336 = vmatprep.subr.bf16.mxu0 0
    %2337 = vmatpush1.bf16.msra.mxu0 %v2208
    %2338 = vmatprep.mubr.bf16.mxu0 %v1972
    %2339 = vmatmul.mubr.bf16.gmra.mrb[0].mxu0 %v1971
    %v2340 = vpop.f32.mrb[0].mxu0
    %v2341 = vadd.f32 %v2276, %v2340
    %v2342 = vpop.f32.mrb[0].mxu0
    %v2343 = vpop.f32.mrb[0].mxu0
    %v2344 = vadd.f32 %v2279, %v2343
    %v2345 = vpop.f32.mrb[0].mxu0
    %2346 = vmatprep.mubr.bf16.mxu0 %v1976
    %2347 = vmatmul.mubr.bf16.gmra.mrb[0].mxu0 %v1975
    %v2348 = vpop.f32.mrb[0].mxu0
    %v2349 = vadd.f32 %v2284, %v2348
    %v2350 = vpop.f32.mrb[0].mxu0
    %v2351 = vpop.f32.mrb[0].mxu0
    %v2352 = vadd.f32 %v2287, %v2351
    %v2353 = vpop.f32.mrb[0].mxu0
    %2354 = vmatprep.mubr.bf16.mxu0 %v1980
    %2355 = vmatmul.mubr.bf16.gmra.mrb[0].mxu0 %v1979
    %v2356 = vpop.f32.mrb[0].mxu0
    %v2357 = vadd.f32 %v2292, %v2356
    %v2358 = vpop.f32.mrb[0].mxu0
    %v2359 = vpop.f32.mrb[0].mxu0
    %v2360 = vadd.f32 %v2295, %v2359
    %v2361 = vpop.f32.mrb[0].mxu0
    %2362 = vmatprep.mubr.bf16.mxu0 %v1984
    %2363 = vmatmul.mubr.bf16.gmra.mrb[0].mxu0 %v1983
    %v2364 = vpop.f32.mrb[0].mxu0
    %v2365 = vadd.f32 %v2300, %v2364
    %v2366 = vpop.f32.mrb[0].mxu0
    %v2367 = vpop.f32.mrb[0].mxu0
    %v2368 = vadd.f32 %v2303, %v2367
    %v2369 = vpop.f32.mrb[0].mxu0
    %2370 = vdwg.mxu0
    %v2371 = vmul.f32 %v2341, 0.25
    %v2372 = vmul.f32 %v2344, 0.25
    %v2373 = vmul.f32 %v2349, 0.25
    %v2374 = vmul.f32 %v2352, 0.25
    %v2375 = vmul.f32 %v2357, 0.25
    %v2376 = vmul.f32 %v2360, 0.25
    %v2377 = vmul.f32 %v2365, 0.25
    %v2378 = vmul.f32 %v2368, 0.25
    %v2379 = vsel %vm956, %v2371, -inf
    %2380 = vmax.xlane.f32.xlu0 %v2379
    %v2381 = vpop.xlane.xlu0 %2380
    %v2382 = vsel %vm956, %v2372, -inf
    %2383 = vmax.xlane.f32.xlu0 %v2382
    %v2384 = vpop.xlane.xlu0 %2383
    %v2385 = vsel %vm956, %v2373, -inf
    %2386 = vmax.xlane.f32.xlu0 %v2385
    %v2387 = vpop.xlane.xlu0 %2386
    %v2388 = vsel %vm956, %v2374, -inf
    %2389 = vmax.xlane.f32.xlu0 %v2388
    %v2390 = vpop.xlane.xlu0 %2389
    %v2391 = vsel %vm956, %v2375, -inf
    %2392 = vmax.xlane.f32.xlu0 %v2391
    %v2393 = vpop.xlane.xlu0 %2392
    %v2394 = vsel %vm956, %v2376, -inf
    %2395 = vmax.xlane.f32.xlu0 %v2394
    %v2396 = vpop.xlane.xlu0 %2395
    %v2397 = vsel %vm956, %v2377, -inf
    %2398 = vmax.xlane.f32.xlu0 %v2397
    %v2399 = vpop.xlane.xlu0 %2398
    %v2400 = vsel %vm956, %v2378, -inf
    %2401 = vmax.xlane.f32.xlu0 %v2400
    %v2402 = vpop.xlane.xlu0 %2401
    %v2403 = vsub.f32 %v2371, %v2381
    %v2404 = vsub.f32 %v2372, %v2384
    %v2405 = vsub.f32 %v2373, %v2387
    %v2406 = vsub.f32 %v2374, %v2390
    %v2407 = vsub.f32 %v2375, %v2393
    %v2408 = vsub.f32 %v2376, %v2396
    %v2409 = vsub.f32 %v2377, %v2399
    %v2410 = vsub.f32 %v2378, %v2402
    %v2411 = vmul.f32 %v2403, 1.442695
    %v2412 = vpow.pop %v2411
    %v2413 = vmul.f32 %v2404, 1.442695
    %v2414 = vpow.pop %v2413
    %v2415 = vmul.f32 %v2405, 1.442695
    %v2416 = vpow.pop %v2415
    %v2417 = vmul.f32 %v2406, 1.442695
    %v2418 = vpow.pop %v2417
    %v2419 = vmul.f32 %v2407, 1.442695
    %v2420 = vpow.pop %v2419
    %v2421 = vmul.f32 %v2408, 1.442695
    %v2422 = vpow.pop %v2421
    %v2423 = vmul.f32 %v2409, 1.442695
    %v2424 = vpow.pop %v2423
    %v2425 = vmul.f32 %v2410, 1.442695
    %v2426 = vpow.pop %v2425
    %v2427 = vsel %vm956, %v2412, 0.0
    %2428 = vadd.xlane.f32.xlu0 %v2427
    %v2429 = vpop.xlane.xlu0 %2428
    %v2430 = vsel %vm956, %v2414, 0.0
    %2431 = vadd.xlane.f32.xlu0 %v2430
    %v2432 = vpop.xlane.xlu0 %2431
    %v2433 = vsel %vm956, %v2416, 0.0
    %2434 = vadd.xlane.f32.xlu0 %v2433
    %v2435 = vpop.xlane.xlu0 %2434
    %v2436 = vsel %vm956, %v2418, 0.0
    %2437 = vadd.xlane.f32.xlu0 %v2436
    %v2438 = vpop.xlane.xlu0 %2437
    %v2439 = vsel %vm956, %v2420, 0.0
    %2440 = vadd.xlane.f32.xlu0 %v2439
    %v2441 = vpop.xlane.xlu0 %2440
    %v2442 = vsel %vm956, %v2422, 0.0
    %2443 = vadd.xlane.f32.xlu0 %v2442
    %v2444 = vpop.xlane.xlu0 %2443
    %v2445 = vsel %vm956, %v2424, 0.0
    %2446 = vadd.xlane.f32.xlu0 %v2445
    %v2447 = vpop.xlane.xlu0 %2446
    %v2448 = vsel %vm956, %v2426, 0.0
    %2449 = vadd.xlane.f32.xlu0 %v2448
    %v2450 = vpop.xlane.xlu0 %2449
    %v2451 = vrcp.pop %v2429
    %v2452 = vrcp.pop %v2432
    %v2453 = vrcp.pop %v2435
    %v2454 = vrcp.pop %v2438
    %v2455 = vrcp.pop %v2441
    %v2456 = vrcp.pop %v2444
    %v2457 = vrcp.pop %v2447
    %v2458 = vrcp.pop %v2450
    %v2459 = vmul.f32 %v2412, %v2451
    %v2460 = vmul.f32 %v2414, %v2452
    %v2461 = vmul.f32 %v2416, %v2453
    %v2462 = vmul.f32 %v2418, %v2454
    %v2463 = vmul.f32 %v2420, %v2455
    %v2464 = vmul.f32 %v2422, %v2456
    %v2465 = vmul.f32 %v2424, %v2457
    %v2466 = vmul.f32 %v2426, %v2458
    %v2467 = vpack.c.bf16 %v2460, %v2459
    %v2468 = vpack.c.bf16 %v2462, %v2461
    %v2469 = vpack.c.bf16 %v2464, %v2463
    %v2470 = vpack.c.bf16 %v2466, %v2465
    %v2471 = vld [vmem:[%s10] sm:$0xff]
    %v2472 = vld [vmem:[%s10 + $0x8] sm:$0xff]
    %v2473 = vld [vmem:[%s10 + $0x10] sm:$0xff]
    %v2474 = vld [vmem:[%s10 + $0x18] sm:$0xff]
    %v2475 = vld [vmem:[%s10 + $0x20] sm:$0xff]
    %v2476 = vld [vmem:[%s10 + $0x28] sm:$0xff]
    %v2477 = vld [vmem:[%s10 + $0x30] sm:$0xff]
    %v2478 = vld [vmem:[%s10 + $0x38] sm:$0xff]
    %v2487 = vunpack.c.l.b16 %v2471
    %v2488 = vunpack.c.h.b16 %v2471
    %v2489 = vunpack.c.l.b16 %v2472
    %v2490 = vunpack.c.h.b16 %v2472
    %v2491 = vunpack.c.l.b16 %v2473
    %v2492 = vunpack.c.h.b16 %v2473
    %v2493 = vunpack.c.l.b16 %v2474
    %v2494 = vunpack.c.h.b16 %v2474
    %v2495 = vunpack.c.l.b16 %v2475
    %v2496 = vunpack.c.h.b16 %v2475
    %v2497 = vunpack.c.l.b16 %v2476
    %v2498 = vunpack.c.h.b16 %v2476
    %v2499 = vunpack.c.l.b16 %v2477
    %v2500 = vunpack.c.h.b16 %v2477
    %v2501 = vunpack.c.l.b16 %v2478
    %v2502 = vunpack.c.h.b16 %v2478
    %v2503 = vpack.c.b16 %v2491, %v2487
    %v2504 = vpack.c.b16 %v2492, %v2488
    %v2505 = vpack.c.b16 %v2493, %v2489
    %v2506 = vpack.c.b16 %v2494, %v2490
    %v2507 = vpack.c.b16 %v2499, %v2495
    %v2508 = vpack.c.b16 %v2500, %v2496
    %v2509 = vpack.c.b16 %v2501, %v2497
    %v2510 = vpack.c.b16 %v2502, %v2498
    %v2520 = vsel %vm956, %v2467, 0
    %v2523 = vsel %vm956, %v2468, 0
    %v2526 = vsel %vm956, %v2469, 0
    %v2529 = vsel %vm956, %v2470, 0
    %2531 = vmatprep.subr.bf16.mxu0 %v2504
    %2532 = vmatpush1.bf16.msra.mxu0 %v2503
    %2533 = vmatprep.subr.bf16.mxu0 %v2508
    %2534 = vmatpush1.bf16.msra.mxu0 %v2507
    %2535 = vmatprep.subr.bf16.mxu0 0
    %2536 = vmatpush1.bf16.msra.mxu0 0
    %2537 = vmatprep.subr.bf16.mxu0 0
    %2538 = vmatpush1.bf16.msra.mxu0 0
    %2539 = vmatprep.subr.bf16.mxu0 0
    %2540 = vmatpush1.bf16.msra.mxu0 0
    %2541 = vmatprep.subr.bf16.mxu0 0
    %2542 = vmatpush1.bf16.msra.mxu0 0
    %2543 = vmatprep.subr.bf16.mxu0 0
    %2544 = vmatpush1.bf16.msra.mxu0 0
    %2545 = vmatprep.subr.bf16.mxu0 0
    %2546 = vmatpush1.bf16.msra.mxu0 0
    %2547 = vmatprep.subr.bf16.mxu0 0
    %2548 = vmatpush1.bf16.msra.mxu0 0
    %2549 = vmatprep.subr.bf16.mxu0 0
    %2550 = vmatpush1.bf16.msra.mxu0 0
    %2551 = vmatprep.subr.bf16.mxu0 0
    %2552 = vmatpush1.bf16.msra.mxu0 0
    %2553 = vmatprep.subr.bf16.mxu0 0
    %2554 = vmatpush1.bf16.msra.mxu0 0
    %2555 = vmatprep.subr.bf16.mxu0 0
    %2556 = vmatpush1.bf16.msra.mxu0 0
    %2557 = vmatprep.subr.bf16.mxu0 0
    %2558 = vmatpush1.bf16.msra.mxu0 0
    %2559 = vmatprep.subr.bf16.mxu0 0
    %2560 = vmatpush1.bf16.msra.mxu0 0
    %2561 = vmatprep.subr.bf16.mxu0 0
    %2562 = vmatpush1.bf16.msra.mxu0 0
    %2563 = vmatprep.mubr.bf16.mxu0 0
    %2564 = vmatmul.mubr.bf16.gmra.mrb[0].mxu0 %v2520
    %v2565 = vpop.f32.mrb[0].mxu0
    %v2566 = vadd.f32 0.0, %v2565
    %v2567 = vpop.f32.mrb[0].mxu0
    %v2568 = vadd.f32 0.0, %v2567
    %v2569 = vpop.f32.mrb[0].mxu0
    %v2570 = vadd.f32 0.0, %v2569
    %v2571 = vpop.f32.mrb[0].mxu0
    %v2572 = vadd.f32 0.0, %v2571
    %2573 = vmatprep.mubr.bf16.mxu0 0
    %2574 = vmatmul.mubr.bf16.gmra.mrb[0].mxu0 %v2523
    %v2575 = vpop.f32.mrb[0].mxu0
    %v2576 = vadd.f32 0.0, %v2575
    %v2577 = vpop.f32.mrb[0].mxu0
    %v2578 = vadd.f32 0.0, %v2577
    %v2579 = vpop.f32.mrb[0].mxu0
    %v2580 = vadd.f32 0.0, %v2579
    %v2581 = vpop.f32.mrb[0].mxu0
    %v2582 = vadd.f32 0.0, %v2581
    %2583 = vmatprep.mubr.bf16.mxu0 0
    %2584 = vmatmul.mubr.bf16.gmra.mrb[0].mxu0 %v2526
    %v2585 = vpop.f32.mrb[0].mxu0
    %v2586 = vadd.f32 0.0, %v2585
    %v2587 = vpop.f32.mrb[0].mxu0
    %v2588 = vadd.f32 0.0, %v2587
    %v2589 = vpop.f32.mrb[0].mxu0
    %v2590 = vadd.f32 0.0, %v2589
    %v2591 = vpop.f32.mrb[0].mxu0
    %v2592 = vadd.f32 0.0, %v2591
    %2593 = vmatprep.mubr.bf16.mxu0 0
    %2594 = vmatmul.mubr.bf16.gmra.mrb[0].mxu0 %v2529
    %v2595 = vpop.f32.mrb[0].mxu0
    %v2596 = vadd.f32 0.0, %v2595
    %v2597 = vpop.f32.mrb[0].mxu0
    %v2598 = vadd.f32 0.0, %v2597
    %v2599 = vpop.f32.mrb[0].mxu0
    %v2600 = vadd.f32 0.0, %v2599
    %v2601 = vpop.f32.mrb[0].mxu0
    %v2602 = vadd.f32 0.0, %v2601
    %2603 = vdwg.mxu0
    %2604 = vmatprep.subr.bf16.mxu0 %v2506
    %2605 = vmatpush1.bf16.msra.mxu0 %v2505
    %2606 = vmatprep.subr.bf16.mxu0 %v2510
    %2607 = vmatpush1.bf16.msra.mxu0 %v2509
    %2608 = vmatprep.subr.bf16.mxu0 0
    %2609 = vmatpush1.bf16.msra.mxu0 0
    %2610 = vmatprep.subr.bf16.mxu0 0
    %2611 = vmatpush1.bf16.msra.mxu0 0
    %2612 = vmatprep.subr.bf16.mxu0 0
    %2613 = vmatpush1.bf16.msra.mxu0 0
    %2614 = vmatprep.subr.bf16.mxu0 0
    %2615 = vmatpush1.bf16.msra.mxu0 0
    %2616 = vmatprep.subr.bf16.mxu0 0
    %2617 = vmatpush1.bf16.msra.mxu0 0
    %2618 = vmatprep.subr.bf16.mxu0 0
    %2619 = vmatpush1.bf16.msra.mxu0 0
    %2620 = vmatprep.subr.bf16.mxu0 0
    %2621 = vmatpush1.bf16.msra.mxu0 0
    %2622 = vmatprep.subr.bf16.mxu0 0
    %2623 = vmatpush1.bf16.msra.mxu0 0
    %2624 = vmatprep.subr.bf16.mxu0 0
    %2625 = vmatpush1.bf16.msra.mxu0 0
    %2626 = vmatprep.subr.bf16.mxu0 0
    %2627 = vmatpush1.bf16.msra.mxu0 0
    %2628 = vmatprep.subr.bf16.mxu0 0
    %2629 = vmatpush1.bf16.msra.mxu0 0
    %2630 = vmatprep.subr.bf16.mxu0 0
    %2631 = vmatpush1.bf16.msra.mxu0 0
    %2632 = vmatprep.subr.bf16.mxu0 0
    %2633 = vmatpush1.bf16.msra.mxu0 0
    %2634 = vmatprep.subr.bf16.mxu0 0
    %2635 = vmatpush1.bf16.msra.mxu0 0
    %2636 = vmatprep.mubr.bf16.mxu0 0
    %2637 = vmatmul.mubr.bf16.gmra.mrb[0].mxu0 %v2520
    %v2638 = vpop.f32.mrb[0].mxu0
    %v2639 = vadd.f32 0.0, %v2638
    %v2640 = vpop.f32.mrb[0].mxu0
    %v2641 = vadd.f32 0.0, %v2640
    %v2642 = vpop.f32.mrb[0].mxu0
    %v2643 = vadd.f32 0.0, %v2642
    %v2644 = vpop.f32.mrb[0].mxu0
    %v2645 = vadd.f32 0.0, %v2644
    %2646 = vmatprep.mubr.bf16.mxu0 0
    %2647 = vmatmul.mubr.bf16.gmra.mrb[0].mxu0 %v2523
    %v2648 = vpop.f32.mrb[0].mxu0
    %v2649 = vadd.f32 0.0, %v2648
    %v2650 = vpop.f32.mrb[0].mxu0
    %v2651 = vadd.f32 0.0, %v2650
    %v2652 = vpop.f32.mrb[0].mxu0
    %v2653 = vadd.f32 0.0, %v2652
    %v2654 = vpop.f32.mrb[0].mxu0
    %v2655 = vadd.f32 0.0, %v2654
    %2656 = vmatprep.mubr.bf16.mxu0 0
    %2657 = vmatmul.mubr.bf16.gmra.mrb[0].mxu0 %v2526
    %v2658 = vpop.f32.mrb[0].mxu0
    %v2659 = vadd.f32 0.0, %v2658
    %v2660 = vpop.f32.mrb[0].mxu0
    %v2661 = vadd.f32 0.0, %v2660
    %v2662 = vpop.f32.mrb[0].mxu0
    %v2663 = vadd.f32 0.0, %v2662
    %v2664 = vpop.f32.mrb[0].mxu0
    %v2665 = vadd.f32 0.0, %v2664
    %2666 = vmatprep.mubr.bf16.mxu0 0
    %2667 = vmatmul.mubr.bf16.gmra.mrb[0].mxu0 %v2529
    %v2668 = vpop.f32.mrb[0].mxu0
    %v2669 = vadd.f32 0.0, %v2668
    %v2670 = vpop.f32.mrb[0].mxu0
    %v2671 = vadd.f32 0.0, %v2670
    %v2672 = vpop.f32.mrb[0].mxu0
    %v2673 = vadd.f32 0.0, %v2672
    %v2674 = vpop.f32.mrb[0].mxu0
    %v2675 = vadd.f32 0.0, %v2674
    %2676 = vdwg.mxu0
    %v2677 = vmul.f32 %v1754, %v2566
    %v2678 = vmul.f32 %v1756, %v2568
    %v2679 = vmul.f32 %v1827, %v2639
    %v2680 = vmul.f32 %v1829, %v2641
    %v2681 = vmul.f32 %v1758, %v2570
    %v2682 = vmul.f32 %v1760, %v2572
    %v2683 = vmul.f32 %v1831, %v2643
    %v2684 = vmul.f32 %v1833, %v2645
    %v2685 = vmul.f32 %v1764, %v2576
    %v2686 = vmul.f32 %v1766, %v2578
    %v2687 = vmul.f32 %v1837, %v2649
    %v2688 = vmul.f32 %v1839, %v2651
    %v2689 = vmul.f32 %v1768, %v2580
    %v2690 = vmul.f32 %v1770, %v2582
    %v2691 = vmul.f32 %v1841, %v2653
    %v2692 = vmul.f32 %v1843, %v2655
    %v2693 = vmul.f32 %v1774, %v2586
    %v2694 = vmul.f32 %v1776, %v2588
    %v2695 = vmul.f32 %v1847, %v2659
    %v2696 = vmul.f32 %v1849, %v2661
    %v2697 = vmul.f32 %v1778, %v2590
    %v2698 = vmul.f32 %v1780, %v2592
    %v2699 = vmul.f32 %v1851, %v2663
    %v2700 = vmul.f32 %v1853, %v2665
    %v2701 = vmul.f32 %v1784, %v2596
    %v2702 = vmul.f32 %v1786, %v2598
    %v2703 = vmul.f32 %v1857, %v2669
    %v2704 = vmul.f32 %v1859, %v2671
    %v2705 = vmul.f32 %v1788, %v2600
    %v2706 = vmul.f32 %v1790, %v2602
    %v2707 = vmul.f32 %v1861, %v2673
    %v2708 = vmul.f32 %v1863, %v2675
    %v2709 = vadd.f32 %v2677, %v2681
    %v2710 = vadd.f32 %v2709, %v2685
    %v2711 = vadd.f32 %v2710, %v2689
    %v2712 = vrot.slane %v2711, 4
    %v2713 = vadd.f32 %v2711, %v2712
    %v2714 = vrot.slane %v2713, 2
    %v2715 = vadd.f32 %v2713, %v2714
    %v2716 = vrot.slane %v2715, 1
    %v2717 = vadd.f32 %v2715, %v2716
    %v2718 = vadd.f32 %v2678, %v2682
    %v2719 = vadd.f32 %v2718, %v2686
    %v2720 = vadd.f32 %v2719, %v2690
    %v2721 = vrot.slane %v2720, 4
    %v2722 = vadd.f32 %v2720, %v2721
    %v2723 = vrot.slane %v2722, 2
    %v2724 = vadd.f32 %v2722, %v2723
    %v2725 = vrot.slane %v2724, 1
    %v2726 = vadd.f32 %v2724, %v2725
    %v2727 = vadd.f32 %v2679, %v2683
    %v2728 = vadd.f32 %v2727, %v2687
    %v2729 = vadd.f32 %v2728, %v2691
    %v2730 = vrot.slane %v2729, 4
    %v2731 = vadd.f32 %v2729, %v2730
    %v2732 = vrot.slane %v2731, 2
    %v2733 = vadd.f32 %v2731, %v2732
    %v2734 = vrot.slane %v2733, 1
    %v2735 = vadd.f32 %v2733, %v2734
    %v2736 = vadd.f32 %v2680, %v2684
    %v2737 = vadd.f32 %v2736, %v2688
    %v2738 = vadd.f32 %v2737, %v2692
    %v2739 = vrot.slane %v2738, 4
    %v2740 = vadd.f32 %v2738, %v2739
    %v2741 = vrot.slane %v2740, 2
    %v2742 = vadd.f32 %v2740, %v2741
    %v2743 = vrot.slane %v2742, 1
    %v2744 = vadd.f32 %v2742, %v2743
    %v2745 = vadd.f32 %v2693, %v2697
    %v2746 = vadd.f32 %v2745, %v2701
    %v2747 = vadd.f32 %v2746, %v2705
    %v2748 = vrot.slane %v2747, 4
    %v2749 = vadd.f32 %v2747, %v2748
    %v2750 = vrot.slane %v2749, 2
    %v2751 = vadd.f32 %v2749, %v2750
    %v2752 = vrot.slane %v2751, 1
    %v2753 = vadd.f32 %v2751, %v2752
    %v2754 = vadd.f32 %v2694, %v2698
    %v2755 = vadd.f32 %v2754, %v2702
    %v2756 = vadd.f32 %v2755, %v2706
    %v2757 = vrot.slane %v2756, 4
    %v2758 = vadd.f32 %v2756, %v2757
    %v2759 = vrot.slane %v2758, 2
    %v2760 = vadd.f32 %v2758, %v2759
    %v2761 = vrot.slane %v2760, 1
    %v2762 = vadd.f32 %v2760, %v2761
    %v2763 = vadd.f32 %v2695, %v2699
    %v2764 = vadd.f32 %v2763, %v2703
    %v2765 = vadd.f32 %v2764, %v2707
    %v2766 = vrot.slane %v2765, 4
    %v2767 = vadd.f32 %v2765, %v2766
    %v2768 = vrot.slane %v2767, 2
    %v2769 = vadd.f32 %v2767, %v2768
    %v2770 = vrot.slane %v2769, 1
    %v2771 = vadd.f32 %v2769, %v2770
    %v2772 = vadd.f32 %v2696, %v2700
    %v2773 = vadd.f32 %v2772, %v2704
    %v2774 = vadd.f32 %v2773, %v2708
    %v2775 = vrot.slane %v2774, 4
    %v2776 = vadd.f32 %v2774, %v2775
    %v2777 = vrot.slane %v2776, 2
    %v2778 = vadd.f32 %v2776, %v2777
    %v2779 = vrot.slane %v2778, 1
    %v2780 = vadd.f32 %v2778, %v2779
    %v2781 = vmul.f32 %v2717, %v2717
    %v2782 = vmul.f32 %v2726, %v2726
    %v2783 = vmul.f32 %v2735, %v2735
    %v2784 = vmul.f32 %v2744, %v2744
    %v2785 = vmul.f32 %v2753, %v2753
    %v2786 = vmul.f32 %v2762, %v2762
    %v2787 = vmul.f32 %v2771, %v2771
    %v2788 = vmul.f32 %v2780, %v2780
    %v2789 = vpack.c.bf16 %v2781, %v2781
    %v2790 = vpack.c.bf16 %v2782, %v2782
    %v2791 = vpack.c.bf16 %v2783, %v2783
    %v2792 = vpack.c.bf16 %v2784, %v2784
    %v2793 = vpack.c.bf16 %v2785, %v2785
    %v2794 = vpack.c.bf16 %v2786, %v2786
    %v2795 = vpack.c.bf16 %v2787, %v2787
    %v2796 = vpack.c.bf16 %v2788, %v2788
    %v2805 = vunpack.c.l.b16 %v2789
    %v2806 = vunpack.c.l.b16 %v2790
    %v2807 = vunpack.c.l.b16 %v2791
    %v2808 = vunpack.c.l.b16 %v2792
    %v2809 = vunpack.c.l.b16 %v2793
    %v2810 = vunpack.c.l.b16 %v2794
    %v2811 = vunpack.c.l.b16 %v2795
    %v2812 = vunpack.c.l.b16 %v2796
    %v2813 = vsel %vm984, %v2809, %v2805
    %v2814 = vsel %vm984, %v2810, %v2806
    %v2815 = vsel %vm984, %v2811, %v2807
    %v2816 = vsel %vm984, %v2812, %v2808
    %v2817 = vpack.c.b16 %v2813, %v2813
    %v2818 = vpack.c.b16 %v2814, %v2814
    %v2819 = vpack.c.b16 %v2815, %v2815
    %v2820 = vpack.c.b16 %v2816, %v2816
    %2825 = vmatprep.subr.bf16.mxu0 0
    %2826 = vmatpush1.bf16.msra.mxu0 %v2177
    %2827 = vmatprep.subr.bf16.mxu0 0
    %2828 = vmatpush1.bf16.msra.mxu0 %v2178
    %2829 = vmatprep.subr.bf16.mxu0 0
    %2830 = vmatpush1.bf16.msra.mxu0 %v2179
    %2831 = vmatprep.subr.bf16.mxu0 0
    %2832 = vmatpush1.bf16.msra.mxu0 %v2180
    %2833 = vmatprep.subr.bf16.mxu0 0
    %2834 = vmatpush1.bf16.msra.mxu0 %v2181
    %2835 = vmatprep.subr.bf16.mxu0 0
    %2836 = vmatpush1.bf16.msra.mxu0 %v2182
    %2837 = vmatprep.subr.bf16.mxu0 0
    %2838 = vmatpush1.bf16.msra.mxu0 %v2183
    %2839 = vmatprep.subr.bf16.mxu0 0
    %2840 = vmatpush1.bf16.msra.mxu0 %v2184
    %2841 = vmatprep.subr.bf16.mxu0 0
    %2842 = vmatpush1.bf16.msra.mxu0 %v2185
    %2843 = vmatprep.subr.bf16.mxu0 0
    %2844 = vmatpush1.bf16.msra.mxu0 %v2186
    %2845 = vmatprep.subr.bf16.mxu0 0
    %2846 = vmatpush1.bf16.msra.mxu0 %v2187
    %2847 = vmatprep.subr.bf16.mxu0 0
    %2848 = vmatpush1.bf16.msra.mxu0 %v2188
    %2849 = vmatprep.subr.bf16.mxu0 0
    %2850 = vmatpush1.bf16.msra.mxu0 %v2189
    %2851 = vmatprep.subr.bf16.mxu0 0
    %2852 = vmatpush1.bf16.msra.mxu0 %v2190
    %2853 = vmatprep.subr.bf16.mxu0 0
    %2854 = vmatpush1.bf16.msra.mxu0 %v2191
    %2855 = vmatprep.subr.bf16.mxu0 0
    %2856 = vmatpush1.bf16.msra.mxu0 %v2192
    %2857 = vmatprep.mubr.bf16.mxu0 %v2818
    %2858 = vmatmul.mubr.bf16.gmra.mrb[0].mxu0 %v2817
    %v2859 = vpop.f32.mrb[0].mxu0
    %v2860 = vadd.f32 0.0, %v2859
    %v2861 = vpop.f32.mrb[0].mxu0
    %v2862 = vpop.f32.mrb[0].mxu0
    %v2863 = vpop.f32.mrb[0].mxu0
    %2864 = vdwg.mxu0
    %2865 = vmatprep.subr.bf16.mxu0 0
    %2866 = vmatpush1.bf16.msra.mxu0 %v2193
    %2867 = vmatprep.subr.bf16.mxu0 0
    %2868 = vmatpush1.bf16.msra.mxu0 %v2194
    %2869 = vmatprep.subr.bf16.mxu0 0
    %2870 = vmatpush1.bf16.msra.mxu0 %v2195
    %2871 = vmatprep.subr.bf16.mxu0 0
    %2872 = vmatpush1.bf16.msra.mxu0 %v2196
    %2873 = vmatprep.subr.bf16.mxu0 0
    %2874 = vmatpush1.bf16.msra.mxu0 %v2197
    %2875 = vmatprep.subr.bf16.mxu0 0
    %2876 = vmatpush1.bf16.msra.mxu0 %v2198
    %2877 = vmatprep.subr.bf16.mxu0 0
    %2878 = vmatpush1.bf16.msra.mxu0 %v2199
    %2879 = vmatprep.subr.bf16.mxu0 0
    %2880 = vmatpush1.bf16.msra.mxu0 %v2200
    %2881 = vmatprep.subr.bf16.mxu0 0
    %2882 = vmatpush1.bf16.msra.mxu0 %v2201
    %2883 = vmatprep.subr.bf16.mxu0 0
    %2884 = vmatpush1.bf16.msra.mxu0 %v2202
    %2885 = vmatprep.subr.bf16.mxu0 0
    %2886 = vmatpush1.bf16.msra.mxu0 %v2203
    %2887 = vmatprep.subr.bf16.mxu0 0
    %2888 = vmatpush1.bf16.msra.mxu0 %v2204
    %2889 = vmatprep.subr.bf16.mxu0 0
    %2890 = vmatpush1.bf16.msra.mxu0 %v2205
    %2891 = vmatprep.subr.bf16.mxu0 0
    %2892 = vmatpush1.bf16.msra.mxu0 %v2206
    %2893 = vmatprep.subr.bf16.mxu0 0
    %2894 = vmatpush1.bf16.msra.mxu0 %v2207
    %2895 = vmatprep.subr.bf16.mxu0 0
    %2896 = vmatpush1.bf16.msra.mxu0 %v2208
    %2897 = vmatprep.mubr.bf16.mxu0 %v2820
    %2898 = vmatmul.mubr.bf16.gmra.mrb[0].mxu0 %v2819
    %v2899 = vpop.f32.mrb[0].mxu0
    %v2900 = vadd.f32 %v2860, %v2899
    %v2901 = vpop.f32.mrb[0].mxu0
    %v2902 = vpop.f32.mrb[0].mxu0
    %v2903 = vpop.f32.mrb[0].mxu0
    %2904 = vdwg.mxu0
    %v2905 = vrsqrt.pop %v2900
    %v2906 = vmul.f32 %v2900, %v2905
    %vm2907 = vcmp.eq.f32.partialorder %v2900, inf
    %v2908 = vsel %vm2907, %v2900, %v2906
    %vm2909 = vcmp.eq.f32.partialorder %v2900, 0.0
    %v2910 = vand.u32 %v2900, 2147483648
    %v2911 = vsel %vm2909, %v2910, %v2908
    %v2912 = vmin.f32 %v2911, 60.0
    %v2913 = vmul.f32 %v2912, 1.442695
    %v2914 = vpow.pop %v2913
    %v2915 = vadd.f32 %v2914, 1e-20
    %v2916 = vrcp.pop %v2915
    %v2917 = vsub.f32 1.0, %v2916
    %v2918 = vadd.f32 %v2911, 1e-20
    %v2919 = vrcp.pop %v2918
    %v2920 = vmul.f32 %v2917, %v2919
    %v2921 = vpack.c.bf16 %v2920, %v2920
    %v2923 = vsel %vm956, %v2921, 0
    %2925 = vmatprep.subr.bf16.mxu0 %v2504
    %2926 = vmatpush1.bf16.msra.mxu0 %v2503
    %2927 = vmatprep.subr.bf16.mxu0 %v2508
    %2928 = vmatpush1.bf16.msra.mxu0 %v2507
    %2929 = vmatprep.subr.bf16.mxu0 0
    %2930 = vmatpush1.bf16.msra.mxu0 0
    %2931 = vmatprep.subr.bf16.mxu0 0
    %2932 = vmatpush1.bf16.msra.mxu0 0
    %2933 = vmatprep.subr.bf16.mxu0 0
    %2934 = vmatpush1.bf16.msra.mxu0 0
    %2935 = vmatprep.subr.bf16.mxu0 0
    %2936 = vmatpush1.bf16.msra.mxu0 0
    %2937 = vmatprep.subr.bf16.mxu0 0
    %2938 = vmatpush1.bf16.msra.mxu0 0
    %2939 = vmatprep.subr.bf16.mxu0 0
    %2940 = vmatpush1.bf16.msra.mxu0 0
    %2941 = vmatprep.subr.bf16.mxu0 0
    %2942 = vmatpush1.bf16.msra.mxu0 0
    %2943 = vmatprep.subr.bf16.mxu0 0
    %2944 = vmatpush1.bf16.msra.mxu0 0
    %2945 = vmatprep.subr.bf16.mxu0 0
    %2946 = vmatpush1.bf16.msra.mxu0 0
    %2947 = vmatprep.subr.bf16.mxu0 0
    %2948 = vmatpush1.bf16.msra.mxu0 0
    %2949 = vmatprep.subr.bf16.mxu0 0
    %2950 = vmatpush1.bf16.msra.mxu0 0
    %2951 = vmatprep.subr.bf16.mxu0 0
    %2952 = vmatpush1.bf16.msra.mxu0 0
    %2953 = vmatprep.subr.bf16.mxu0 0
    %2954 = vmatpush1.bf16.msra.mxu0 0
    %2955 = vmatprep.subr.bf16.mxu0 0
    %2956 = vmatpush1.bf16.msra.mxu0 0
    %2957 = vmatprep.mubr.bf16.mxu0 0
    %2958 = vmatmul.mubr.bf16.gmra.mrb[0].mxu0 %v2923
    %v2959 = vpop.f32.mrb[0].mxu0
    %v2960 = vadd.f32 0.0, %v2959
    %v2961 = vpop.f32.mrb[0].mxu0
    %v2962 = vadd.f32 0.0, %v2961
    %v2963 = vpop.f32.mrb[0].mxu0
    %v2964 = vpop.f32.mrb[0].mxu0
    %2965 = vdwg.mxu0
    %2966 = vmatprep.subr.bf16.mxu0 %v2506
    %2967 = vmatpush1.bf16.msra.mxu0 %v2505
    %2968 = vmatprep.subr.bf16.mxu0 %v2510
    %2969 = vmatpush1.bf16.msra.mxu0 %v2509
    %2970 = vmatprep.subr.bf16.mxu0 0
    %2971 = vmatpush1.bf16.msra.mxu0 0
    %2972 = vmatprep.subr.bf16.mxu0 0
    %2973 = vmatpush1.bf16.msra.mxu0 0
    %2974 = vmatprep.subr.bf16.mxu0 0
    %2975 = vmatpush1.bf16.msra.mxu0 0
    %2976 = vmatprep.subr.bf16.mxu0 0
    %2977 = vmatpush1.bf16.msra.mxu0 0
    %2978 = vmatprep.subr.bf16.mxu0 0
    %2979 = vmatpush1.bf16.msra.mxu0 0
    %2980 = vmatprep.subr.bf16.mxu0 0
    %2981 = vmatpush1.bf16.msra.mxu0 0
    %2982 = vmatprep.subr.bf16.mxu0 0
    %2983 = vmatpush1.bf16.msra.mxu0 0
    %2984 = vmatprep.subr.bf16.mxu0 0
    %2985 = vmatpush1.bf16.msra.mxu0 0
    %2986 = vmatprep.subr.bf16.mxu0 0
    %2987 = vmatpush1.bf16.msra.mxu0 0
    %2988 = vmatprep.subr.bf16.mxu0 0
    %2989 = vmatpush1.bf16.msra.mxu0 0
    %2990 = vmatprep.subr.bf16.mxu0 0
    %2991 = vmatpush1.bf16.msra.mxu0 0
    %2992 = vmatprep.subr.bf16.mxu0 0
    %2993 = vmatpush1.bf16.msra.mxu0 0
    %2994 = vmatprep.subr.bf16.mxu0 0
    %2995 = vmatpush1.bf16.msra.mxu0 0
    %2996 = vmatprep.subr.bf16.mxu0 0
    %2997 = vmatpush1.bf16.msra.mxu0 0
    %2998 = vmatprep.mubr.bf16.mxu0 0
    %2999 = vmatmul.mubr.bf16.gmra.mrb[0].mxu0 %v2923
    %v3000 = vpop.f32.mrb[0].mxu0
    %v3001 = vadd.f32 0.0, %v3000
    %v3002 = vpop.f32.mrb[0].mxu0
    %v3003 = vadd.f32 0.0, %v3002
    %v3004 = vpop.f32.mrb[0].mxu0
    %v3005 = vpop.f32.mrb[0].mxu0
    %3006 = vdwg.mxu0
    %v3011 = vrot.slane %v2960, 1
    %v3012 = vrot.slane %v2962, 1
    %v3013 = vrot.slane %v3001, 1
    %v3014 = vrot.slane %v3003, 1
    %v3023 = vmul.f32 %v2717, %v2960
    %v3024 = vmul.f32 %v2726, %v2962
    %v3025 = vmul.f32 %v2735, %v3001
    %v3026 = vmul.f32 %v2744, %v3003
    %v3027 = vmul.f32 %v2753, %v3011
    %v3028 = vmul.f32 %v2762, %v3012
    %v3029 = vmul.f32 %v2771, %v3013
    %v3030 = vmul.f32 %v2780, %v3014
    %v3031 = vpack.c.bf16 %v3023, %v3023
    %v3032 = vpack.c.bf16 %v3024, %v3024
    %v3033 = vpack.c.bf16 %v3025, %v3025
    %v3034 = vpack.c.bf16 %v3026, %v3026
    %v3035 = vpack.c.bf16 %v3027, %v3027
    %v3036 = vpack.c.bf16 %v3028, %v3028
    %v3037 = vpack.c.bf16 %v3029, %v3029
    %v3038 = vpack.c.bf16 %v3030, %v3030
    %v3039 = vld [vmem:[%s12] sm:$0xff]
    %v3040 = vld [vmem:[%s12 + $0x8] sm:$0xff]
    %v3041 = vld [vmem:[%s12 + $0x10] sm:$0xff]
    %v3042 = vld [vmem:[%s12 + $0x18] sm:$0xff]
    %v3043 = vld [vmem:[%s12 + $0x20] sm:$0xff]
    %v3044 = vld [vmem:[%s12 + $0x28] sm:$0xff]
    %v3045 = vld [vmem:[%s12 + $0x30] sm:$0xff]
    %v3046 = vld [vmem:[%s12 + $0x38] sm:$0xff]
    %v3047 = vld [vmem:[%s12 + $0x40] sm:$0xff]
    %v3048 = vld [vmem:[%s12 + $0x48] sm:$0xff]
    %v3049 = vld [vmem:[%s12 + $0x50] sm:$0xff]
    %v3050 = vld [vmem:[%s12 + $0x58] sm:$0xff]
    %v3051 = vld [vmem:[%s12 + $0x60] sm:$0xff]
    %v3052 = vld [vmem:[%s12 + $0x68] sm:$0xff]
    %v3053 = vld [vmem:[%s12 + $0x70] sm:$0xff]
    %v3054 = vld [vmem:[%s12 + $0x78] sm:$0xff]
    %v3055 = vld [vmem:[%s12 + $0x80] sm:$0xff]
    %v3056 = vld [vmem:[%s12 + $0x88] sm:$0xff]
    %v3057 = vld [vmem:[%s12 + $0x90] sm:$0xff]
    %v3058 = vld [vmem:[%s12 + $0x98] sm:$0xff]
    %v3059 = vld [vmem:[%s12 + $0xa0] sm:$0xff]
    %v3060 = vld [vmem:[%s12 + $0xa8] sm:$0xff]
    %v3061 = vld [vmem:[%s12 + $0xb0] sm:$0xff]
    %v3062 = vld [vmem:[%s12 + $0xb8] sm:$0xff]
    %v3063 = vld [vmem:[%s12 + $0xc0] sm:$0xff]
    %v3064 = vld [vmem:[%s12 + $0xc8] sm:$0xff]
    %v3065 = vld [vmem:[%s12 + $0xd0] sm:$0xff]
    %v3066 = vld [vmem:[%s12 + $0xd8] sm:$0xff]
    %v3067 = vld [vmem:[%s12 + $0xe0] sm:$0xff]
    %v3068 = vld [vmem:[%s12 + $0xe8] sm:$0xff]
    %v3069 = vld [vmem:[%s12 + $0xf0] sm:$0xff]
    %v3070 = vld [vmem:[%s12 + $0xf8] sm:$0xff]
    %v3071 = vld [vmem:[%s12 + $0x100] sm:$0xff]
    %v3072 = vld [vmem:[%s12 + $0x108] sm:$0xff]
    %v3073 = vld [vmem:[%s12 + $0x110] sm:$0xff]
    %v3074 = vld [vmem:[%s12 + $0x118] sm:$0xff]
    %v3075 = vld [vmem:[%s12 + $0x120] sm:$0xff]
    %v3076 = vld [vmem:[%s12 + $0x128] sm:$0xff]
    %v3077 = vld [vmem:[%s12 + $0x130] sm:$0xff]
    %v3078 = vld [vmem:[%s12 + $0x138] sm:$0xff]
    %v3079 = vld [vmem:[%s12 + $0x140] sm:$0xff]
    %v3080 = vld [vmem:[%s12 + $0x148] sm:$0xff]
    %v3081 = vld [vmem:[%s12 + $0x150] sm:$0xff]
    %v3082 = vld [vmem:[%s12 + $0x158] sm:$0xff]
    %v3083 = vld [vmem:[%s12 + $0x160] sm:$0xff]
    %v3084 = vld [vmem:[%s12 + $0x168] sm:$0xff]
    %v3085 = vld [vmem:[%s12 + $0x170] sm:$0xff]
    %v3086 = vld [vmem:[%s12 + $0x178] sm:$0xff]
    %v3087 = vld [vmem:[%s12 + $0x180] sm:$0xff]
    %v3088 = vld [vmem:[%s12 + $0x188] sm:$0xff]
    %v3089 = vld [vmem:[%s12 + $0x190] sm:$0xff]
    %v3090 = vld [vmem:[%s12 + $0x198] sm:$0xff]
    %v3091 = vld [vmem:[%s12 + $0x1a0] sm:$0xff]
    %v3092 = vld [vmem:[%s12 + $0x1a8] sm:$0xff]
    %v3093 = vld [vmem:[%s12 + $0x1b0] sm:$0xff]
    %v3094 = vld [vmem:[%s12 + $0x1b8] sm:$0xff]
    %v3095 = vld [vmem:[%s12 + $0x1c0] sm:$0xff]
    %v3096 = vld [vmem:[%s12 + $0x1c8] sm:$0xff]
    %v3097 = vld [vmem:[%s12 + $0x1d0] sm:$0xff]
    %v3098 = vld [vmem:[%s12 + $0x1d8] sm:$0xff]
    %v3099 = vld [vmem:[%s12 + $0x1e0] sm:$0xff]
    %v3100 = vld [vmem:[%s12 + $0x1e8] sm:$0xff]
    %v3101 = vld [vmem:[%s12 + $0x1f0] sm:$0xff]
    %v3102 = vld [vmem:[%s12 + $0x1f8] sm:$0xff]
    %v3103 = vld [vmem:[%s13] sm:$0x3]
    %v3105 = vlaneseq
    %v3106 = vshrl.u32 %v3105, 7
    %v3107 = vsub.s32 0, %v3106
    %v3108 = vrot.slane %v3103, %v3107
    %v3109 = vlaneseq
    %v3110 = vshrl.u32 %v3109, 7
    %v3111 = vsub.s32 1, %v3110
    %v3112 = vrot.slane %v3103, %v3111
    %v3123 = vunpack.c.l.b16 %v3031
    %v3124 = vunpack.c.l.b16 %v3032
    %v3125 = vunpack.c.l.b16 %v3033
    %v3126 = vunpack.c.l.b16 %v3034
    %v3127 = vunpack.c.l.b16 %v3035
    %v3128 = vunpack.c.l.b16 %v3036
    %v3129 = vunpack.c.l.b16 %v3037
    %v3130 = vunpack.c.l.b16 %v3038
    %v3131 = vrot.slane %v3127, 7
    %v3132 = vsel %vm984, %v3131, %v3123
    %v3133 = vrot.slane %v3128, 7
    %v3134 = vsel %vm984, %v3133, %v3124
    %v3135 = vrot.slane %v3129, 7
    %v3136 = vsel %vm984, %v3135, %v3125
    %v3137 = vrot.slane %v3130, 7
    %v3138 = vsel %vm984, %v3137, %v3126
    %v3139 = vpack.c.b16 %v3132, %v3132
    %v3140 = vpack.c.b16 %v3134, %v3134
    %v3141 = vpack.c.b16 %v3136, %v3136
    %v3142 = vpack.c.b16 %v3138, %v3138
    %v3211 = vunpack.c.l.b16 %v3039
    %v3212 = vunpack.c.h.b16 %v3039
    %v3213 = vunpack.c.l.b16 %v3040
    %v3214 = vunpack.c.h.b16 %v3040
    %v3215 = vunpack.c.l.b16 %v3041
    %v3216 = vunpack.c.h.b16 %v3041
    %v3217 = vunpack.c.l.b16 %v3042
    %v3218 = vunpack.c.h.b16 %v3042
    %v3219 = vunpack.c.l.b16 %v3043
    %v3220 = vunpack.c.h.b16 %v3043
    %v3221 = vunpack.c.l.b16 %v3044
    %v3222 = vunpack.c.h.b16 %v3044
    %v3223 = vunpack.c.l.b16 %v3045
    %v3224 = vunpack.c.h.b16 %v3045
    %v3225 = vunpack.c.l.b16 %v3046
    %v3226 = vunpack.c.h.b16 %v3046
    %v3227 = vunpack.c.l.b16 %v3047
    %v3228 = vunpack.c.h.b16 %v3047
    %v3229 = vunpack.c.l.b16 %v3048
    %v3230 = vunpack.c.h.b16 %v3048
    %v3231 = vunpack.c.l.b16 %v3049
    %v3232 = vunpack.c.h.b16 %v3049
    %v3233 = vunpack.c.l.b16 %v3050
    %v3234 = vunpack.c.h.b16 %v3050
    %v3235 = vunpack.c.l.b16 %v3051
    %v3236 = vunpack.c.h.b16 %v3051
    %v3237 = vunpack.c.l.b16 %v3052
    %v3238 = vunpack.c.h.b16 %v3052
    %v3239 = vunpack.c.l.b16 %v3053
    %v3240 = vunpack.c.h.b16 %v3053
    %v3241 = vunpack.c.l.b16 %v3054
    %v3242 = vunpack.c.h.b16 %v3054
    %v3243 = vunpack.c.l.b16 %v3055
    %v3244 = vunpack.c.h.b16 %v3055
    %v3245 = vunpack.c.l.b16 %v3056
    %v3246 = vunpack.c.h.b16 %v3056
    %v3247 = vunpack.c.l.b16 %v3057
    %v3248 = vunpack.c.h.b16 %v3057
    %v3249 = vunpack.c.l.b16 %v3058
    %v3250 = vunpack.c.h.b16 %v3058
    %v3251 = vunpack.c.l.b16 %v3059
    %v3252 = vunpack.c.h.b16 %v3059
    %v3253 = vunpack.c.l.b16 %v3060
    %v3254 = vunpack.c.h.b16 %v3060
    %v3255 = vunpack.c.l.b16 %v3061
    %v3256 = vunpack.c.h.b16 %v3061
    %v3257 = vunpack.c.l.b16 %v3062
    %v3258 = vunpack.c.h.b16 %v3062
    %v3259 = vunpack.c.l.b16 %v3063
    %v3260 = vunpack.c.h.b16 %v3063
    %v3261 = vunpack.c.l.b16 %v3064
    %v3262 = vunpack.c.h.b16 %v3064
    %v3263 = vunpack.c.l.b16 %v3065
    %v3264 = vunpack.c.h.b16 %v3065
    %v3265 = vunpack.c.l.b16 %v3066
    %v3266 = vunpack.c.h.b16 %v3066
    %v3267 = vunpack.c.l.b16 %v3067
    %v3268 = vunpack.c.h.b16 %v3067
    %v3269 = vunpack.c.l.b16 %v3068
    %v3270 = vunpack.c.h.b16 %v3068
    %v3271 = vunpack.c.l.b16 %v3069
    %v3272 = vunpack.c.h.b16 %v3069
    %v3273 = vunpack.c.l.b16 %v3070
    %v3274 = vunpack.c.h.b16 %v3070
    %v3275 = vunpack.c.l.b16 %v3071
    %v3276 = vunpack.c.h.b16 %v3071
    %v3277 = vunpack.c.l.b16 %v3072
    %v3278 = vunpack.c.h.b16 %v3072
    %v3279 = vunpack.c.l.b16 %v3073
    %v3280 = vunpack.c.h.b16 %v3073
    %v3281 = vunpack.c.l.b16 %v3074
    %v3282 = vunpack.c.h.b16 %v3074
    %v3283 = vunpack.c.l.b16 %v3075
    %v3284 = vunpack.c.h.b16 %v3075
    %v3285 = vunpack.c.l.b16 %v3076
    %v3286 = vunpack.c.h.b16 %v3076
    %v3287 = vunpack.c.l.b16 %v3077
    %v3288 = vunpack.c.h.b16 %v3077
    %v3289 = vunpack.c.l.b16 %v3078
    %v3290 = vunpack.c.h.b16 %v3078
    %v3291 = vunpack.c.l.b16 %v3079
    %v3292 = vunpack.c.h.b16 %v3079
    %v3293 = vunpack.c.l.b16 %v3080
    %v3294 = vunpack.c.h.b16 %v3080
    %v3295 = vunpack.c.l.b16 %v3081
    %v3296 = vunpack.c.h.b16 %v3081
    %v3297 = vunpack.c.l.b16 %v3082
    %v3298 = vunpack.c.h.b16 %v3082
    %v3299 = vunpack.c.l.b16 %v3083
    %v3300 = vunpack.c.h.b16 %v3083
    %v3301 = vunpack.c.l.b16 %v3084
    %v3302 = vunpack.c.h.b16 %v3084
    %v3303 = vunpack.c.l.b16 %v3085
    %v3304 = vunpack.c.h.b16 %v3085
    %v3305 = vunpack.c.l.b16 %v3086
    %v3306 = vunpack.c.h.b16 %v3086
    %v3307 = vunpack.c.l.b16 %v3087
    %v3308 = vunpack.c.h.b16 %v3087
    %v3309 = vunpack.c.l.b16 %v3088
    %v3310 = vunpack.c.h.b16 %v3088
    %v3311 = vunpack.c.l.b16 %v3089
    %v3312 = vunpack.c.h.b16 %v3089
    %v3313 = vunpack.c.l.b16 %v3090
    %v3314 = vunpack.c.h.b16 %v3090
    %v3315 = vunpack.c.l.b16 %v3091
    %v3316 = vunpack.c.h.b16 %v3091
    %v3317 = vunpack.c.l.b16 %v3092
    %v3318 = vunpack.c.h.b16 %v3092
    %v3319 = vunpack.c.l.b16 %v3093
    %v3320 = vunpack.c.h.b16 %v3093
    %v3321 = vunpack.c.l.b16 %v3094
    %v3322 = vunpack.c.h.b16 %v3094
    %v3323 = vunpack.c.l.b16 %v3095
    %v3324 = vunpack.c.h.b16 %v3095
    %v3325 = vunpack.c.l.b16 %v3096
    %v3326 = vunpack.c.h.b16 %v3096
    %v3327 = vunpack.c.l.b16 %v3097
    %v3328 = vunpack.c.h.b16 %v3097
    %v3329 = vunpack.c.l.b16 %v3098
    %v3330 = vunpack.c.h.b16 %v3098
    %v3331 = vunpack.c.l.b16 %v3099
    %v3332 = vunpack.c.h.b16 %v3099
    %v3333 = vunpack.c.l.b16 %v3100
    %v3334 = vunpack.c.h.b16 %v3100
    %v3335 = vunpack.c.l.b16 %v3101
    %v3336 = vunpack.c.h.b16 %v3101
    %v3337 = vunpack.c.l.b16 %v3102
    %v3338 = vunpack.c.h.b16 %v3102
    %v3339 = vpack.c.b16 %v3213, %v3211
    %v3340 = vpack.c.b16 %v3214, %v3212
    %v3341 = vpack.c.b16 %v3217, %v3215
    %v3342 = vpack.c.b16 %v3218, %v3216
    %v3343 = vpack.c.b16 %v3221, %v3219
    %v3344 = vpack.c.b16 %v3222, %v3220
    %v3345 = vpack.c.b16 %v3225, %v3223
    %v3346 = vpack.c.b16 %v3226, %v3224
    %v3347 = vpack.c.b16 %v3229, %v3227
    %v3348 = vpack.c.b16 %v3230, %v3228
    %v3349 = vpack.c.b16 %v3233, %v3231
    %v3350 = vpack.c.b16 %v3234, %v3232
    %v3351 = vpack.c.b16 %v3237, %v3235
    %v3352 = vpack.c.b16 %v3238, %v3236
    %v3353 = vpack.c.b16 %v3241, %v3239
    %v3354 = vpack.c.b16 %v3242, %v3240
    %v3355 = vpack.c.b16 %v3245, %v3243
    %v3356 = vpack.c.b16 %v3246, %v3244
    %v3357 = vpack.c.b16 %v3249, %v3247
    %v3358 = vpack.c.b16 %v3250, %v3248
    %v3359 = vpack.c.b16 %v3253, %v3251
    %v3360 = vpack.c.b16 %v3254, %v3252
    %v3361 = vpack.c.b16 %v3257, %v3255
    %v3362 = vpack.c.b16 %v3258, %v3256
    %v3363 = vpack.c.b16 %v3261, %v3259
    %v3364 = vpack.c.b16 %v3262, %v3260
    %v3365 = vpack.c.b16 %v3265, %v3263
    %v3366 = vpack.c.b16 %v3266, %v3264
    %v3367 = vpack.c.b16 %v3269, %v3267
    %v3368 = vpack.c.b16 %v3270, %v3268
    %v3369 = vpack.c.b16 %v3273, %v3271
    %v3370 = vpack.c.b16 %v3274, %v3272
    %v3371 = vpack.c.b16 %v3277, %v3275
    %v3372 = vpack.c.b16 %v3278, %v3276
    %v3373 = vpack.c.b16 %v3281, %v3279
    %v3374 = vpack.c.b16 %v3282, %v3280
    %v3375 = vpack.c.b16 %v3285, %v3283
    %v3376 = vpack.c.b16 %v3286, %v3284
    %v3377 = vpack.c.b16 %v3289, %v3287
    %v3378 = vpack.c.b16 %v3290, %v3288
    %v3379 = vpack.c.b16 %v3293, %v3291
    %v3380 = vpack.c.b16 %v3294, %v3292
    %v3381 = vpack.c.b16 %v3297, %v3295
    %v3382 = vpack.c.b16 %v3298, %v3296
    %v3383 = vpack.c.b16 %v3301, %v3299
    %v3384 = vpack.c.b16 %v3302, %v3300
    %v3385 = vpack.c.b16 %v3305, %v3303
    %v3386 = vpack.c.b16 %v3306, %v3304
    %v3387 = vpack.c.b16 %v3309, %v3307
    %v3388 = vpack.c.b16 %v3310, %v3308
    %v3389 = vpack.c.b16 %v3313, %v3311
    %v3390 = vpack.c.b16 %v3314, %v3312
    %v3391 = vpack.c.b16 %v3317, %v3315
    %v3392 = vpack.c.b16 %v3318, %v3316
    %v3393 = vpack.c.b16 %v3321, %v3319
    %v3394 = vpack.c.b16 %v3322, %v3320
    %v3395 = vpack.c.b16 %v3325, %v3323
    %v3396 = vpack.c.b16 %v3326, %v3324
    %v3397 = vpack.c.b16 %v3329, %v3327
    %v3398 = vpack.c.b16 %v3330, %v3328
    %v3399 = vpack.c.b16 %v3333, %v3331
    %v3400 = vpack.c.b16 %v3334, %v3332
    %v3401 = vpack.c.b16 %v3337, %v3335
    %v3402 = vpack.c.b16 %v3338, %v3336
    %3467 = vmatprep.subr.bf16.mxu0 %v3340
    %3468 = vmatpush1.bf16.msra.mxu0 %v3339
    %3469 = vmatprep.subr.bf16.mxu0 %v3342
    %3470 = vmatpush1.bf16.msra.mxu0 %v3341
    %3471 = vmatprep.subr.bf16.mxu0 %v3344
    %3472 = vmatpush1.bf16.msra.mxu0 %v3343
    %3473 = vmatprep.subr.bf16.mxu0 %v3346
    %3474 = vmatpush1.bf16.msra.mxu0 %v3345
    %3475 = vmatprep.subr.bf16.mxu0 %v3348
    %3476 = vmatpush1.bf16.msra.mxu0 %v3347
    %3477 = vmatprep.subr.bf16.mxu0 %v3350
    %3478 = vmatpush1.bf16.msra.mxu0 %v3349
    %3479 = vmatprep.subr.bf16.mxu0 %v3352
    %3480 = vmatpush1.bf16.msra.mxu0 %v3351
    %3481 = vmatprep.subr.bf16.mxu0 %v3354
    %3482 = vmatpush1.bf16.msra.mxu0 %v3353
    %3483 = vmatprep.subr.bf16.mxu0 %v3356
    %3484 = vmatpush1.bf16.msra.mxu0 %v3355
    %3485 = vmatprep.subr.bf16.mxu0 %v3358
    %3486 = vmatpush1.bf16.msra.mxu0 %v3357
    %3487 = vmatprep.subr.bf16.mxu0 %v3360
    %3488 = vmatpush1.bf16.msra.mxu0 %v3359
    %3489 = vmatprep.subr.bf16.mxu0 %v3362
    %3490 = vmatpush1.bf16.msra.mxu0 %v3361
    %3491 = vmatprep.subr.bf16.mxu0 %v3364
    %3492 = vmatpush1.bf16.msra.mxu0 %v3363
    %3493 = vmatprep.subr.bf16.mxu0 %v3366
    %3494 = vmatpush1.bf16.msra.mxu0 %v3365
    %3495 = vmatprep.subr.bf16.mxu0 %v3368
    %3496 = vmatpush1.bf16.msra.mxu0 %v3367
    %3497 = vmatprep.subr.bf16.mxu0 %v3370
    %3498 = vmatpush1.bf16.msra.mxu0 %v3369
    %3499 = vmatprep.mubr.bf16.mxu0 %v3140
    %3500 = vmatmul.mubr.bf16.gmra.mrb[0].mxu0 %v3139
    %v3501 = vpop.f32.mrb[0].mxu0
    %v3502 = vadd.f32 %v3108, %v3501
    %v3503 = vpop.f32.mrb[0].mxu0
    %v3504 = vadd.f32 %v3112, %v3503
    %v3505 = vpop.f32.mrb[0].mxu0
    %v3506 = vpop.f32.mrb[0].mxu0
    %3507 = vdwg.mxu0
    %3508 = vmatprep.subr.bf16.mxu0 %v3372
    %3509 = vmatpush1.bf16.msra.mxu0 %v3371
    %3510 = vmatprep.subr.bf16.mxu0 %v3374
    %3511 = vmatpush1.bf16.msra.mxu0 %v3373
    %3512 = vmatprep.subr.bf16.mxu0 %v3376
    %3513 = vmatpush1.bf16.msra.mxu0 %v3375
    %3514 = vmatprep.subr.bf16.mxu0 %v3378
    %3515 = vmatpush1.bf16.msra.mxu0 %v3377
    %3516 = vmatprep.subr.bf16.mxu0 %v3380
    %3517 = vmatpush1.bf16.msra.mxu0 %v3379
    %3518 = vmatprep.subr.bf16.mxu0 %v3382
    %3519 = vmatpush1.bf16.msra.mxu0 %v3381
    %3520 = vmatprep.subr.bf16.mxu0 %v3384
    %3521 = vmatpush1.bf16.msra.mxu0 %v3383
    %3522 = vmatprep.subr.bf16.mxu0 %v3386
    %3523 = vmatpush1.bf16.msra.mxu0 %v3385
    %3524 = vmatprep.subr.bf16.mxu0 %v3388
    %3525 = vmatpush1.bf16.msra.mxu0 %v3387
    %3526 = vmatprep.subr.bf16.mxu0 %v3390
    %3527 = vmatpush1.bf16.msra.mxu0 %v3389
    %3528 = vmatprep.subr.bf16.mxu0 %v3392
    %3529 = vmatpush1.bf16.msra.mxu0 %v3391
    %3530 = vmatprep.subr.bf16.mxu0 %v3394
    %3531 = vmatpush1.bf16.msra.mxu0 %v3393
    %3532 = vmatprep.subr.bf16.mxu0 %v3396
    %3533 = vmatpush1.bf16.msra.mxu0 %v3395
    %3534 = vmatprep.subr.bf16.mxu0 %v3398
    %3535 = vmatpush1.bf16.msra.mxu0 %v3397
    %3536 = vmatprep.subr.bf16.mxu0 %v3400
    %3537 = vmatpush1.bf16.msra.mxu0 %v3399
    %3538 = vmatprep.subr.bf16.mxu0 %v3402
    %3539 = vmatpush1.bf16.msra.mxu0 %v3401
    %3540 = vmatprep.mubr.bf16.mxu0 %v3142
    %3541 = vmatmul.mubr.bf16.gmra.mrb[0].mxu0 %v3141
    %v3542 = vpop.f32.mrb[0].mxu0
    %v3543 = vadd.f32 %v3502, %v3542
    %v3544 = vpop.f32.mrb[0].mxu0
    %v3545 = vadd.f32 %v3504, %v3544
    %v3546 = vpop.f32.mrb[0].mxu0
    %v3547 = vpop.f32.mrb[0].mxu0
    %3548 = vdwg.mxu0
    %v3551 = vcombine.low %v3543, %v3545
    %v3553 = vunpack.c.l.s4 1983009808
    %v3554 = vunpack.c.0.s8 %v3553
    %v3555 = vlaneseq
    %v3556 = vshrl.u32 %v3555, 7
    %v3557 = vsub.s32 %v3554, %v3556
    %v3558 = vrot.slane %v3551, %v3557
    %3560 = vst [vmem:[#allocation2] sm:$0xf] %v3558
    // Predicated region
    $region58: #{representation_forward.1} parent=1 // pred_check
      _
    $region59: #{representation_forward.1} parent=1 // pred_check_branch
      %3562 = sbr.rel (0) target = $region61
    $region60: #{representation_forward.1} parent=1 // pred_region
      %s3564 = ssub.s32 64, 64
      %3565 = vsyncadd [#allocation3], %s3564
      %s3567 = sshll.u32 [#allocation2], 4
      %s3568 = int_to_ptr.vmem [resolvable:$true] %s3567
      %3570 = dma.vmem_to_hbm [thread:$0]  %s3568, 64, %s14, [#allocation3]
    $region61: #{representation_forward.1} parent=1 // pred_fallthru
      _
    // Predicated region
    $region62: #{representation_forward.1} parent=1 // pred_check
      _
    $region63: #{representation_forward.1} parent=1 // pred_check_branch
      %3572 = sbr.rel (0) target = $region65
    $region64: #{representation_forward.1} parent=1 // pred_region
      %3573 = dma.done [#allocation3], 64
    $region65: #{representation_forward.1} parent=1 // pred_fallthru
      _
    %3574 = vsyncpa [#allocation3], 1

</llo_original>
